<compile_context>
chip_gen: v5e
topology: v5e:2x2
jax: 0.10.0
libtpu: 0.0.40
codegen_flags: <defaults>
</compile_context>

<pallas_src>
import functools

import jax
import jax.numpy as jnp
from jax.experimental import pallas as pl
from jax.experimental.pallas import tpu as pltpu


_VMEM_LIMIT = 32 * 1024 * 1024   # explicit scoped-VMEM budget, safe on v5e/v6e/v7x


def _round_up(n, m):
    return ((n + m - 1) // m) * m


def _pad2(a, rows, cols):
    r, c = a.shape
    if r == rows and c == cols:
        return a
    return jnp.pad(a, ((0, rows - r), (0, cols - c)))


# ----------------------------------------------------------------------------
# Pallas kernels
# ----------------------------------------------------------------------------
def _matmul_bias_kernel(x_ref, w_ref, b_ref, o_ref, *, relu):
    y = jnp.dot(x_ref[...], w_ref[...], preferred_element_type=jnp.float32)
    y = y + b_ref[...]                      # (1, N) broadcasts over rows
    if relu:
        y = jnp.maximum(y, 0.0)
    o_ref[...] = y.astype(o_ref.dtype)


def matmul_bias(x, w, b, relu, tm=256):
    """x: (M, K) f32, w: (K, N) f32 with N % 128 == 0, b: (1, N) -> (M, N)."""
    M, K = x.shape
    N = w.shape[1]
    tm_eff = min(tm, _round_up(M, 8))
    grid_m = pl.cdiv(M, tm_eff)
    return pl.pallas_call(
        functools.partial(_matmul_bias_kernel, relu=relu),
        out_shape=jax.ShapeDtypeStruct((M, N), jnp.float32),
        grid=(grid_m,),
        in_specs=[
            pl.BlockSpec((tm_eff, K), lambda i: (i, 0)),
            pl.BlockSpec((K, N), lambda i: (0, 0)),      # resident weights
            pl.BlockSpec((1, N), lambda i: (0, 0)),      # resident bias
        ],
        out_specs=pl.BlockSpec((tm_eff, N), lambda i: (i, 0)),
        compiler_params=pltpu.CompilerParams(
            dimension_semantics=("parallel",),
            vmem_limit_bytes=_VMEM_LIMIT,
        ),
    )(x, w, b)


def _mlp_head_kernel(x_ref, w1_ref, b1_ref, w2_ref, b2_ref, o_ref):
    h = jnp.dot(x_ref[...], w1_ref[...], preferred_element_type=jnp.float32)
    h = jnp.maximum(h + b1_ref[...], 0.0)
    y = jnp.dot(h, w2_ref[...], preferred_element_type=jnp.float32) + b2_ref[...]
    o_ref[...] = y.astype(o_ref.dtype)


def mlp_head(x, w1, b1, w2, b2, tm=256):
    """fc1 + ReLU + fc2 fused in one kernel.  Padded widths are multiples of 128."""
    M, F = x.shape
    H = w1.shape[1]
    O = w2.shape[1]
    tm_eff = min(tm, _round_up(M, 8))
    grid_m = pl.cdiv(M, tm_eff)
    return pl.pallas_call(
        _mlp_head_kernel,
        out_shape=jax.ShapeDtypeStruct((M, O), jnp.float32),
        grid=(grid_m,),
        in_specs=[
            pl.BlockSpec((tm_eff, F), lambda i: (i, 0)),
            pl.BlockSpec((F, H), lambda i: (0, 0)),
            pl.BlockSpec((1, H), lambda i: (0, 0)),
            pl.BlockSpec((H, O), lambda i: (0, 0)),
            pl.BlockSpec((1, O), lambda i: (0, 0)),
        ],
        out_specs=pl.BlockSpec((tm_eff, O), lambda i: (i, 0)),
        compiler_params=pltpu.CompilerParams(
            dimension_semantics=("parallel",),
            vmem_limit_bytes=_VMEM_LIMIT,
        ),
    )(x, w1, b1, w2, b2)


def _quantize_kernel(x_ref, cbt_ref, cb_ref, q_ref, att_ref, loss_ref, *,
                     alpha, n_valid, inv_total):
    i = pl.program_id(0)

    @pl.when(i == 0)
    def _():
        loss_ref[...] = jnp.zeros_like(loss_ref)

    x = x_ref[...]                                               # (TN, D)
    scores = jnp.dot(x, cbt_ref[...],
                     preferred_element_type=jnp.float32) * alpha  # (TN, Kc)
    m = scores.max(axis=-1, keepdims=True)
    e = jnp.exp(scores - m)
    denom = e.sum(axis=-1, keepdims=True)
    att = e * pl.reciprocal(denom, approx=True)                  # softmax (EUP)
    q = jnp.dot(att, cb_ref[...], preferred_element_type=jnp.float32)
    q_ref[...] = q
    att_ref[...] = att

    # quantization MSE, masking padded rows of the last (partial) tile
    tn = x.shape[0]
    row = i * tn + jax.lax.broadcasted_iota(jnp.int32, (tn, 1), 0)
    per_row = ((q - x) ** 2).sum(axis=-1, keepdims=True)
    per_row = jnp.where(row < n_valid, per_row, 0.0)
    loss_ref[...] = loss_ref[...] + per_row.sum() * inv_total


def quantize(x_flat, codebook, alpha=1.0, tn=512):
    """x_flat: (Np, D), codebook: (Kc, D) -> (quantized, att_scores, extra_loss)."""
    Np, D = x_flat.shape
    Kc = codebook.shape[0]
    cb_t = codebook.T                          # pre-transposed (D, Kc) RHS
    tn_eff = min(tn, _round_up(Np, 8))
    grid_n = pl.cdiv(Np, tn_eff)
    x_pad = _pad2(x_flat, grid_n * tn_eff, D)  # keep all tile reads in-bounds
    q, att, loss = pl.pallas_call(
        functools.partial(_quantize_kernel, alpha=alpha, n_valid=Np,
                          inv_total=1.0 / float(Np * D)),
        out_shape=(
            jax.ShapeDtypeStruct((Np, D), jnp.float32),
            jax.ShapeDtypeStruct((Np, Kc), jnp.float32),
            jax.ShapeDtypeStruct((1, 1), jnp.float32),
        ),
        grid=(grid_n,),
        in_specs=[
            pl.BlockSpec((tn_eff, D), lambda i: (i, 0)),
            pl.BlockSpec((D, Kc), lambda i: (0, 0)),   # resident codebook^T
            pl.BlockSpec((Kc, D), lambda i: (0, 0)),   # resident codebook
        ],
        out_specs=(
            pl.BlockSpec((tn_eff, D), lambda i: (i, 0)),
            pl.BlockSpec((tn_eff, Kc), lambda i: (i, 0)),
            pl.BlockSpec((1, 1), lambda i: (0, 0)),    # resident loss accumulator
        ),
        compiler_params=pltpu.CompilerParams(
            dimension_semantics=("arbitrary",),        # loss block is revisited
            vmem_limit_bytes=_VMEM_LIMIT,
        ),
    )(x_pad, cb_t, codebook)
    return q, att, loss


# ----------------------------------------------------------------------------
# Glue: NHWC im2col conv, maxpool, parameter init, forward
# ----------------------------------------------------------------------------
def conv2d_nhwc(x, w, b, relu, tm=256):
    """x: (B, H, W, Cin), w: (Cout, Cin, k, k) (PyTorch layout), b: (Cout,)."""
    B, H, W, Cin = x.shape
    Cout, _, k, _ = w.shape
    Ho, Wo = H - k + 1, W - k + 1
    # im2col with patch-feature order (dy, dx, cin); the trailing reshape is a
    # free contiguous merge in NHWC (no transposes per layer).
    cols = [x[:, dy:dy + Ho, dx:dx + Wo, :] for dy in range(k) for dx in range(k)]
    p = jnp.concatenate(cols, axis=-1).reshape(B * Ho * Wo, k * k * Cin)
    K = k * k * Cin
    Kp = _round_up(K, 8)                    # sublane-aligned contraction dim
    Np = _round_up(Cout, 128)               # lane-dense output stores
    wm = _pad2(w.transpose(2, 3, 1, 0).reshape(K, Cout), Kp, Np)
    bm = _pad2(b[None, :], 1, Np)
    pp = _pad2(p, p.shape[0], Kp)
    y = matmul_bias(pp, wm, bm, relu=relu, tm=tm)
    return y[:, :Cout].reshape(B, Ho, Wo, Cout)


def maxpool2_nhwc(x):
    """2x2 max pool, stride 2, NHWC."""
    B, H, W, C = x.shape
    return x.reshape(B, H // 2, 2, W // 2, 2, C).max(axis=(2, 4))


def init_params(key, image_size=(1, 28, 28), hidden_size=10, output_dim=10,
                patch_size=4, codebook_size=128):
    c_in = image_size[0]
    if image_size == (3, 32, 32):
        mlp_in = 16 * 16
    elif image_size == (1, 28, 28):
        mlp_in = 16 * 9
    elif image_size == (3, 96, 96):
        mlp_in = 16 * 20 * 20
    else:
        raise ValueError("unsupported image_size")

    ks = jax.random.split(key, 11)

    def uconv(k, cout, cin, ksz):
        bound = 1.0 / jnp.sqrt(cin * ksz * ksz)
        return jax.random.uniform(k, (cout, cin, ksz, ksz), jnp.float32, -bound, bound)

    def ulin(k, out_f, in_f):
        bound = 1.0 / jnp.sqrt(in_f)
        return jax.random.uniform(k, (out_f, in_f), jnp.float32, -bound, bound)

    params = {
        "conv1_w": uconv(ks[0], 32, c_in, 5),
        "conv1_b": jax.random.uniform(ks[1], (32,), jnp.float32, -0.2, 0.2),
        "conv2_w": uconv(ks[2], 32, 32, 5),
        "conv2_b": jax.random.uniform(ks[3], (32,), jnp.float32, -0.05, 0.05),
        "conv3_w": uconv(ks[4], 16, 32, 5),
        "conv3_b": jax.random.uniform(ks[5], (16,), jnp.float32, -0.05, 0.05),
        "fc1_w": ulin(ks[6], hidden_size, mlp_in),
        "fc1_b": jax.random.uniform(ks[7], (hidden_size,), jnp.float32, -0.1, 0.1),
        "fc2_w": ulin(ks[8], output_dim, hidden_size),
        "fc2_b": jax.random.uniform(ks[9], (output_dim,), jnp.float32, -0.3, 0.3),
        "codebook": jax.random.normal(ks[10], (codebook_size, patch_size * patch_size),
                                      jnp.float32),
    }
    return params


def cnn_quantize_forward(x, params, alpha=1.0, patch_size=4):
    bsz, n_channels, H, W = x.shape
    pd = patch_size * patch_size

    # Quantizer over 16-vectors of the row-major flattened NCHW input (exactly
    # the PyTorch reshape chain), then back to an image; NHWC from here on.
    flat = x.reshape(-1, pd)                                      # (Np, 16)
    q, att_scores, extra_loss = quantize(flat, params["codebook"], alpha=alpha)
    xq = q.reshape(bsz, n_channels, H, W).transpose(0, 2, 3, 1)   # NCHW -> NHWC once

    # relu(conv1(x)); relu(maxpool(conv2)); relu(maxpool(conv3))
    # (relu & maxpool commute, relu fused into the matmul epilogue)
    h = conv2d_nhwc(xq, params["conv1_w"], params["conv1_b"], relu=True)
    h = maxpool2_nhwc(conv2d_nhwc(h, params["conv2_w"], params["conv2_b"], relu=True))
    h = maxpool2_nhwc(conv2d_nhwc(h, params["conv3_w"], params["conv3_b"], relu=True))

    # PyTorch flattens NCHW order; transpose once on the tiny final feature map.
    h = h.transpose(0, 3, 1, 2).reshape(bsz, -1)                  # (B, mlp_in)

    hidden = params["fc1_b"].shape[0]
    out_dim = params["fc2_b"].shape[0]
    F = h.shape[1]
    Fp = _round_up(F, 8)
    Hp = _round_up(hidden, 128)
    Op = _round_up(out_dim, 128)
    w1 = _pad2(params["fc1_w"].T, Fp, Hp)
    b1 = _pad2(params["fc1_b"][None, :], 1, Hp)
    w2 = _pad2(params["fc2_w"].T, Hp, Op)
    b2 = _pad2(params["fc2_b"][None, :], 1, Op)
    hp = _pad2(h, bsz, Fp)
    pred = mlp_head(hp, w1, b1, w2, b2)[:, :out_dim]              # fused fc1+relu+fc2

    contrastive_loss = jnp.zeros((1,), jnp.float32)               # torch.zeros(1)
    return pred, extra_loss.reshape(1), att_scores, contrastive_loss


if __name__ == "__main__":
    image_size = (1, 28, 28)          # -> MLP_Input_dim = 16 * 9
    bsz, hidden_size, output_dim = 2, 10, 10

    key = jax.random.PRNGKey(0)
    k_params, k_x = jax.random.split(key)
    params = init_params(k_params, image_size=image_size,
                         hidden_size=hidden_size, output_dim=output_dim)
    x = jax.random.normal(k_x, (bsz,) + image_size, jnp.float32)

    fwd = jax.jit(cnn_quantize_forward)
    pred, extra_loss, att_scores, contrastive = fwd(x, params)
    jax.block_until_ready((pred, extra_loss, att_scores, contrastive))

    assert pred.shape == (bsz, output_dim)
    assert extra_loss.shape == (1,)
    assert att_scores.shape == (bsz * image_size[0] * image_size[1] * image_size[2] // 16, 128)
    assert contrastive.shape == (1,)
    assert bool(jnp.all(jnp.isfinite(pred)))
    print("KERNEL_OK")
</pallas_src>

<mosaic_0001>
module attributes {stable_mosaic.version = 11 : i64} {
  func.func @_quantize_kernel(%arg0: i32, %arg1: memref<104x16xf32, #tpu.memory_space<vmem>>, %arg2: memref<16x128xf32, #tpu.memory_space<vmem>>, %arg3: memref<128x16xf32, #tpu.memory_space<vmem>>, %arg4: memref<104x16xf32, #tpu.memory_space<vmem>>, %arg5: memref<104x128xf32, #tpu.memory_space<vmem>>, %arg6: memref<1x1xf32, #tpu.memory_space<vmem>>) attributes {dimension_semantics = [#tpu.dimension_semantics<arbitrary>], iteration_bounds = array<i64: 1>, scalar_prefetch = 0 : i64, scratch_operands = 0 : i64, tpu.core_type = #tpu.core_type<tc>, window_params = [{transform_indices = @transform_0, window_bounds = array<i64: 104, 16>}, {pipeline_mode = #tpu.pipeline_mode<synchronous>, transform_indices = @transform_1, window_bounds = array<i64: 16, 128>}, {pipeline_mode = #tpu.pipeline_mode<synchronous>, transform_indices = @transform_2, window_bounds = array<i64: 128, 16>}, {transform_indices = @transform_3, window_bounds = array<i64: 104, 16>}, {transform_indices = @transform_4, window_bounds = array<i64: 104, 128>}, {pipeline_mode = #tpu.pipeline_mode<synchronous>, transform_indices = @transform_5, window_bounds = array<i64: 1, 1>}]} {
    %c0_i32 = arith.constant 0 : i32
    %0 = arith.cmpi eq, %arg0, %c0_i32 : i32
    %1 = arith.extui %0 : i1 to i32
    %c0_i32_0 = arith.constant 0 : i32
    %2 = arith.cmpi ne, %1, %c0_i32_0 : i32
    scf.if %2 {
      %cst_22 = arith.constant 0.000000e+00 : f32
      %43 = vector.broadcast %cst_22 : f32 to vector<1x1xf32>
      %c0_23 = arith.constant 0 : index
      %c0_24 = arith.constant 0 : index
      %44 = vector.load %arg6[%c0_23, %c0_24] : memref<1x1xf32, #tpu.memory_space<vmem>>, vector<1x1xf32>
      tpu.vector_store %arg6[%c0_23, %c0_24], %43 {strides = array<i32>} : memref<1x1xf32, #tpu.memory_space<vmem>>, vector<1x1xf32>,
    } else {
    }
    %c0 = arith.constant 0 : index
    %c0_1 = arith.constant 0 : index
    %3 = vector.load %arg1[%c0, %c0_1] : memref<104x16xf32, #tpu.memory_space<vmem>>, vector<104x16xf32>
    %c0_2 = arith.constant 0 : index
    %c0_3 = arith.constant 0 : index
    %4 = vector.load %arg2[%c0_2, %c0_3] : memref<16x128xf32, #tpu.memory_space<vmem>>, vector<16x128xf32>
    %cst = arith.constant dense<0.000000e+00> : vector<104x128xf32>
    %5 = tpu.matmul %3, %4, %cst {dimension_numbers = #tpu.dot_dimension_numbers<[1], [0], [0], [1], [0, 0, 1, 1], [], []>} : vector<104x16xf32>, vector<16x128xf32>, vector<104x128xf32> -> vector<104x128xf32>
    %cst_4 = arith.constant 1.000000e+00 : f32
    %6 = vector.broadcast %cst_4 : f32 to vector<104x128xf32>
    %7 = arith.mulf %5, %6 : vector<104x128xf32>
    %cst_5 = arith.constant dense<0xFF800000> : vector<104xf32>
    %8 = vector.multi_reduction <maximumf>, %7, %cst_5 [1] : vector<104x128xf32> to vector<104xf32>
    %9 = vector.shape_cast %8 : vector<104xf32> to vector<104x1xf32>
    %10 = vector.broadcast %9 : vector<104x1xf32> to vector<104x128xf32>
    %11 = arith.subf %7, %10 : vector<104x128xf32>
    %12 = math.exp %11 : vector<104x128xf32>
    %cst_6 = arith.constant dense<0.000000e+00> : vector<104xf32>
    %13 = vector.multi_reduction <add>, %12, %cst_6 [1] : vector<104x128xf32> to vector<104xf32>
    %14 = vector.shape_cast %13 : vector<104xf32> to vector<104x1xf32>
    %15 = tpu.reciprocal %14 {approx = true} : vector<104x1xf32> -> vector<104x1xf32>
    %16 = vector.broadcast %15 : vector<104x1xf32> to vector<104x128xf32>
    %17 = arith.mulf %12, %16 : vector<104x128xf32>
    %c0_7 = arith.constant 0 : index
    %c0_8 = arith.constant 0 : index
    %18 = vector.load %arg3[%c0_7, %c0_8] : memref<128x16xf32, #tpu.memory_space<vmem>>, vector<128x16xf32>
    %cst_9 = arith.constant dense<0.000000e+00> : vector<104x16xf32>
    %19 = tpu.matmul %17, %18, %cst_9 {dimension_numbers = #tpu.dot_dimension_numbers<[1], [0], [0], [1], [0, 0, 1, 1], [], []>} : vector<104x128xf32>, vector<128x16xf32>, vector<104x16xf32> -> vector<104x16xf32>
    %c0_10 = arith.constant 0 : index
    %c0_11 = arith.constant 0 : index
    %20 = vector.load %arg4[%c0_10, %c0_11] : memref<104x16xf32, #tpu.memory_space<vmem>>, vector<104x16xf32>
    tpu.vector_store %arg4[%c0_10, %c0_11], %19 {strides = array<i32>} : memref<104x16xf32, #tpu.memory_space<vmem>>, vector<104x16xf32>,
    %c0_12 = arith.constant 0 : index
    %c0_13 = arith.constant 0 : index
    %21 = vector.load %arg5[%c0_12, %c0_13] : memref<104x128xf32, #tpu.memory_space<vmem>>, vector<104x128xf32>
    tpu.vector_store %arg5[%c0_12, %c0_13], %17 {strides = array<i32>} : memref<104x128xf32, #tpu.memory_space<vmem>>, vector<104x128xf32>,
    %c104_i32 = arith.constant 104 : i32
    %22 = arith.muli %arg0, %c104_i32 : i32
    %23 = tpu.iota {dimensions = array<i32: 0>} : vector<104x1xi32>
    %24 = vector.broadcast %22 : i32 to vector<104x1xi32>
    %25 = arith.addi %24, %23 : vector<104x1xi32>
    %26 = arith.subf %19, %3 : vector<104x16xf32>
    %27 = arith.mulf %26, %26 : vector<104x16xf32>
    %cst_14 = arith.constant dense<0.000000e+00> : vector<104xf32>
    %28 = vector.multi_reduction <add>, %27, %cst_14 [1] : vector<104x16xf32> to vector<104xf32>
    %29 = vector.shape_cast %28 : vector<104xf32> to vector<104x1xf32>
    %c98_i32 = arith.constant 98 : i32
    %30 = vector.broadcast %c98_i32 : i32 to vector<104x1xi32>
    %31 = arith.cmpi slt, %25, %30 : vector<104x1xi32>
    %cst_15 = arith.constant 0.000000e+00 : f32
    %32 = vector.broadcast %cst_15 : f32 to vector<104x1xf32>
    %33 = arith.select %31, %29, %32 : vector<104x1xi1>, vector<104x1xf32>
    %c0_16 = arith.constant 0 : index
    %c0_17 = arith.constant 0 : index
    %34 = vector.load %arg6[%c0_16, %c0_17] : memref<1x1xf32, #tpu.memory_space<vmem>>, vector<1x1xf32>
    %35 = vector.shape_cast %33 : vector<104x1xf32> to vector<1x104x1xf32>
    %cst_18 = arith.constant dense<0.000000e+00> : vector<1xf32>
    %36 = vector.multi_reduction <add>, %35, %cst_18 [1, 2] : vector<1x104x1xf32> to vector<1xf32>
    %37 = vector.shape_cast %36 : vector<1xf32> to vector<1x1x1xf32>
    %38 = vector.extract %37[0, 0, 0] : f32 from vector<1x1x1xf32>
    %cst_19 = arith.constant 6.37755089E-4 : f32
    %39 = arith.mulf %38, %cst_19 : f32
    %40 = vector.broadcast %39 : f32 to vector<1x1xf32>
    %41 = arith.addf %34, %40 : vector<1x1xf32>
    %c0_20 = arith.constant 0 : index
    %c0_21 = arith.constant 0 : index
    %42 = vector.load %arg6[%c0_20, %c0_21] : memref<1x1xf32, #tpu.memory_space<vmem>>, vector<1x1xf32>
    tpu.vector_store %arg6[%c0_20, %c0_21], %41 {strides = array<i32>} : memref<1x1xf32, #tpu.memory_space<vmem>>, vector<1x1xf32>,
    return
  }
  func.func @transform_0(%arg0: i32) -> (i32, i32) {
    %c0_i32 = arith.constant 0 : i32
    %c0_i32_0 = arith.constant 0 : i32
    return %arg0, %c0_i32 : i32, i32
  }
  func.func @transform_1(%arg0: i32) -> (i32, i32) {
    %c0_i32 = arith.constant 0 : i32
    %c0_i32_0 = arith.constant 0 : i32
    %c0_i32_1 = arith.constant 0 : i32
    return %c0_i32, %c0_i32_0 : i32, i32
  }
  func.func @transform_2(%arg0: i32) -> (i32, i32) {
    %c0_i32 = arith.constant 0 : i32
    %c0_i32_0 = arith.constant 0 : i32
    %c0_i32_1 = arith.constant 0 : i32
    return %c0_i32, %c0_i32_0 : i32, i32
  }
  func.func @transform_3(%arg0: i32) -> (i32, i32) {
    %c0_i32 = arith.constant 0 : i32
    %c0_i32_0 = arith.constant 0 : i32
    return %arg0, %c0_i32 : i32, i32
  }
  func.func @transform_4(%arg0: i32) -> (i32, i32) {
    %c0_i32 = arith.constant 0 : i32
    %c0_i32_0 = arith.constant 0 : i32
    return %arg0, %c0_i32 : i32, i32
  }
  func.func @transform_5(%arg0: i32) -> (i32, i32) {
    %c0_i32 = arith.constant 0 : i32
    %c0_i32_0 = arith.constant 0 : i32
    %c0_i32_1 = arith.constant 0 : i32
    return %c0_i32, %c0_i32_0 : i32, i32
  }
}

module attributes {stable_mosaic.version = 11 : i64} {
  func.func @_matmul_bias_kernel(%arg0: i32, %arg1: memref<256x32xf32, #tpu.memory_space<vmem>>, %arg2: memref<32x128xf32, #tpu.memory_space<vmem>>, %arg3: memref<1x128xf32, #tpu.memory_space<vmem>>, %arg4: memref<256x128xf32, #tpu.memory_space<vmem>>) attributes {dimension_semantics = [#tpu.dimension_semantics<parallel>], iteration_bounds = array<i64: 5>, scalar_prefetch = 0 : i64, scratch_operands = 0 : i64, tpu.core_type = #tpu.core_type<tc>, window_params = [{transform_indices = @transform_0, window_bounds = array<i64: 256, 32>}, {pipeline_mode = #tpu.pipeline_mode<synchronous>, transform_indices = @transform_1, window_bounds = array<i64: 32, 128>}, {pipeline_mode = #tpu.pipeline_mode<synchronous>, transform_indices = @transform_2, window_bounds = array<i64: 1, 128>}, {transform_indices = @transform_3, window_bounds = array<i64: 256, 128>}]} {
    %c0 = arith.constant 0 : index
    %c0_0 = arith.constant 0 : index
    %0 = vector.load %arg1[%c0, %c0_0] : memref<256x32xf32, #tpu.memory_space<vmem>>, vector<256x32xf32>
    %c0_1 = arith.constant 0 : index
    %c0_2 = arith.constant 0 : index
    %1 = vector.load %arg2[%c0_1, %c0_2] : memref<32x128xf32, #tpu.memory_space<vmem>>, vector<32x128xf32>
    %cst = arith.constant dense<0.000000e+00> : vector<256x128xf32>
    %2 = tpu.matmul %0, %1, %cst {dimension_numbers = #tpu.dot_dimension_numbers<[1], [0], [0], [1], [0, 0, 1, 1], [], []>} : vector<256x32xf32>, vector<32x128xf32>, vector<256x128xf32> -> vector<256x128xf32>
    %c0_3 = arith.constant 0 : index
    %c0_4 = arith.constant 0 : index
    %3 = vector.load %arg3[%c0_3, %c0_4] : memref<1x128xf32, #tpu.memory_space<vmem>>, vector<1x128xf32>
    %4 = vector.broadcast %3 : vector<1x128xf32> to vector<256x128xf32>
    %5 = arith.addf %2, %4 : vector<256x128xf32>
    %cst_5 = arith.constant 0.000000e+00 : f32
    %6 = vector.broadcast %cst_5 : f32 to vector<256x128xf32>
    %7 = arith.maximumf %5, %6 : vector<256x128xf32>
    %c0_6 = arith.constant 0 : index
    %c0_7 = arith.constant 0 : index
    %8 = vector.load %arg4[%c0_6, %c0_7] : memref<256x128xf32, #tpu.memory_space<vmem>>, vector<256x128xf32>
    tpu.vector_store %arg4[%c0_6, %c0_7], %7 {strides = array<i32>} : memref<256x128xf32, #tpu.memory_space<vmem>>, vector<256x128xf32>,
    return
  }
  func.func @transform_0(%arg0: i32) -> (i32, i32) {
    %c0_i32 = arith.constant 0 : i32
    %c0_i32_0 = arith.constant 0 : i32
    return %arg0, %c0_i32 : i32, i32
  }
  func.func @transform_1(%arg0: i32) -> (i32, i32) {
    %c0_i32 = arith.constant 0 : i32
    %c0_i32_0 = arith.constant 0 : i32
    %c0_i32_1 = arith.constant 0 : i32
    return %c0_i32, %c0_i32_0 : i32, i32
  }
  func.func @transform_2(%arg0: i32) -> (i32, i32) {
    %c0_i32 = arith.constant 0 : i32
    %c0_i32_0 = arith.constant 0 : i32
    %c0_i32_1 = arith.constant 0 : i32
    return %c0_i32, %c0_i32_0 : i32, i32
  }
  func.func @transform_3(%arg0: i32) -> (i32, i32) {
    %c0_i32 = arith.constant 0 : i32
    %c0_i32_0 = arith.constant 0 : i32
    return %arg0, %c0_i32 : i32, i32
  }
}

module attributes {stable_mosaic.version = 11 : i64} {
  func.func @_matmul_bias_kernel(%arg0: i32, %arg1: memref<256x800xf32, #tpu.memory_space<vmem>>, %arg2: memref<800x128xf32, #tpu.memory_space<vmem>>, %arg3: memref<1x128xf32, #tpu.memory_space<vmem>>, %arg4: memref<256x128xf32, #tpu.memory_space<vmem>>) attributes {dimension_semantics = [#tpu.dimension_semantics<parallel>], iteration_bounds = array<i64: 4>, scalar_prefetch = 0 : i64, scratch_operands = 0 : i64, tpu.core_type = #tpu.core_type<tc>, window_params = [{transform_indices = @transform_0, window_bounds = array<i64: 256, 800>}, {pipeline_mode = #tpu.pipeline_mode<synchronous>, transform_indices = @transform_1, window_bounds = array<i64: 800, 128>}, {pipeline_mode = #tpu.pipeline_mode<synchronous>, transform_indices = @transform_2, window_bounds = array<i64: 1, 128>}, {transform_indices = @transform_3, window_bounds = array<i64: 256, 128>}]} {
    %c0 = arith.constant 0 : index
    %c0_0 = arith.constant 0 : index
    %0 = vector.load %arg1[%c0, %c0_0] : memref<256x800xf32, #tpu.memory_space<vmem>>, vector<256x800xf32>
    %c0_1 = arith.constant 0 : index
    %c0_2 = arith.constant 0 : index
    %1 = vector.load %arg2[%c0_1, %c0_2] : memref<800x128xf32, #tpu.memory_space<vmem>>, vector<800x128xf32>
    %cst = arith.constant dense<0.000000e+00> : vector<256x128xf32>
    %2 = tpu.matmul %0, %1, %cst {dimension_numbers = #tpu.dot_dimension_numbers<[1], [0], [0], [1], [0, 0, 1, 1], [], []>} : vector<256x800xf32>, vector<800x128xf32>, vector<256x128xf32> -> vector<256x128xf32>
    %c0_3 = arith.constant 0 : index
    %c0_4 = arith.constant 0 : index
    %3 = vector.load %arg3[%c0_3, %c0_4] : memref<1x128xf32, #tpu.memory_space<vmem>>, vector<1x128xf32>
    %4 = vector.broadcast %3 : vector<1x128xf32> to vector<256x128xf32>
    %5 = arith.addf %2, %4 : vector<256x128xf32>
    %cst_5 = arith.constant 0.000000e+00 : f32
    %6 = vector.broadcast %cst_5 : f32 to vector<256x128xf32>
    %7 = arith.maximumf %5, %6 : vector<256x128xf32>
    %c0_6 = arith.constant 0 : index
    %c0_7 = arith.constant 0 : index
    %8 = vector.load %arg4[%c0_6, %c0_7] : memref<256x128xf32, #tpu.memory_space<vmem>>, vector<256x128xf32>
    tpu.vector_store %arg4[%c0_6, %c0_7], %7 {strides = array<i32>} : memref<256x128xf32, #tpu.memory_space<vmem>>, vector<256x128xf32>,
    return
  }
  func.func @transform_0(%arg0: i32) -> (i32, i32) {
    %c0_i32 = arith.constant 0 : i32
    %c0_i32_0 = arith.constant 0 : i32
    return %arg0, %c0_i32 : i32, i32
  }
  func.func @transform_1(%arg0: i32) -> (i32, i32) {
    %c0_i32 = arith.constant 0 : i32
    %c0_i32_0 = arith.constant 0 : i32
    %c0_i32_1 = arith.constant 0 : i32
    return %c0_i32, %c0_i32_0 : i32, i32
  }
  func.func @transform_2(%arg0: i32) -> (i32, i32) {
    %c0_i32 = arith.constant 0 : i32
    %c0_i32_0 = arith.constant 0 : i32
    %c0_i32_1 = arith.constant 0 : i32
    return %c0_i32, %c0_i32_0 : i32, i32
  }
  func.func @transform_3(%arg0: i32) -> (i32, i32) {
    %c0_i32 = arith.constant 0 : i32
    %c0_i32_0 = arith.constant 0 : i32
    return %arg0, %c0_i32 : i32, i32
  }
}

module attributes {stable_mosaic.version = 11 : i64} {
  func.func @_matmul_bias_kernel(%arg0: i32, %arg1: memref<72x800xf32, #tpu.memory_space<vmem>>, %arg2: memref<800x128xf32, #tpu.memory_space<vmem>>, %arg3: memref<1x128xf32, #tpu.memory_space<vmem>>, %arg4: memref<72x128xf32, #tpu.memory_space<vmem>>) attributes {dimension_semantics = [#tpu.dimension_semantics<parallel>], iteration_bounds = array<i64: 1>, scalar_prefetch = 0 : i64, scratch_operands = 0 : i64, tpu.core_type = #tpu.core_type<tc>, window_params = [{transform_indices = @transform_0, window_bounds = array<i64: 72, 800>}, {pipeline_mode = #tpu.pipeline_mode<synchronous>, transform_indices = @transform_1, window_bounds = array<i64: 800, 128>}, {pipeline_mode = #tpu.pipeline_mode<synchronous>, transform_indices = @transform_2, window_bounds = array<i64: 1, 128>}, {transform_indices = @transform_3, window_bounds = array<i64: 72, 128>}]} {
    %c0 = arith.constant 0 : index
    %c0_0 = arith.constant 0 : index
    %0 = vector.load %arg1[%c0, %c0_0] : memref<72x800xf32, #tpu.memory_space<vmem>>, vector<72x800xf32>
    %c0_1 = arith.constant 0 : index
    %c0_2 = arith.constant 0 : index
    %1 = vector.load %arg2[%c0_1, %c0_2] : memref<800x128xf32, #tpu.memory_space<vmem>>, vector<800x128xf32>
    %cst = arith.constant dense<0.000000e+00> : vector<72x128xf32>
    %2 = tpu.matmul %0, %1, %cst {dimension_numbers = #tpu.dot_dimension_numbers<[1], [0], [0], [1], [0, 0, 1, 1], [], []>} : vector<72x800xf32>, vector<800x128xf32>, vector<72x128xf32> -> vector<72x128xf32>
    %c0_3 = arith.constant 0 : index
    %c0_4 = arith.constant 0 : index
    %3 = vector.load %arg3[%c0_3, %c0_4] : memref<1x128xf32, #tpu.memory_space<vmem>>, vector<1x128xf32>
    %4 = vector.broadcast %3 : vector<1x128xf32> to vector<72x128xf32>
    %5 = arith.addf %2, %4 : vector<72x128xf32>
    %cst_5 = arith.constant 0.000000e+00 : f32
    %6 = vector.broadcast %cst_5 : f32 to vector<72x128xf32>
    %7 = arith.maximumf %5, %6 : vector<72x128xf32>
    %c0_6 = arith.constant 0 : index
    %c0_7 = arith.constant 0 : index
    %8 = vector.load %arg4[%c0_6, %c0_7] : memref<72x128xf32, #tpu.memory_space<vmem>>, vector<72x128xf32>
    tpu.vector_store %arg4[%c0_6, %c0_7], %7 {strides = array<i32>} : memref<72x128xf32, #tpu.memory_space<vmem>>, vector<72x128xf32>,
    return
  }
  func.func @transform_0(%arg0: i32) -> (i32, i32) {
    %c0_i32 = arith.constant 0 : i32
    %c0_i32_0 = arith.constant 0 : i32
    return %arg0, %c0_i32 : i32, i32
  }
  func.func @transform_1(%arg0: i32) -> (i32, i32) {
    %c0_i32 = arith.constant 0 : i32
    %c0_i32_0 = arith.constant 0 : i32
    %c0_i32_1 = arith.constant 0 : i32
    return %c0_i32, %c0_i32_0 : i32, i32
  }
  func.func @transform_2(%arg0: i32) -> (i32, i32) {
    %c0_i32 = arith.constant 0 : i32
    %c0_i32_0 = arith.constant 0 : i32
    %c0_i32_1 = arith.constant 0 : i32
    return %c0_i32, %c0_i32_0 : i32, i32
  }
  func.func @transform_3(%arg0: i32) -> (i32, i32) {
    %c0_i32 = arith.constant 0 : i32
    %c0_i32_0 = arith.constant 0 : i32
    return %arg0, %c0_i32 : i32, i32
  }
}

module attributes {stable_mosaic.version = 11 : i64} {
  func.func @_mlp_head_kernel(%arg0: i32, %arg1: memref<8x144xf32, #tpu.memory_space<vmem>>, %arg2: memref<144x128xf32, #tpu.memory_space<vmem>>, %arg3: memref<1x128xf32, #tpu.memory_space<vmem>>, %arg4: memref<128x128xf32, #tpu.memory_space<vmem>>, %arg5: memref<1x128xf32, #tpu.memory_space<vmem>>, %arg6: memref<8x128xf32, #tpu.memory_space<vmem>>) attributes {dimension_semantics = [#tpu.dimension_semantics<parallel>], iteration_bounds = array<i64: 1>, scalar_prefetch = 0 : i64, scratch_operands = 0 : i64, tpu.core_type = #tpu.core_type<tc>, window_params = [{transform_indices = @transform_0, window_bounds = array<i64: 8, 144>}, {pipeline_mode = #tpu.pipeline_mode<synchronous>, transform_indices = @transform_1, window_bounds = array<i64: 144, 128>}, {pipeline_mode = #tpu.pipeline_mode<synchronous>, transform_indices = @transform_2, window_bounds = array<i64: 1, 128>}, {pipeline_mode = #tpu.pipeline_mode<synchronous>, transform_indices = @transform_3, window_bounds = array<i64: 128, 128>}, {pipeline_mode = #tpu.pipeline_mode<synchronous>, transform_indices = @transform_4, window_bounds = array<i64: 1, 128>}, {transform_indices = @transform_5, window_bounds = array<i64: 8, 128>}]} {
    %c0 = arith.constant 0 : index
    %c0_0 = arith.constant 0 : index
    %0 = vector.load %arg1[%c0, %c0_0] : memref<8x144xf32, #tpu.memory_space<vmem>>, vector<8x144xf32>
    %c0_1 = arith.constant 0 : index
    %c0_2 = arith.constant 0 : index
    %1 = vector.load %arg2[%c0_1, %c0_2] : memref<144x128xf32, #tpu.memory_space<vmem>>, vector<144x128xf32>
    %cst = arith.constant dense<0.000000e+00> : vector<8x128xf32>
    %2 = tpu.matmul %0, %1, %cst {dimension_numbers = #tpu.dot_dimension_numbers<[1], [0], [0], [1], [0, 0, 1, 1], [], []>} : vector<8x144xf32>, vector<144x128xf32>, vector<8x128xf32> -> vector<8x128xf32>
    %c0_3 = arith.constant 0 : index
    %c0_4 = arith.constant 0 : index
    %3 = vector.load %arg3[%c0_3, %c0_4] : memref<1x128xf32, #tpu.memory_space<vmem>>, vector<1x128xf32>
    %4 = vector.broadcast %3 : vector<1x128xf32> to vector<8x128xf32>
    %5 = arith.addf %2, %4 : vector<8x128xf32>
    %cst_5 = arith.constant 0.000000e+00 : f32
    %6 = vector.broadcast %cst_5 : f32 to vector<8x128xf32>
    %7 = arith.maximumf %5, %6 : vector<8x128xf32>
    %c0_6 = arith.constant 0 : index
    %c0_7 = arith.constant 0 : index
    %8 = vector.load %arg4[%c0_6, %c0_7] : memref<128x128xf32, #tpu.memory_space<vmem>>, vector<128x128xf32>
    %cst_8 = arith.constant dense<0.000000e+00> : vector<8x128xf32>
    %9 = tpu.matmul %7, %8, %cst_8 {dimension_numbers = #tpu.dot_dimension_numbers<[1], [0], [0], [1], [0, 0, 1, 1], [], []>} : vector<8x128xf32>, vector<128x128xf32>, vector<8x128xf32> -> vector<8x128xf32>
    %c0_9 = arith.constant 0 : index
    %c0_10 = arith.constant 0 : index
    %10 = vector.load %arg5[%c0_9, %c0_10] : memref<1x128xf32, #tpu.memory_space<vmem>>, vector<1x128xf32>
    %11 = vector.broadcast %10 : vector<1x128xf32> to vector<8x128xf32>
    %12 = arith.addf %9, %11 : vector<8x128xf32>
    %c0_11 = arith.constant 0 : index
    %c0_12 = arith.constant 0 : index
    %13 = vector.load %arg6[%c0_11, %c0_12] : memref<8x128xf32, #tpu.memory_space<vmem>>, vector<8x128xf32>
    tpu.vector_store %arg6[%c0_11, %c0_12], %12 {strides = array<i32>} : memref<8x128xf32, #tpu.memory_space<vmem>>, vector<8x128xf32>,
    return
  }
  func.func @transform_0(%arg0: i32) -> (i32, i32) {
    %c0_i32 = arith.constant 0 : i32
    %c0_i32_0 = arith.constant 0 : i32
    return %arg0, %c0_i32 : i32, i32
  }
  func.func @transform_1(%arg0: i32) -> (i32, i32) {
    %c0_i32 = arith.constant 0 : i32
    %c0_i32_0 = arith.constant 0 : i32
    %c0_i32_1 = arith.constant 0 : i32
    return %c0_i32, %c0_i32_0 : i32, i32
  }
  func.func @transform_2(%arg0: i32) -> (i32, i32) {
    %c0_i32 = arith.constant 0 : i32
    %c0_i32_0 = arith.constant 0 : i32
    %c0_i32_1 = arith.constant 0 : i32
    return %c0_i32, %c0_i32_0 : i32, i32
  }
  func.func @transform_3(%arg0: i32) -> (i32, i32) {
    %c0_i32 = arith.constant 0 : i32
    %c0_i32_0 = arith.constant 0 : i32
    %c0_i32_1 = arith.constant 0 : i32
    return %c0_i32, %c0_i32_0 : i32, i32
  }
  func.func @transform_4(%arg0: i32) -> (i32, i32) {
    %c0_i32 = arith.constant 0 : i32
    %c0_i32_0 = arith.constant 0 : i32
    %c0_i32_1 = arith.constant 0 : i32
    return %c0_i32, %c0_i32_0 : i32, i32
  }
  func.func @transform_5(%arg0: i32) -> (i32, i32) {
    %c0_i32 = arith.constant 0 : i32
    %c0_i32_0 = arith.constant 0 : i32
    return %arg0, %c0_i32 : i32, i32
  }
}

</mosaic_0001>

<llo_original>
// kernel: cnn_quantize_forward.5
$region0: #{cnn_quantize_forward.5}
  #allocation0 [shape = 'u32[]', space=smem, size = 0x4, offset = 0x4, fixed_abs, tag = 'smem constant byte address 0x4 - core index']
  #allocation1 [shape = 'u32[72,128]{1,0:T(1,128)}', space=vmem, size = 0x9000, scoped, tag = 'internal scratch']
  %s0 = inlined_call_operand.vmem [shape: f32[104,16], index: 0, kind: input, shape index: {}]
  %s1 = inlined_call_operand.hbm [shape: f32[16,128], index: 1, kind: input, shape index: {}]
  %s2 = inlined_call_operand.vmem [shape: f32[128,16], index: 2, kind: input, shape index: {}]
  %s3 = inlined_call_operand.vmem [shape: f32[98,16], index: 3, kind: output, shape index: {0}]
  %s4 = inlined_call_operand.hbm [shape: f32[98,128], index: 4, kind: output, shape index: {1}]
  %s5 = inlined_call_operand.hbm [shape: f32[1,1], index: 5, kind: output, shape index: {2}]
  %6 = xla_tuple %s3, %s4, %s5
  %s7 = sld [smem:[#allocation0]]
  $region46: #{cnn_quantize_forward.5} parent=0
    _
  %s9 = ssub.s32 1, %s7
  %s10 = scalar_select 0, %s9, %s7
  $region1: #{cnn_quantize_forward.5} parent=0
    #allocation2 [shape = 'u8[8192]{0}', space=vmem, size = 0x2000, scoped, tag = 'input window, operand 1, single buffered']
    #allocation3 [shape = 's32[1]{0}', space=sflag, size = 0x4, scoped, tag = 'scoped memory for cnn_quantize_forward.5']
    #allocation4 [shape = 's32[1]{0}', space=sflag, size = 0x4, scoped, tag = 'scoped memory for cnn_quantize_forward.5']
    #allocation5 [shape = 'u8[53248]{0}', space=vmem, size = 0xd000, scoped, tag = 'output window, operand 1, single buffered']
    #allocation6 [shape = 'u8[512]{0}', space=vmem, size = 0x400, scoped, tag = 'output window, operand 2, single buffered']
    #allocation7 [shape = 's32[1]{0}', space=sflag, size = 0x4, scoped, tag = 'scoped memory for cnn_quantize_forward.5']
    %11 = vsyncpa [#allocation3], 0
    %12 = vsyncpa [#allocation4], 0
    %13 = vsyncpa [#allocation7], 0
    // Predicated region
    $region2: #{cnn_quantize_forward.5} parent=1 // pred_check
      _
    $region3: #{cnn_quantize_forward.5} parent=1 // pred_check_branch
      %15 = sbr.rel (0) target = $region5
    $region4: #{cnn_quantize_forward.5} parent=1 // pred_region
      _
    $region5: #{cnn_quantize_forward.5} parent=1 // pred_fallthru
      _
    // Predicated region
    $region6: #{cnn_quantize_forward.5} parent=1 // pred_check
      _
    $region7: #{cnn_quantize_forward.5} parent=1 // pred_check_branch
      %17 = sbr.rel (0) target = $region9
    $region8: #{cnn_quantize_forward.5} parent=1 // pred_region
      %19 = vsyncadd [#allocation3], 0
      %s20 = sshll.u32 %s1, 4
      %s21 = int_to_ptr.hbm [resolvable:$true] %s20
      %s22 = sshll.u32 [#allocation2], 4
      %s23 = int_to_ptr.vmem [resolvable:$true] %s22
      %28 = dma.hbm_to_vmem [thread:$0]  %s21, 256, %s23, [#allocation3], 128, 128, 8
    $region9: #{cnn_quantize_forward.5} parent=1 // pred_fallthru
      _
    // Predicated region
    $region10: #{cnn_quantize_forward.5} parent=1 // pred_check
      _
    $region11: #{cnn_quantize_forward.5} parent=1 // pred_check_branch
      %30 = sbr.rel (0) target = $region13
    $region12: #{cnn_quantize_forward.5} parent=1 // pred_region
      _
    $region13: #{cnn_quantize_forward.5} parent=1 // pred_fallthru
      _
    // Predicated region
    $region14: #{cnn_quantize_forward.5} parent=1 // pred_check
      _
    $region15: #{cnn_quantize_forward.5} parent=1 // pred_check_branch
      %32 = sbr.rel (0) target = $region17
    $region16: #{cnn_quantize_forward.5} parent=1 // pred_region
      %34 = dma.done [#allocation3], 256
    $region17: #{cnn_quantize_forward.5} parent=1 // pred_fallthru
      _
    %p35 = scmp.eq.s32.totalorder 0, 0
    // Predicated region
    $region18: #{cnn_quantize_forward.5} parent=1 // pred_check
      %p36 = pneg %p35
    $region19: #{cnn_quantize_forward.5} parent=1 // pred_check_branch
      %38 = sbr.rel (%p36) target = $region21
    $region20: #{cnn_quantize_forward.5} parent=1 // pred_region
      %vm39 = vcmask 0
      %40 = vst.msk [vmem:[#allocation6] sm:$0x1] %vm39, 0.0
    $region21: #{cnn_quantize_forward.5} parent=1 // pred_fallthru
      _
    %v41 = vld [vmem:[%s0] sm:$0xff]
    %v42 = vld [vmem:[%s0 + $0x8] sm:$0xff]
    %v43 = vld [vmem:[%s0 + $0x10] sm:$0xff]
    %v44 = vld [vmem:[%s0 + $0x18] sm:$0xff]
    %v45 = vld [vmem:[%s0 + $0x20] sm:$0xff]
    %v46 = vld [vmem:[%s0 + $0x28] sm:$0xff]
    %v47 = vld [vmem:[%s0 + $0x30] sm:$0xff]
    %v48 = vld [vmem:[%s0 + $0x38] sm:$0xff]
    %v49 = vld [vmem:[%s0 + $0x40] sm:$0xff]
    %v50 = vld [vmem:[%s0 + $0x48] sm:$0xff]
    %v51 = vld [vmem:[%s0 + $0x50] sm:$0xff]
    %v52 = vld [vmem:[%s0 + $0x58] sm:$0xff]
    %v53 = vld [vmem:[%s0 + $0x60] sm:$0xff]
    %v54 = vld [vmem:[#allocation2] sm:$0xff]
    %v55 = vld [vmem:[#allocation2 + $0x8] sm:$0xff]
    %vm56 = vcmask 130048
    %v58 = vsel %vm56, %v41, 0
    %v61 = vsel %vm56, %v42, 0
    %v64 = vsel %vm56, %v43, 0
    %v67 = vsel %vm56, %v44, 0
    %v70 = vsel %vm56, %v45, 0
    %v73 = vsel %vm56, %v46, 0
    %v76 = vsel %vm56, %v47, 0
    %v79 = vsel %vm56, %v48, 0
    %v82 = vsel %vm56, %v49, 0
    %v85 = vsel %vm56, %v50, 0
    %v88 = vsel %vm56, %v51, 0
    %v91 = vsel %vm56, %v52, 0
    %v94 = vsel %vm56, %v53, 0
    %96 = vmatpush.msra.mxu0 0.0
    %97 = vmatpush.msra.mxu0 0.0
    %98 = vmatpush.msra.mxu0 0.0
    %99 = vmatpush.msra.mxu0 0.0
    %100 = vmatpush.msra.mxu0 0.0
    %101 = vmatpush.msra.mxu0 0.0
    %102 = vmatpush.msra.mxu0 0.0
    %103 = vmatpush.msra.mxu0 0.0
    %104 = vmatpush.msra.mxu0 0.0
    %105 = vmatpush.msra.mxu0 0.0
    %106 = vmatpush.msra.mxu0 0.0
    %107 = vmatpush.msra.mxu0 0.0
    %108 = vmatpush.msra.mxu0 0.0
    %109 = vmatpush.msra.mxu0 0.0
    %110 = vmatpush.msra.mxu0 %v55
    %111 = vmatpush.msra.mxu0 %v54
    %112 = vmatmul.f32.gmra.mxu0 %v58
    %v113 = vpop.f32.mrf.mxu0
    %v114 = vadd.f32 0.0, %v113
    %115 = vmatmul.f32.gmra.mxu0 %v61
    %v116 = vpop.f32.mrf.mxu0
    %v117 = vadd.f32 0.0, %v116
    %118 = vmatmul.f32.gmra.mxu0 %v64
    %v119 = vpop.f32.mrf.mxu0
    %v120 = vadd.f32 0.0, %v119
    %121 = vmatmul.f32.gmra.mxu0 %v67
    %v122 = vpop.f32.mrf.mxu0
    %v123 = vadd.f32 0.0, %v122
    %124 = vmatmul.f32.gmra.mxu0 %v70
    %v125 = vpop.f32.mrf.mxu0
    %v126 = vadd.f32 0.0, %v125
    %127 = vmatmul.f32.gmra.mxu0 %v73
    %v128 = vpop.f32.mrf.mxu0
    %v129 = vadd.f32 0.0, %v128
    %130 = vmatmul.f32.gmra.mxu0 %v76
    %v131 = vpop.f32.mrf.mxu0
    %v132 = vadd.f32 0.0, %v131
    %133 = vmatmul.f32.gmra.mxu0 %v79
    %v134 = vpop.f32.mrf.mxu0
    %v135 = vadd.f32 0.0, %v134
    %136 = vmatmul.f32.gmra.mxu0 %v82
    %v137 = vpop.f32.mrf.mxu0
    %v138 = vadd.f32 0.0, %v137
    %139 = vmatmul.f32.gmra.mxu0 %v85
    %v140 = vpop.f32.mrf.mxu0
    %v141 = vadd.f32 0.0, %v140
    %142 = vmatmul.f32.gmra.mxu0 %v88
    %v143 = vpop.f32.mrf.mxu0
    %v144 = vadd.f32 0.0, %v143
    %145 = vmatmul.f32.gmra.mxu0 %v91
    %v146 = vpop.f32.mrf.mxu0
    %v147 = vadd.f32 0.0, %v146
    %148 = vmatmul.f32.gmra.mxu0 %v94
    %v149 = vpop.f32.mrf.mxu0
    %v150 = vadd.f32 0.0, %v149
    %151 = vdwg.mxu0
    %152 = vmax.xlane.f32.xlu0 %v114
    %v153 = vpop.xlane.xlu0 %152
    %154 = vmax.xlane.f32.xlu0 %v117
    %v155 = vpop.xlane.xlu0 %154
    %156 = vmax.xlane.f32.xlu0 %v120
    %v157 = vpop.xlane.xlu0 %156
    %158 = vmax.xlane.f32.xlu0 %v123
    %v159 = vpop.xlane.xlu0 %158
    %160 = vmax.xlane.f32.xlu0 %v126
    %v161 = vpop.xlane.xlu0 %160
    %162 = vmax.xlane.f32.xlu0 %v129
    %v163 = vpop.xlane.xlu0 %162
    %164 = vmax.xlane.f32.xlu0 %v132
    %v165 = vpop.xlane.xlu0 %164
    %166 = vmax.xlane.f32.xlu0 %v135
    %v167 = vpop.xlane.xlu0 %166
    %168 = vmax.xlane.f32.xlu0 %v138
    %v169 = vpop.xlane.xlu0 %168
    %170 = vmax.xlane.f32.xlu0 %v141
    %v171 = vpop.xlane.xlu0 %170
    %172 = vmax.xlane.f32.xlu0 %v144
    %v173 = vpop.xlane.xlu0 %172
    %174 = vmax.xlane.f32.xlu0 %v147
    %v175 = vpop.xlane.xlu0 %174
    %176 = vmax.xlane.f32.xlu0 %v150
    %v177 = vpop.xlane.xlu0 %176
    %v178 = vsub.f32 %v114, %v153
    %v179 = vsub.f32 %v117, %v155
    %v180 = vsub.f32 %v120, %v157
    %v181 = vsub.f32 %v123, %v159
    %v182 = vsub.f32 %v126, %v161
    %v183 = vsub.f32 %v129, %v163
    %v184 = vsub.f32 %v132, %v165
    %v185 = vsub.f32 %v135, %v167
    %v186 = vsub.f32 %v138, %v169
    %v187 = vsub.f32 %v141, %v171
    %v188 = vsub.f32 %v144, %v173
    %v189 = vsub.f32 %v147, %v175
    %v190 = vsub.f32 %v150, %v177
    %v191 = vmul.f32 %v178, 1.442695
    %v192 = vpow.pop %v191
    %v193 = vmul.f32 %v179, 1.442695
    %v194 = vpow.pop %v193
    %v195 = vmul.f32 %v180, 1.442695
    %v196 = vpow.pop %v195
    %v197 = vmul.f32 %v181, 1.442695
    %v198 = vpow.pop %v197
    %v199 = vmul.f32 %v182, 1.442695
    %v200 = vpow.pop %v199
    %v201 = vmul.f32 %v183, 1.442695
    %v202 = vpow.pop %v201
    %v203 = vmul.f32 %v184, 1.442695
    %v204 = vpow.pop %v203
    %v205 = vmul.f32 %v185, 1.442695
    %v206 = vpow.pop %v205
    %v207 = vmul.f32 %v186, 1.442695
    %v208 = vpow.pop %v207
    %v209 = vmul.f32 %v187, 1.442695
    %v210 = vpow.pop %v209
    %v211 = vmul.f32 %v188, 1.442695
    %v212 = vpow.pop %v211
    %v213 = vmul.f32 %v189, 1.442695
    %v214 = vpow.pop %v213
    %v215 = vmul.f32 %v190, 1.442695
    %v216 = vpow.pop %v215
    %217 = vadd.xlane.f32.xlu0 %v192
    %v218 = vpop.xlane.xlu0 %217
    %219 = vadd.xlane.f32.xlu0 %v194
    %v220 = vpop.xlane.xlu0 %219
    %221 = vadd.xlane.f32.xlu0 %v196
    %v222 = vpop.xlane.xlu0 %221
    %223 = vadd.xlane.f32.xlu0 %v198
    %v224 = vpop.xlane.xlu0 %223
    %225 = vadd.xlane.f32.xlu0 %v200
    %v226 = vpop.xlane.xlu0 %225
    %227 = vadd.xlane.f32.xlu0 %v202
    %v228 = vpop.xlane.xlu0 %227
    %229 = vadd.xlane.f32.xlu0 %v204
    %v230 = vpop.xlane.xlu0 %229
    %231 = vadd.xlane.f32.xlu0 %v206
    %v232 = vpop.xlane.xlu0 %231
    %233 = vadd.xlane.f32.xlu0 %v208
    %v234 = vpop.xlane.xlu0 %233
    %235 = vadd.xlane.f32.xlu0 %v210
    %v236 = vpop.xlane.xlu0 %235
    %237 = vadd.xlane.f32.xlu0 %v212
    %v238 = vpop.xlane.xlu0 %237
    %239 = vadd.xlane.f32.xlu0 %v214
    %v240 = vpop.xlane.xlu0 %239
    %241 = vadd.xlane.f32.xlu0 %v216
    %v242 = vpop.xlane.xlu0 %241
    %v243 = vrcp.pop %v218
    %v244 = vrcp.pop %v220
    %v245 = vrcp.pop %v222
    %v246 = vrcp.pop %v224
    %v247 = vrcp.pop %v226
    %v248 = vrcp.pop %v228
    %v249 = vrcp.pop %v230
    %v250 = vrcp.pop %v232
    %v251 = vrcp.pop %v234
    %v252 = vrcp.pop %v236
    %v253 = vrcp.pop %v238
    %v254 = vrcp.pop %v240
    %v255 = vrcp.pop %v242
    %v256 = vmul.f32 %v192, %v243
    %v257 = vmul.f32 %v194, %v244
    %v258 = vmul.f32 %v196, %v245
    %v259 = vmul.f32 %v198, %v246
    %v260 = vmul.f32 %v200, %v247
    %v261 = vmul.f32 %v202, %v248
    %v262 = vmul.f32 %v204, %v249
    %v263 = vmul.f32 %v206, %v250
    %v264 = vmul.f32 %v208, %v251
    %v265 = vmul.f32 %v210, %v252
    %v266 = vmul.f32 %v212, %v253
    %v267 = vmul.f32 %v214, %v254
    %v268 = vmul.f32 %v216, %v255
    %v269 = vld [vmem:[%s2] sm:$0xff]
    %v270 = vld [vmem:[%s2 + $0x8] sm:$0xff]
    %v271 = vld [vmem:[%s2 + $0x10] sm:$0xff]
    %v272 = vld [vmem:[%s2 + $0x18] sm:$0xff]
    %v273 = vld [vmem:[%s2 + $0x20] sm:$0xff]
    %v274 = vld [vmem:[%s2 + $0x28] sm:$0xff]
    %v275 = vld [vmem:[%s2 + $0x30] sm:$0xff]
    %v276 = vld [vmem:[%s2 + $0x38] sm:$0xff]
    %v277 = vld [vmem:[%s2 + $0x40] sm:$0xff]
    %v278 = vld [vmem:[%s2 + $0x48] sm:$0xff]
    %v279 = vld [vmem:[%s2 + $0x50] sm:$0xff]
    %v280 = vld [vmem:[%s2 + $0x58] sm:$0xff]
    %v281 = vld [vmem:[%s2 + $0x60] sm:$0xff]
    %v282 = vld [vmem:[%s2 + $0x68] sm:$0xff]
    %v283 = vld [vmem:[%s2 + $0x70] sm:$0xff]
    %v284 = vld [vmem:[%s2 + $0x78] sm:$0xff]
    %285 = vmatpush.msra.mxu0 %v284
    %286 = vmatpush.msra.mxu0 %v283
    %287 = vmatpush.msra.mxu0 %v282
    %288 = vmatpush.msra.mxu0 %v281
    %289 = vmatpush.msra.mxu0 %v280
    %290 = vmatpush.msra.mxu0 %v279
    %291 = vmatpush.msra.mxu0 %v278
    %292 = vmatpush.msra.mxu0 %v277
    %293 = vmatpush.msra.mxu0 %v276
    %294 = vmatpush.msra.mxu0 %v275
    %295 = vmatpush.msra.mxu0 %v274
    %296 = vmatpush.msra.mxu0 %v273
    %297 = vmatpush.msra.mxu0 %v272
    %298 = vmatpush.msra.mxu0 %v271
    %299 = vmatpush.msra.mxu0 %v270
    %300 = vmatpush.msra.mxu0 %v269
    %301 = vmatmul.f32.gmra.mxu0 %v256
    %v302 = vpop.f32.mrf.mxu0
    %v303 = vadd.f32 0.0, %v302
    %304 = vmatmul.f32.gmra.mxu0 %v257
    %v305 = vpop.f32.mrf.mxu0
    %v306 = vadd.f32 0.0, %v305
    %307 = vmatmul.f32.gmra.mxu0 %v258
    %v308 = vpop.f32.mrf.mxu0
    %v309 = vadd.f32 0.0, %v308
    %310 = vmatmul.f32.gmra.mxu0 %v259
    %v311 = vpop.f32.mrf.mxu0
    %v312 = vadd.f32 0.0, %v311
    %313 = vmatmul.f32.gmra.mxu0 %v260
    %v314 = vpop.f32.mrf.mxu0
    %v315 = vadd.f32 0.0, %v314
    %316 = vmatmul.f32.gmra.mxu0 %v261
    %v317 = vpop.f32.mrf.mxu0
    %v318 = vadd.f32 0.0, %v317
    %319 = vmatmul.f32.gmra.mxu0 %v262
    %v320 = vpop.f32.mrf.mxu0
    %v321 = vadd.f32 0.0, %v320
    %322 = vmatmul.f32.gmra.mxu0 %v263
    %v323 = vpop.f32.mrf.mxu0
    %v324 = vadd.f32 0.0, %v323
    %325 = vmatmul.f32.gmra.mxu0 %v264
    %v326 = vpop.f32.mrf.mxu0
    %v327 = vadd.f32 0.0, %v326
    %328 = vmatmul.f32.gmra.mxu0 %v265
    %v329 = vpop.f32.mrf.mxu0
    %v330 = vadd.f32 0.0, %v329
    %331 = vmatmul.f32.gmra.mxu0 %v266
    %v332 = vpop.f32.mrf.mxu0
    %v333 = vadd.f32 0.0, %v332
    %334 = vmatmul.f32.gmra.mxu0 %v267
    %v335 = vpop.f32.mrf.mxu0
    %v336 = vadd.f32 0.0, %v335
    %337 = vmatmul.f32.gmra.mxu0 %v268
    %v338 = vpop.f32.mrf.mxu0
    %v339 = vadd.f32 0.0, %v338
    %340 = vdwg.mxu0
    %341 = vst.msk [vmem:[%s3] sm:$0xff] %vm56, %v303
    %342 = vst.msk [vmem:[%s3 + $0x8] sm:$0xff] %vm56, %v306
    %343 = vst.msk [vmem:[%s3 + $0x10] sm:$0xff] %vm56, %v309
    %344 = vst.msk [vmem:[%s3 + $0x18] sm:$0xff] %vm56, %v312
    %345 = vst.msk [vmem:[%s3 + $0x20] sm:$0xff] %vm56, %v315
    %346 = vst.msk [vmem:[%s3 + $0x28] sm:$0xff] %vm56, %v318
    %347 = vst.msk [vmem:[%s3 + $0x30] sm:$0xff] %vm56, %v321
    %348 = vst.msk [vmem:[%s3 + $0x38] sm:$0xff] %vm56, %v324
    %349 = vst.msk [vmem:[%s3 + $0x40] sm:$0xff] %vm56, %v327
    %350 = vst.msk [vmem:[%s3 + $0x48] sm:$0xff] %vm56, %v330
    %351 = vst.msk [vmem:[%s3 + $0x50] sm:$0xff] %vm56, %v333
    %352 = vst.msk [vmem:[%s3 + $0x58] sm:$0xff] %vm56, %v336
    %353 = vst.msk [vmem:[%s3 + $0x60] sm:$0xff] %vm56, %v339
    %354 = vst [vmem:[#allocation5] sm:$0xff] %v256
    %355 = vst [vmem:[#allocation5 + $0x8] sm:$0xff] %v257
    %356 = vst [vmem:[#allocation5 + $0x10] sm:$0xff] %v258
    %357 = vst [vmem:[#allocation5 + $0x18] sm:$0xff] %v259
    %358 = vst [vmem:[#allocation5 + $0x20] sm:$0xff] %v260
    %359 = vst [vmem:[#allocation5 + $0x28] sm:$0xff] %v261
    %360 = vst [vmem:[#allocation5 + $0x30] sm:$0xff] %v262
    %361 = vst [vmem:[#allocation5 + $0x38] sm:$0xff] %v263
    %362 = vst [vmem:[#allocation5 + $0x40] sm:$0xff] %v264
    %363 = vst [vmem:[#allocation5 + $0x48] sm:$0xff] %v265
    %364 = vst [vmem:[#allocation5 + $0x50] sm:$0xff] %v266
    %365 = vst [vmem:[#allocation5 + $0x58] sm:$0xff] %v267
    %366 = vst [vmem:[#allocation5 + $0x60] sm:$0xff] %v268
    %s367 = smul.u32 0, 104
    %v368 = vlaneseq
    %v369 = vshrl.u32 %v368, 7
    %v370 = vadd.s32 %v369, 8
    %v371 = vadd.s32 %v369, 16
    %v372 = vadd.s32 %v369, 24
    %v373 = vadd.s32 %v369, 32
    %v374 = vadd.s32 %v369, 40
    %v375 = vadd.s32 %v369, 48
    %v376 = vadd.s32 %v369, 56
    %v377 = vadd.s32 %v369, 64
    %v378 = vadd.s32 %v369, 72
    %v379 = vadd.s32 %v369, 80
    %v380 = vadd.s32 %v369, 88
    %v381 = vadd.s32 %v369, 96
    %v382 = vstv %s367
    %v383 = vadd.s32 %v382, %v369
    %v384 = vadd.s32 %v382, %v370
    %v385 = vadd.s32 %v382, %v371
    %v386 = vadd.s32 %v382, %v372
    %v387 = vadd.s32 %v382, %v373
    %v388 = vadd.s32 %v382, %v374
    %v389 = vadd.s32 %v382, %v375
    %v390 = vadd.s32 %v382, %v376
    %v391 = vadd.s32 %v382, %v377
    %v392 = vadd.s32 %v382, %v378
    %v393 = vadd.s32 %v382, %v379
    %v394 = vadd.s32 %v382, %v380
    %v395 = vadd.s32 %v382, %v381
    %v396 = vsub.f32 %v303, %v41
    %v397 = vsub.f32 %v306, %v42
    %v398 = vsub.f32 %v309, %v43
    %v399 = vsub.f32 %v312, %v44
    %v400 = vsub.f32 %v315, %v45
    %v401 = vsub.f32 %v318, %v46
    %v402 = vsub.f32 %v321, %v47
    %v403 = vsub.f32 %v324, %v48
    %v404 = vsub.f32 %v327, %v49
    %v405 = vsub.f32 %v330, %v50
    %v406 = vsub.f32 %v333, %v51
    %v407 = vsub.f32 %v336, %v52
    %v408 = vsub.f32 %v339, %v53
    %v409 = vmul.f32 %v396, %v396
    %v410 = vmul.f32 %v397, %v397
    %v411 = vmul.f32 %v398, %v398
    %v412 = vmul.f32 %v399, %v399
    %v413 = vmul.f32 %v400, %v400
    %v414 = vmul.f32 %v401, %v401
    %v415 = vmul.f32 %v402, %v402
    %v416 = vmul.f32 %v403, %v403
    %v417 = vmul.f32 %v404, %v404
    %v418 = vmul.f32 %v405, %v405
    %v419 = vmul.f32 %v406, %v406
    %v420 = vmul.f32 %v407, %v407
    %v421 = vmul.f32 %v408, %v408
    %v422 = vsel %vm56, %v409, 0.0
    %423 = vadd.xlane.f32.xlu0 %v422
    %v424 = vpop.xlane.xlu0 %423
    %v425 = vsel %vm56, %v410, 0.0
    %426 = vadd.xlane.f32.xlu0 %v425
    %v427 = vpop.xlane.xlu0 %426
    %v428 = vsel %vm56, %v411, 0.0
    %429 = vadd.xlane.f32.xlu0 %v428
    %v430 = vpop.xlane.xlu0 %429
    %v431 = vsel %vm56, %v412, 0.0
    %432 = vadd.xlane.f32.xlu0 %v431
    %v433 = vpop.xlane.xlu0 %432
    %v434 = vsel %vm56, %v413, 0.0
    %435 = vadd.xlane.f32.xlu0 %v434
    %v436 = vpop.xlane.xlu0 %435
    %v437 = vsel %vm56, %v414, 0.0
    %438 = vadd.xlane.f32.xlu0 %v437
    %v439 = vpop.xlane.xlu0 %438
    %v440 = vsel %vm56, %v415, 0.0
    %441 = vadd.xlane.f32.xlu0 %v440
    %v442 = vpop.xlane.xlu0 %441
    %v443 = vsel %vm56, %v416, 0.0
    %444 = vadd.xlane.f32.xlu0 %v443
    %v445 = vpop.xlane.xlu0 %444
    %v446 = vsel %vm56, %v417, 0.0
    %447 = vadd.xlane.f32.xlu0 %v446
    %v448 = vpop.xlane.xlu0 %447
    %v449 = vsel %vm56, %v418, 0.0
    %450 = vadd.xlane.f32.xlu0 %v449
    %v451 = vpop.xlane.xlu0 %450
    %v452 = vsel %vm56, %v419, 0.0
    %453 = vadd.xlane.f32.xlu0 %v452
    %v454 = vpop.xlane.xlu0 %453
    %v455 = vsel %vm56, %v420, 0.0
    %456 = vadd.xlane.f32.xlu0 %v455
    %v457 = vpop.xlane.xlu0 %456
    %v458 = vsel %vm56, %v421, 0.0
    %459 = vadd.xlane.f32.xlu0 %v458
    %v460 = vpop.xlane.xlu0 %459
    %vm461 = vcmp.lt.s32.totalorder %v383, 98
    %vm462 = vcmp.lt.s32.totalorder %v384, 98
    %vm463 = vcmp.lt.s32.totalorder %v385, 98
    %vm464 = vcmp.lt.s32.totalorder %v386, 98
    %vm465 = vcmp.lt.s32.totalorder %v387, 98
    %vm466 = vcmp.lt.s32.totalorder %v388, 98
    %vm467 = vcmp.lt.s32.totalorder %v389, 98
    %vm468 = vcmp.lt.s32.totalorder %v390, 98
    %vm469 = vcmp.lt.s32.totalorder %v391, 98
    %vm470 = vcmp.lt.s32.totalorder %v392, 98
    %vm471 = vcmp.lt.s32.totalorder %v393, 98
    %vm472 = vcmp.lt.s32.totalorder %v394, 98
    %vm473 = vcmp.lt.s32.totalorder %v395, 98
    %v474 = vsel %vm461, %v424, 0.0
    %v475 = vsel %vm462, %v427, 0.0
    %v476 = vsel %vm463, %v430, 0.0
    %v477 = vsel %vm464, %v433, 0.0
    %v478 = vsel %vm465, %v436, 0.0
    %v479 = vsel %vm466, %v439, 0.0
    %v480 = vsel %vm467, %v442, 0.0
    %v481 = vsel %vm468, %v445, 0.0
    %v482 = vsel %vm469, %v448, 0.0
    %v483 = vsel %vm470, %v451, 0.0
    %v484 = vsel %vm471, %v454, 0.0
    %v485 = vsel %vm472, %v457, 0.0
    %v486 = vsel %vm473, %v460, 0.0
    %v487 = vld [vmem:[#allocation6] sm:$0x1]
    %vm488 = vcmask 7168
    %v489 = vsel %vm488, %v474, 0.0
    %v490 = vsel %vm488, %v475, 0.0
    %v491 = vadd.f32 %v489, %v490
    %v492 = vsel %vm488, %v476, 0.0
    %v493 = vadd.f32 %v491, %v492
    %v494 = vsel %vm488, %v477, 0.0
    %v495 = vadd.f32 %v493, %v494
    %v496 = vsel %vm488, %v478, 0.0
    %v497 = vadd.f32 %v495, %v496
    %v498 = vsel %vm488, %v479, 0.0
    %v499 = vadd.f32 %v497, %v498
    %v500 = vsel %vm488, %v480, 0.0
    %v501 = vadd.f32 %v499, %v500
    %v502 = vsel %vm488, %v481, 0.0
    %v503 = vadd.f32 %v501, %v502
    %v504 = vsel %vm488, %v482, 0.0
    %v505 = vadd.f32 %v503, %v504
    %v506 = vsel %vm488, %v483, 0.0
    %v507 = vadd.f32 %v505, %v506
    %v508 = vsel %vm488, %v484, 0.0
    %v509 = vadd.f32 %v507, %v508
    %v510 = vsel %vm488, %v485, 0.0
    %v511 = vadd.f32 %v509, %v510
    %v512 = vsel %vm488, %v486, 0.0
    %v513 = vadd.f32 %v511, %v512
    %514 = vadd.xlane.f32.xlu0 %v513
    %v515 = vpop.xlane.xlu0 %514
    %v516 = vrot.slane %v515, 4
    %v517 = vadd.f32 %v515, %v516
    %v518 = vrot.slane %v517, 2
    %v519 = vadd.f32 %v517, %v518
    %v520 = vrot.slane %v519, 1
    %v521 = vadd.f32 %v519, %v520
    %s522 = vtos %v521
    %s523 = smul.f32 %s522, 0.0006377551
    %v524 = vstv %s523
    %v525 = vadd.f32 %v487, %v524
    %vm526 = vcmask 0
    %527 = vst.msk [vmem:[#allocation6] sm:$0x1] %vm526, %v525
    // Predicated region
    $region22: #{cnn_quantize_forward.5} parent=1 // pred_check
      _
    $region23: #{cnn_quantize_forward.5} parent=1 // pred_check_branch
      %529 = sbr.rel (0) target = $region25
    $region24: #{cnn_quantize_forward.5} parent=1 // pred_region
      _
    $region25: #{cnn_quantize_forward.5} parent=1 // pred_fallthru
      _
    // Predicated region
    $region26: #{cnn_quantize_forward.5} parent=1 // pred_check
      _
    $region27: #{cnn_quantize_forward.5} parent=1 // pred_check_branch
      %531 = sbr.rel (0) target = $region29
    $region28: #{cnn_quantize_forward.5} parent=1 // pred_region
      %533 = vsyncadd [#allocation4], 0
      %s534 = sshll.u32 [#allocation5], 4
      %s535 = int_to_ptr.vmem [resolvable:$true] %s534
      %s536 = sshll.u32 %s4, 4
      %s537 = int_to_ptr.hbm [resolvable:$true] %s536
      %542 = dma.vmem_to_hbm [thread:$0]  %s535, 1664, %s537, [#allocation4], 128, 128, 8
    $region29: #{cnn_quantize_forward.5} parent=1 // pred_fallthru
      _
    // Predicated region
    $region30: #{cnn_quantize_forward.5} parent=1 // pred_check
      _
    $region31: #{cnn_quantize_forward.5} parent=1 // pred_check_branch
      %544 = sbr.rel (0) target = $region33
    $region32: #{cnn_quantize_forward.5} parent=1 // pred_region
      %546 = vsyncadd [#allocation7], 0
      %s548 = sshll.u32 [#allocation6], 4
      %s549 = int_to_ptr.vmem [resolvable:$true] %s548
      %s550 = sshll.u32 %s5, 4
      %s551 = int_to_ptr.hbm [resolvable:$true] %s550
      %553 = dma.vmem_to_hbm [thread:$0]  %s549, 16, %s551, [#allocation7]
    $region33: #{cnn_quantize_forward.5} parent=1 // pred_fallthru
      _
    // Predicated region
    $region34: #{cnn_quantize_forward.5} parent=1 // pred_check
      _
    $region35: #{cnn_quantize_forward.5} parent=1 // pred_check_branch
      %555 = sbr.rel (0) target = $region37
    $region36: #{cnn_quantize_forward.5} parent=1 // pred_region
      _
    $region37: #{cnn_quantize_forward.5} parent=1 // pred_fallthru
      _
    // Predicated region
    $region38: #{cnn_quantize_forward.5} parent=1 // pred_check
      _
    $region39: #{cnn_quantize_forward.5} parent=1 // pred_check_branch
      %557 = sbr.rel (0) target = $region41
    $region40: #{cnn_quantize_forward.5} parent=1 // pred_region
      %559 = dma.done [#allocation4], 1664
    $region41: #{cnn_quantize_forward.5} parent=1 // pred_fallthru
      _
    // Predicated region
    $region42: #{cnn_quantize_forward.5} parent=1 // pred_check
      _
    $region43: #{cnn_quantize_forward.5} parent=1 // pred_check_branch
      %561 = sbr.rel (0) target = $region45
    $region44: #{cnn_quantize_forward.5} parent=1 // pred_region
      %563 = dma.done [#allocation7], 16
    $region45: #{cnn_quantize_forward.5} parent=1 // pred_fallthru
      _
    %564 = vsyncpa [#allocation3], 1
    %565 = vsyncpa [#allocation4], 1
    %566 = vsyncpa [#allocation7], 1

// kernel: cnn_quantize_forward.6
$region0: #{cnn_quantize_forward.6}
  #allocation0 [shape = 'u32[]', space=smem, size = 0x4, offset = 0x4, fixed_abs, tag = 'smem constant byte address 0x4 - core index']
  #allocation1 [shape = 'u32[72,128]{1,0:T(1,128)}', space=vmem, size = 0x9000, scoped, tag = 'internal scratch']
  %s0 = inlined_call_operand.vmem [shape: f32[1152,32], index: 0, kind: input, shape index: {}]
  %s1 = inlined_call_operand.vmem [shape: f32[32,128], index: 1, kind: input, shape index: {}]
  %s2 = inlined_call_operand.vmem [shape: f32[1,128], index: 2, kind: input, shape index: {}]
  %s3 = inlined_call_operand.vmem [shape: f32[1152,128], index: 3, kind: output, shape index: {}]
  %s4 = sld [smem:[#allocation0]]
  $region93: #{cnn_quantize_forward.6} parent=0
    _
  %s6 = ssub.s32 1, %s4
  %s7 = scalar_select 0, %s6, %s4
  $region1: #{cnn_quantize_forward.6} parent=0
    #allocation2 [shape = 'u8[262144]{0}', space=vmem, size = 0x40000, scoped, tag = 'output window, operand 0']
    loop: start=0, step=1, limit=7
    $region2: #{cnn_quantize_forward.6} parent=1 // loop_pre_header
      _
    $region3: #{cnn_quantize_forward.6} parent=1 // loop_header
      %s9 = sphi 0, %s13
      %p10 = scmp.ge.s32.totalorder %s9, 7
      %s19 = sphi 0, %s21
      %s22 = sphi 0, %s19
      %s23 = sphi 0, %s22
      %s39 = sphi 0, %s23
      %s43 = sphi 0, %s43
      %s45 = sphi 0, %s43
      %s46 = sphi 0, %s45
      %s60 = sphi 0, %s46
      %s64 = sphi 0, %s64
      %s66 = sphi 0, %s64
      %s67 = sphi 0, %s66
      %s81 = sphi 0, %s67
      %s87 = sphi 0, %s89
      %s90 = sphi 0, %s87
      %s91 = sphi 0, %s90
      %s107 = sphi 0, %s91
    $region4: #{cnn_quantize_forward.6} parent=1 // loop_header_branch
      %12 = sbr.rel (%p10) target = $region8
    $region5: #{cnn_quantize_forward.6} parent=1 // loop_body
      %s14 = ssub.s32 %s9, 1
      %s15 = ssub.s32 %s9, 2
      %s16 = sadd.s32 %s9, 1
      %s17 = ssub.s32 %s9, %s16
      %p18 = scmp.eq.s32.totalorder %s17, 0
      %s20 = sadd.s32 %s19, 1
      %s21 = scalar_select %p18, %s19, %s20
      %p24 = pneg %p18
      %p25 = scmp.eq.s32.totalorder %s9, 4
      %p26 = por %p24, %p25
      %p27 = scmp.ne.s32.totalorder %s19, %s22
      %p28 = scmp.eq.s32.totalorder %s9, 0
      %p29 = por %p27, %p28
      %p30 = scmp.ne.s32.totalorder %s19, %s22
      %p31 = scmp.eq.s32.totalorder %s14, 4
      %p32 = por %p30, %p31
      %p33 = scmp.ne.s32.totalorder %s22, %s23
      %p34 = scmp.eq.s32.totalorder %s14, 0
      %p35 = por %p33, %p34
      %p36 = scmp.ne.s32.totalorder %s22, %s23
      %p37 = scmp.eq.s32.totalorder %s15, 4
      %p38 = por %p36, %p37
      %p40 = scmp.ne.s32.totalorder %s23, %s39
      %p41 = scmp.eq.s32.totalorder %s15, 0
      %p42 = por %p40, %p41
      %s44 = sadd.s32 %s43, 1
      %p47 = scmp.eq.s32.totalorder %s9, 4
      %p48 = scmp.ne.s32.totalorder %s43, %s45
      %p49 = scmp.eq.s32.totalorder %s9, 0
      %p50 = por %p48, %p49
      %p51 = scmp.ne.s32.totalorder %s43, %s45
      %p52 = scmp.eq.s32.totalorder %s14, 4
      %p53 = por %p51, %p52
      %p54 = scmp.ne.s32.totalorder %s45, %s46
      %p55 = scmp.eq.s32.totalorder %s14, 0
      %p56 = por %p54, %p55
      %p57 = scmp.ne.s32.totalorder %s45, %s46
      %p58 = scmp.eq.s32.totalorder %s15, 4
      %p59 = por %p57, %p58
      %p61 = scmp.ne.s32.totalorder %s46, %s60
      %p62 = scmp.eq.s32.totalorder %s15, 0
      %p63 = por %p61, %p62
      %s65 = sadd.s32 %s64, 1
      %p68 = scmp.eq.s32.totalorder %s9, 4
      %p69 = scmp.ne.s32.totalorder %s64, %s66
      %p70 = scmp.eq.s32.totalorder %s9, 0
      %p71 = por %p69, %p70
      %p72 = scmp.ne.s32.totalorder %s64, %s66
      %p73 = scmp.eq.s32.totalorder %s14, 4
      %p74 = por %p72, %p73
      %p75 = scmp.ne.s32.totalorder %s66, %s67
      %p76 = scmp.eq.s32.totalorder %s14, 0
      %p77 = por %p75, %p76
      %p78 = scmp.ne.s32.totalorder %s66, %s67
      %p79 = scmp.eq.s32.totalorder %s15, 4
      %p80 = por %p78, %p79
      %p82 = scmp.ne.s32.totalorder %s67, %s81
      %p83 = scmp.eq.s32.totalorder %s15, 0
      %p84 = por %p82, %p83
      %s85 = ssub.s32 %s9, %s16
      %p86 = scmp.eq.s32.totalorder %s85, 0
      %s88 = sadd.s32 %s87, 1
      %s89 = scalar_select %p86, %s87, %s88
      %p92 = pneg %p86
      %p93 = scmp.eq.s32.totalorder %s9, 4
      %p94 = por %p92, %p93
      %p95 = scmp.ne.s32.totalorder %s87, %s90
      %p96 = scmp.eq.s32.totalorder %s9, 0
      %p97 = por %p95, %p96
      %p98 = scmp.ne.s32.totalorder %s87, %s90
      %p99 = scmp.eq.s32.totalorder %s14, 4
      %p100 = por %p98, %p99
      %p101 = scmp.ne.s32.totalorder %s90, %s91
      %p102 = scmp.eq.s32.totalorder %s14, 0
      %p103 = por %p101, %p102
      %p104 = scmp.ne.s32.totalorder %s90, %s91
      %p105 = scmp.eq.s32.totalorder %s15, 4
      %p106 = por %p104, %p105
      %p108 = scmp.ne.s32.totalorder %s91, %s107
      %p109 = scmp.eq.s32.totalorder %s15, 0
      %p110 = por %p108, %p109
      %p111 = scmp.le.s32.totalorder 1, %s9
      %p112 = scmp.lt.s32.totalorder %s9, 6
      %p113 = pnand %p111, %p112
      %p114 = pneg %p113
      // Predicated region
      $region9: #{cnn_quantize_forward.6} parent=5 // pred_check
        _
      $region10: #{cnn_quantize_forward.6} parent=5 // pred_check_branch
        %116 = sbr.rel (%p113) target = $region12
      $region11: #{cnn_quantize_forward.6} parent=5 // pred_region
        %s117 = ssub.s32 %s9, 1
        // Predicated region
        $region13: #{cnn_quantize_forward.6} parent=11 // pred_check
          %p118 = pneg %p56
        $region14: #{cnn_quantize_forward.6} parent=11 // pred_check_branch
          %120 = sbr.rel (%p118) target = $region16
        $region15: #{cnn_quantize_forward.6} parent=11 // pred_region
          _
        $region16: #{cnn_quantize_forward.6} parent=11 // pred_fallthru
          _
        // Predicated region
        $region17: #{cnn_quantize_forward.6} parent=11 // pred_check
          %p121 = pneg %p77
        $region18: #{cnn_quantize_forward.6} parent=11 // pred_check_branch
          %123 = sbr.rel (%p121) target = $region20
        $region19: #{cnn_quantize_forward.6} parent=11 // pred_region
          _
        $region20: #{cnn_quantize_forward.6} parent=11 // pred_fallthru
          _
      $region12: #{cnn_quantize_forward.6} parent=5 // pred_fallthru
        _
      %p124 = scmp.lt.s32.totalorder %s9, 5
      // Predicated region
      $region21: #{cnn_quantize_forward.6} parent=5 // pred_check
        %p125 = pneg %p124
      $region22: #{cnn_quantize_forward.6} parent=5 // pred_check_branch
        %127 = sbr.rel (%p125) target = $region24
      $region23: #{cnn_quantize_forward.6} parent=5 // pred_region
        // Predicated region
        $region25: #{cnn_quantize_forward.6} parent=23 // pred_check
          %p128 = pneg %p29
        $region26: #{cnn_quantize_forward.6} parent=23 // pred_check_branch
          %130 = sbr.rel (%p128) target = $region28
        $region27: #{cnn_quantize_forward.6} parent=23 // pred_region
          %s131 = smul.u32 32, %s9
          %s132 = ssub.s32 144, %s131
          %p133 = scmp.lt.s32.totalorder %s132, 32
          %s134 = scalar_select %p133, %s132, 32
          %s135 = smul.u32 8, %s134
          %p136 = scmp.lt.s32.totalorder %s131, 143
          %s137 = scalar_select %p136, %s131, 143
          %s138 = smul.addr %s137, 8
          %s139 = scalar_lea.vmem %s0, %s138
          %s140 = smul.u32 32, %s9
          %s141 = ssub.s32 144, %s140
          %p142 = scmp.lt.s32.totalorder %s141, 32
          %s143 = scalar_select %p142, %s141, 32
          %s144 = smul.u32 8, %s143
        $region28: #{cnn_quantize_forward.6} parent=23 // pred_fallthru
          _
      $region24: #{cnn_quantize_forward.6} parent=5 // pred_fallthru
        _
      %p145 = scmp.le.s32.totalorder 1, %s9
      %p146 = scmp.lt.s32.totalorder %s9, 6
      %p147 = pnand %p145, %p146
      %p148 = pneg %p147
      // Predicated region
      $region29: #{cnn_quantize_forward.6} parent=5 // pred_check
        _
      $region30: #{cnn_quantize_forward.6} parent=5 // pred_check_branch
        %150 = sbr.rel (%p147) target = $region32
      $region31: #{cnn_quantize_forward.6} parent=5 // pred_region
        %s151 = ssub.s32 %s9, 1
        %s152 = smul.u32 32, %s14
        %s153 = ssub.s32 144, %s152
        %p154 = scmp.lt.s32.totalorder %s153, 32
        %s155 = scalar_select %p154, %s153, 32
        %s156 = smul.u32 8, %s155
        %p157 = scmp.lt.s32.totalorder %s152, 143
        %s158 = scalar_select %p157, %s152, 143
        %s159 = smul.addr %s158, 8
        %s160 = scalar_lea.vmem %s0, %s159
        %p161 = pneg %p35
        %p162 = pneg %p32
        %p163 = pneg %p56
        %p164 = pneg %p53
        %p165 = pneg %p77
        %p166 = pneg %p74
        %p167 = pneg %p103
        %p168 = pneg %p100
        %s169 = sand.u32 %s90, 1
        %s170 = sand.u32 %s90, 1
        %s171 = smul.addr %s170, 256
        %s172 = scalar_lea.vmem [#allocation2], %s171
        %s173 = smul.u32 32, %s14
        %s174 = ssub.s32 144, %s173
        %p175 = scmp.lt.s32.totalorder %s174, 32
        %s176 = scalar_select %p175, %s174, 32
        %s177 = smul.u32 8, %s176
        %p178 = scmp.lt.s32.totalorder %s173, 143
        %s179 = scalar_select %p178, %s173, 143
        %s180 = smul.addr %s179, 8
        %s181 = scalar_lea.vmem %s0, %s180
        %s182 = smul.u32 32, %s14
        %s183 = ssub.s32 144, %s182
        %p184 = scmp.lt.s32.totalorder %s183, 32
        %s185 = scalar_select %p184, %s183, 32
        %s186 = smul.u32 8, %s185
        %s187 = smul.u32 32, %s14
        %s188 = ssub.s32 144, %s187
        %p189 = scmp.lt.s32.totalorder %s188, 32
        %s190 = scalar_select %p189, %s188, 32
        %s191 = smul.u32 8, %s190
        %v192 = vld [vmem:[%s181] sm:$0xff]
        %v193 = vld [vmem:[%s181 + $0x8] sm:$0xff]
        %v194 = vld [vmem:[%s181 + $0x10] sm:$0xff]
        %v195 = vld [vmem:[%s181 + $0x18] sm:$0xff]
        %v196 = vld [vmem:[%s181 + $0x20] sm:$0xff]
        %v197 = vld [vmem:[%s181 + $0x28] sm:$0xff]
        %v198 = vld [vmem:[%s181 + $0x30] sm:$0xff]
        %v199 = vld [vmem:[%s181 + $0x38] sm:$0xff]
        %v200 = vld [vmem:[%s181 + $0x40] sm:$0xff]
        %v201 = vld [vmem:[%s181 + $0x48] sm:$0xff]
        %v202 = vld [vmem:[%s181 + $0x50] sm:$0xff]
        %v203 = vld [vmem:[%s181 + $0x58] sm:$0xff]
        %v204 = vld [vmem:[%s181 + $0x60] sm:$0xff]
        %v205 = vld [vmem:[%s181 + $0x68] sm:$0xff]
        %v206 = vld [vmem:[%s181 + $0x70] sm:$0xff]
        %v207 = vld [vmem:[%s181 + $0x78] sm:$0xff]
        %v208 = vld [vmem:[%s181 + $0x80] sm:$0xff]
        %v209 = vld [vmem:[%s181 + $0x88] sm:$0xff]
        %v210 = vld [vmem:[%s181 + $0x90] sm:$0xff]
        %v211 = vld [vmem:[%s181 + $0x98] sm:$0xff]
        %v212 = vld [vmem:[%s181 + $0xa0] sm:$0xff]
        %v213 = vld [vmem:[%s181 + $0xa8] sm:$0xff]
        %v214 = vld [vmem:[%s181 + $0xb0] sm:$0xff]
        %v215 = vld [vmem:[%s181 + $0xb8] sm:$0xff]
        %v216 = vld [vmem:[%s181 + $0xc0] sm:$0xff]
        %v217 = vld [vmem:[%s181 + $0xc8] sm:$0xff]
        %v218 = vld [vmem:[%s181 + $0xd0] sm:$0xff]
        %v219 = vld [vmem:[%s181 + $0xd8] sm:$0xff]
        %v220 = vld [vmem:[%s181 + $0xe0] sm:$0xff]
        %v221 = vld [vmem:[%s181 + $0xe8] sm:$0xff]
        %v222 = vld [vmem:[%s181 + $0xf0] sm:$0xff]
        %v223 = vld [vmem:[%s181 + $0xf8] sm:$0xff]
        %v224 = vld [vmem:[%s1] sm:$0xff]
        %v225 = vld [vmem:[%s1 + $0x8] sm:$0xff]
        %v226 = vld [vmem:[%s1 + $0x10] sm:$0xff]
        %v227 = vld [vmem:[%s1 + $0x18] sm:$0xff]
        %v228 = vld [vmem:[%s2] sm:$0x1]
        %v230 = vperm.slane %v228, 0
        %vm232 = vcmask 261120
        %v234 = vsel %vm232, %v192, 0
        %v237 = vsel %vm232, %v193, 0
        %v240 = vsel %vm232, %v194, 0
        %v243 = vsel %vm232, %v195, 0
        %v246 = vsel %vm232, %v196, 0
        %v249 = vsel %vm232, %v197, 0
        %v252 = vsel %vm232, %v198, 0
        %v255 = vsel %vm232, %v199, 0
        %v258 = vsel %vm232, %v200, 0
        %v261 = vsel %vm232, %v201, 0
        %v264 = vsel %vm232, %v202, 0
        %v267 = vsel %vm232, %v203, 0
        %v270 = vsel %vm232, %v204, 0
        %v273 = vsel %vm232, %v205, 0
        %v276 = vsel %vm232, %v206, 0
        %v279 = vsel %vm232, %v207, 0
        %v282 = vsel %vm232, %v208, 0
        %v285 = vsel %vm232, %v209, 0
        %v288 = vsel %vm232, %v210, 0
        %v291 = vsel %vm232, %v211, 0
        %v294 = vsel %vm232, %v212, 0
        %v297 = vsel %vm232, %v213, 0
        %v300 = vsel %vm232, %v214, 0
        %v303 = vsel %vm232, %v215, 0
        %v306 = vsel %vm232, %v216, 0
        %v309 = vsel %vm232, %v217, 0
        %v312 = vsel %vm232, %v218, 0
        %v315 = vsel %vm232, %v219, 0
        %v318 = vsel %vm232, %v220, 0
        %v321 = vsel %vm232, %v221, 0
        %v324 = vsel %vm232, %v222, 0
        %v327 = vsel %vm232, %v223, 0
        %329 = vmatpush.msra.mxu0 0.0
        %330 = vmatpush.msra.mxu0 0.0
        %331 = vmatpush.msra.mxu0 0.0
        %332 = vmatpush.msra.mxu0 0.0
        %333 = vmatpush.msra.mxu0 0.0
        %334 = vmatpush.msra.mxu0 0.0
        %335 = vmatpush.msra.mxu0 0.0
        %336 = vmatpush.msra.mxu0 0.0
        %337 = vmatpush.msra.mxu0 0.0
        %338 = vmatpush.msra.mxu0 0.0
        %339 = vmatpush.msra.mxu0 0.0
        %340 = vmatpush.msra.mxu0 0.0
        %341 = vmatpush.msra.mxu0 %v227
        %342 = vmatpush.msra.mxu0 %v226
        %343 = vmatpush.msra.mxu0 %v225
        %344 = vmatpush.msra.mxu0 %v224
        %345 = vmatmul.f32.gmra.mxu0 %v234
        %v346 = vpop.f32.mrf.mxu0
        %v347 = vadd.f32 %v230, %v346
        %348 = vmatmul.f32.gmra.mxu0 %v237
        %v349 = vpop.f32.mrf.mxu0
        %v350 = vadd.f32 %v230, %v349
        %351 = vmatmul.f32.gmra.mxu0 %v240
        %v352 = vpop.f32.mrf.mxu0
        %v353 = vadd.f32 %v230, %v352
        %354 = vmatmul.f32.gmra.mxu0 %v243
        %v355 = vpop.f32.mrf.mxu0
        %v356 = vadd.f32 %v230, %v355
        %357 = vmatmul.f32.gmra.mxu0 %v246
        %v358 = vpop.f32.mrf.mxu0
        %v359 = vadd.f32 %v230, %v358
        %360 = vmatmul.f32.gmra.mxu0 %v249
        %v361 = vpop.f32.mrf.mxu0
        %v362 = vadd.f32 %v230, %v361
        %363 = vmatmul.f32.gmra.mxu0 %v252
        %v364 = vpop.f32.mrf.mxu0
        %v365 = vadd.f32 %v230, %v364
        %366 = vmatmul.f32.gmra.mxu0 %v255
        %v367 = vpop.f32.mrf.mxu0
        %v368 = vadd.f32 %v230, %v367
        %369 = vmatmul.f32.gmra.mxu0 %v258
        %v370 = vpop.f32.mrf.mxu0
        %v371 = vadd.f32 %v230, %v370
        %372 = vmatmul.f32.gmra.mxu0 %v261
        %v373 = vpop.f32.mrf.mxu0
        %v374 = vadd.f32 %v230, %v373
        %375 = vmatmul.f32.gmra.mxu0 %v264
        %v376 = vpop.f32.mrf.mxu0
        %v377 = vadd.f32 %v230, %v376
        %378 = vmatmul.f32.gmra.mxu0 %v267
        %v379 = vpop.f32.mrf.mxu0
        %v380 = vadd.f32 %v230, %v379
        %381 = vmatmul.f32.gmra.mxu0 %v270
        %v382 = vpop.f32.mrf.mxu0
        %v383 = vadd.f32 %v230, %v382
        %384 = vmatmul.f32.gmra.mxu0 %v273
        %v385 = vpop.f32.mrf.mxu0
        %v386 = vadd.f32 %v230, %v385
        %387 = vmatmul.f32.gmra.mxu0 %v276
        %v388 = vpop.f32.mrf.mxu0
        %v389 = vadd.f32 %v230, %v388
        %390 = vmatmul.f32.gmra.mxu0 %v279
        %v391 = vpop.f32.mrf.mxu0
        %v392 = vadd.f32 %v230, %v391
        %393 = vmatmul.f32.gmra.mxu0 %v282
        %v394 = vpop.f32.mrf.mxu0
        %v395 = vadd.f32 %v230, %v394
        %396 = vmatmul.f32.gmra.mxu0 %v285
        %v397 = vpop.f32.mrf.mxu0
        %v398 = vadd.f32 %v230, %v397
        %399 = vmatmul.f32.gmra.mxu0 %v288
        %v400 = vpop.f32.mrf.mxu0
        %v401 = vadd.f32 %v230, %v400
        %402 = vmatmul.f32.gmra.mxu0 %v291
        %v403 = vpop.f32.mrf.mxu0
        %v404 = vadd.f32 %v230, %v403
        %405 = vmatmul.f32.gmra.mxu0 %v294
        %v406 = vpop.f32.mrf.mxu0
        %v407 = vadd.f32 %v230, %v406
        %408 = vmatmul.f32.gmra.mxu0 %v297
        %v409 = vpop.f32.mrf.mxu0
        %v410 = vadd.f32 %v230, %v409
        %411 = vmatmul.f32.gmra.mxu0 %v300
        %v412 = vpop.f32.mrf.mxu0
        %v413 = vadd.f32 %v230, %v412
        %414 = vmatmul.f32.gmra.mxu0 %v303
        %v415 = vpop.f32.mrf.mxu0
        %v416 = vadd.f32 %v230, %v415
        %417 = vmatmul.f32.gmra.mxu0 %v306
        %v418 = vpop.f32.mrf.mxu0
        %v419 = vadd.f32 %v230, %v418
        %420 = vmatmul.f32.gmra.mxu0 %v309
        %v421 = vpop.f32.mrf.mxu0
        %v422 = vadd.f32 %v230, %v421
        %423 = vmatmul.f32.gmra.mxu0 %v312
        %v424 = vpop.f32.mrf.mxu0
        %v425 = vadd.f32 %v230, %v424
        %426 = vmatmul.f32.gmra.mxu0 %v315
        %v427 = vpop.f32.mrf.mxu0
        %v428 = vadd.f32 %v230, %v427
        %429 = vmatmul.f32.gmra.mxu0 %v318
        %v430 = vpop.f32.mrf.mxu0
        %v431 = vadd.f32 %v230, %v430
        %432 = vmatmul.f32.gmra.mxu0 %v321
        %v433 = vpop.f32.mrf.mxu0
        %v434 = vadd.f32 %v230, %v433
        %435 = vmatmul.f32.gmra.mxu0 %v324
        %v436 = vpop.f32.mrf.mxu0
        %v437 = vadd.f32 %v230, %v436
        %438 = vmatmul.f32.gmra.mxu0 %v327
        %v439 = vpop.f32.mrf.mxu0
        %v440 = vadd.f32 %v230, %v439
        %441 = vdwg.mxu0
        %v442 = vmax.f32 %v347, 0.0
        %v443 = vmax.f32 %v350, 0.0
        %v444 = vmax.f32 %v353, 0.0
        %v445 = vmax.f32 %v356, 0.0
        %v446 = vmax.f32 %v359, 0.0
        %v447 = vmax.f32 %v362, 0.0
        %v448 = vmax.f32 %v365, 0.0
        %v449 = vmax.f32 %v368, 0.0
        %v450 = vmax.f32 %v371, 0.0
        %v451 = vmax.f32 %v374, 0.0
        %v452 = vmax.f32 %v377, 0.0
        %v453 = vmax.f32 %v380, 0.0
        %v454 = vmax.f32 %v383, 0.0
        %v455 = vmax.f32 %v386, 0.0
        %v456 = vmax.f32 %v389, 0.0
        %v457 = vmax.f32 %v392, 0.0
        %v458 = vmax.f32 %v395, 0.0
        %v459 = vmax.f32 %v398, 0.0
        %v460 = vmax.f32 %v401, 0.0
        %v461 = vmax.f32 %v404, 0.0
        %v462 = vmax.f32 %v407, 0.0
        %v463 = vmax.f32 %v410, 0.0
        %v464 = vmax.f32 %v413, 0.0
        %v465 = vmax.f32 %v416, 0.0
        %v466 = vmax.f32 %v419, 0.0
        %v467 = vmax.f32 %v422, 0.0
        %v468 = vmax.f32 %v425, 0.0
        %v469 = vmax.f32 %v428, 0.0
        %v470 = vmax.f32 %v431, 0.0
        %v471 = vmax.f32 %v434, 0.0
        %v472 = vmax.f32 %v437, 0.0
        %v473 = vmax.f32 %v440, 0.0
        %474 = vst [vmem:[%s172] sm:$0xff] %v442
        %475 = vst [vmem:[%s172 + $0x8] sm:$0xff] %v443
        %476 = vst [vmem:[%s172 + $0x10] sm:$0xff] %v444
        %477 = vst [vmem:[%s172 + $0x18] sm:$0xff] %v445
        %478 = vst [vmem:[%s172 + $0x20] sm:$0xff] %v446
        %479 = vst [vmem:[%s172 + $0x28] sm:$0xff] %v447
        %480 = vst [vmem:[%s172 + $0x30] sm:$0xff] %v448
        %481 = vst [vmem:[%s172 + $0x38] sm:$0xff] %v449
        %482 = vst [vmem:[%s172 + $0x40] sm:$0xff] %v450
        %483 = vst [vmem:[%s172 + $0x48] sm:$0xff] %v451
        %484 = vst [vmem:[%s172 + $0x50] sm:$0xff] %v452
        %485 = vst [vmem:[%s172 + $0x58] sm:$0xff] %v453
        %486 = vst [vmem:[%s172 + $0x60] sm:$0xff] %v454
        %487 = vst [vmem:[%s172 + $0x68] sm:$0xff] %v455
        %488 = vst [vmem:[%s172 + $0x70] sm:$0xff] %v456
        %489 = vst [vmem:[%s172 + $0x78] sm:$0xff] %v457
        %490 = vst [vmem:[%s172 + $0x80] sm:$0xff] %v458
        %491 = vst [vmem:[%s172 + $0x88] sm:$0xff] %v459
        %492 = vst [vmem:[%s172 + $0x90] sm:$0xff] %v460
        %493 = vst [vmem:[%s172 + $0x98] sm:$0xff] %v461
        %494 = vst [vmem:[%s172 + $0xa0] sm:$0xff] %v462
        %495 = vst [vmem:[%s172 + $0xa8] sm:$0xff] %v463
        %496 = vst [vmem:[%s172 + $0xb0] sm:$0xff] %v464
        %497 = vst [vmem:[%s172 + $0xb8] sm:$0xff] %v465
        %498 = vst [vmem:[%s172 + $0xc0] sm:$0xff] %v466
        %499 = vst [vmem:[%s172 + $0xc8] sm:$0xff] %v467
        %500 = vst [vmem:[%s172 + $0xd0] sm:$0xff] %v468
        %501 = vst [vmem:[%s172 + $0xd8] sm:$0xff] %v469
        %502 = vst [vmem:[%s172 + $0xe0] sm:$0xff] %v470
        %503 = vst [vmem:[%s172 + $0xe8] sm:$0xff] %v471
        %504 = vst [vmem:[%s172 + $0xf0] sm:$0xff] %v472
        %505 = vst [vmem:[%s172 + $0xf8] sm:$0xff] %v473
        %s506 = sand.u32 %s90, 1
        %s507 = sand.u32 %s90, 1
        %s508 = smul.addr %s507, 256
        %s509 = scalar_lea.vmem [#allocation2], %s508
        // Predicated region
        $region33: #{cnn_quantize_forward.6} parent=31 // pred_check
          %p510 = pneg %p100
        $region34: #{cnn_quantize_forward.6} parent=31 // pred_check_branch
          %512 = sbr.rel (%p510) target = $region36
        $region35: #{cnn_quantize_forward.6} parent=31 // pred_region
          %s513 = smul.u32 32, %s14
          %s514 = ssub.s32 144, %s513
          %p515 = scmp.lt.s32.totalorder %s514, 32
          %s516 = scalar_select %p515, %s514, 32
          %s517 = smul.u32 8, %s516
          %p518 = scmp.ne.s32.totalorder 0, %s517
          %s519 = smul.addr %s513, 8
          %s520 = scalar_lea.vmem %s3, %s519
          // Predicated region
          $region37: #{cnn_quantize_forward.6} parent=35 // pred_check
            %p521 = pneg %p518
          $region38: #{cnn_quantize_forward.6} parent=35 // pred_check_branch
            %523 = sbr.rel (%p521) target = $region40
          $region39: #{cnn_quantize_forward.6} parent=35 // pred_region
            // Predicated region
            $region41: #{cnn_quantize_forward.6} parent=39 // pred_check
              _
            $region42: #{cnn_quantize_forward.6} parent=39 // pred_check_branch
              %525 = sbr.rel (0) target = $region44
            $region43: #{cnn_quantize_forward.6} parent=39 // pred_region
              // Predicated region
              $region63: #{cnn_quantize_forward.6} parent=43 // pred_check
                _
              $region64: #{cnn_quantize_forward.6} parent=43 // pred_check_branch
                %637 = sbr.rel (0) target = $region66
              $region65: #{cnn_quantize_forward.6} parent=43 // pred_region
                %s638 = sshrl.u32 %s516, 5
                // While loop
                $region67: #{cnn_quantize_forward.6} parent=65 // loop_pre_header
                  _
                $region68: #{cnn_quantize_forward.6} parent=65 // loop_header
                  %s640 = sphi 0, %s642
                  %p641 = scmp.ge.s32.totalorder %s640, %s638
                  %s645 = sphi 0, %s714
                  %s646 = sphi %s509, %s717
                  %s647 = sphi %s520, %s718
                $region69: #{cnn_quantize_forward.6} parent=65 // loop_header_branch
                  %644 = sbr.rel (%p641) target = $region73
                $region70: #{cnn_quantize_forward.6} parent=65 // loop_body
                  %v648 = vld [vmem:[%s646] sm:$0xff]
                  %649 = vst [vmem:[%s647] sm:$0xff] %v648
                  %v650 = vld [vmem:[%s646 + $0x8] sm:$0xff]
                  %651 = vst [vmem:[%s647 + $0x8] sm:$0xff] %v650
                  %v652 = vld [vmem:[%s646 + $0x10] sm:$0xff]
                  %653 = vst [vmem:[%s647 + $0x10] sm:$0xff] %v652
                  %v654 = vld [vmem:[%s646 + $0x18] sm:$0xff]
                  %655 = vst [vmem:[%s647 + $0x18] sm:$0xff] %v654
                  %v656 = vld [vmem:[%s646 + $0x20] sm:$0xff]
                  %657 = vst [vmem:[%s647 + $0x20] sm:$0xff] %v656
                  %v658 = vld [vmem:[%s646 + $0x28] sm:$0xff]
                  %659 = vst [vmem:[%s647 + $0x28] sm:$0xff] %v658
                  %v660 = vld [vmem:[%s646 + $0x30] sm:$0xff]
                  %661 = vst [vmem:[%s647 + $0x30] sm:$0xff] %v660
                  %v662 = vld [vmem:[%s646 + $0x38] sm:$0xff]
                  %663 = vst [vmem:[%s647 + $0x38] sm:$0xff] %v662
                  %v664 = vld [vmem:[%s646 + $0x40] sm:$0xff]
                  %665 = vst [vmem:[%s647 + $0x40] sm:$0xff] %v664
                  %v666 = vld [vmem:[%s646 + $0x48] sm:$0xff]
                  %667 = vst [vmem:[%s647 + $0x48] sm:$0xff] %v666
                  %v668 = vld [vmem:[%s646 + $0x50] sm:$0xff]
                  %669 = vst [vmem:[%s647 + $0x50] sm:$0xff] %v668
                  %v670 = vld [vmem:[%s646 + $0x58] sm:$0xff]
                  %671 = vst [vmem:[%s647 + $0x58] sm:$0xff] %v670
                  %v672 = vld [vmem:[%s646 + $0x60] sm:$0xff]
                  %673 = vst [vmem:[%s647 + $0x60] sm:$0xff] %v672
                  %v674 = vld [vmem:[%s646 + $0x68] sm:$0xff]
                  %675 = vst [vmem:[%s647 + $0x68] sm:$0xff] %v674
                  %v676 = vld [vmem:[%s646 + $0x70] sm:$0xff]
                  %677 = vst [vmem:[%s647 + $0x70] sm:$0xff] %v676
                  %v678 = vld [vmem:[%s646 + $0x78] sm:$0xff]
                  %679 = vst [vmem:[%s647 + $0x78] sm:$0xff] %v678
                  %v680 = vld [vmem:[%s646 + $0x80] sm:$0xff]
                  %681 = vst [vmem:[%s647 + $0x80] sm:$0xff] %v680
                  %v682 = vld [vmem:[%s646 + $0x88] sm:$0xff]
                  %683 = vst [vmem:[%s647 + $0x88] sm:$0xff] %v682
                  %v684 = vld [vmem:[%s646 + $0x90] sm:$0xff]
                  %685 = vst [vmem:[%s647 + $0x90] sm:$0xff] %v684
                  %v686 = vld [vmem:[%s646 + $0x98] sm:$0xff]
                  %687 = vst [vmem:[%s647 + $0x98] sm:$0xff] %v686
                  %v688 = vld [vmem:[%s646 + $0xa0] sm:$0xff]
                  %689 = vst [vmem:[%s647 + $0xa0] sm:$0xff] %v688
                  %v690 = vld [vmem:[%s646 + $0xa8] sm:$0xff]
                  %691 = vst [vmem:[%s647 + $0xa8] sm:$0xff] %v690
                  %v692 = vld [vmem:[%s646 + $0xb0] sm:$0xff]
                  %693 = vst [vmem:[%s647 + $0xb0] sm:$0xff] %v692
                  %v694 = vld [vmem:[%s646 + $0xb8] sm:$0xff]
                  %695 = vst [vmem:[%s647 + $0xb8] sm:$0xff] %v694
                  %v696 = vld [vmem:[%s646 + $0xc0] sm:$0xff]
                  %697 = vst [vmem:[%s647 + $0xc0] sm:$0xff] %v696
                  %v698 = vld [vmem:[%s646 + $0xc8] sm:$0xff]
                  %699 = vst [vmem:[%s647 + $0xc8] sm:$0xff] %v698
                  %v700 = vld [vmem:[%s646 + $0xd0] sm:$0xff]
                  %701 = vst [vmem:[%s647 + $0xd0] sm:$0xff] %v700
                  %v702 = vld [vmem:[%s646 + $0xd8] sm:$0xff]
                  %703 = vst [vmem:[%s647 + $0xd8] sm:$0xff] %v702
                  %v704 = vld [vmem:[%s646 + $0xe0] sm:$0xff]
                  %705 = vst [vmem:[%s647 + $0xe0] sm:$0xff] %v704
                  %v706 = vld [vmem:[%s646 + $0xe8] sm:$0xff]
                  %707 = vst [vmem:[%s647 + $0xe8] sm:$0xff] %v706
                  %v708 = vld [vmem:[%s646 + $0xf0] sm:$0xff]
                  %709 = vst [vmem:[%s647 + $0xf0] sm:$0xff] %v708
                  %v710 = vld [vmem:[%s646 + $0xf8] sm:$0xff]
                  %711 = vst [vmem:[%s647 + $0xf8] sm:$0xff] %v710
                  %s712 = sadd.s32 1, %s645
                  %p713 = scmp.ge.s32.totalorder %s712, %s638
                  %s714 = scalar_select %p713, 0, %s712
                  %s715 = smul.u32 %s714, 256
                  %s716 = smul.u32 %s714, 256
                  %s717 = scalar_lea.vmem %s509, %s715 [#allocation2]
                  %s718 = scalar_lea.vmem %s520, %s716
                $region71: #{cnn_quantize_forward.6} parent=65 // loop_footer
                  %s642 = sadd.s32 %s640, 1
                $region72: #{cnn_quantize_forward.6} parent=65 // loop_footer_branch
                  %639 = sbr.rel target = $region68
                $region73: #{cnn_quantize_forward.6} parent=65 // loop_exit
                  _
                %s719 = sshrl.u32 %s516, 5
                %s720 = sand.u32 %s516, 31
                %s721 = smul.u32 %s719, 32
                %s722 = smul.u32 8, %s721
                %s723 = scalar_lea.vmem %s509, %s722 [#allocation2]
                %s724 = smul.u32 8, %s721
                %s725 = scalar_lea.vmem %s520, %s724
                // While loop
                $region74: #{cnn_quantize_forward.6} parent=65 // loop_pre_header
                  _
                $region75: #{cnn_quantize_forward.6} parent=65 // loop_header
                  %s727 = sphi 0, %s729
                  %p728 = scmp.ge.s32.totalorder %s727, %s720
                  %s732 = sphi 0, %s739
                  %s733 = sphi %s723, %s742
                  %s734 = sphi %s725, %s743
                $region76: #{cnn_quantize_forward.6} parent=65 // loop_header_branch
                  %731 = sbr.rel (%p728) target = $region80
                $region77: #{cnn_quantize_forward.6} parent=65 // loop_body
                  %v735 = vld [vmem:[%s733] sm:$0xff]
                  %736 = vst [vmem:[%s734] sm:$0xff] %v735
                  %s737 = sadd.s32 1, %s732
                  %p738 = scmp.ge.s32.totalorder %s737, %s720
                  %s739 = scalar_select %p738, 0, %s737
                  %s740 = smul.u32 %s739, 8
                  %s741 = smul.u32 %s739, 8
                  %s742 = scalar_lea.vmem %s723, %s740 [#allocation2]
                  %s743 = scalar_lea.vmem %s725, %s741
                $region78: #{cnn_quantize_forward.6} parent=65 // loop_footer
                  %s729 = sadd.s32 %s727, 1
                $region79: #{cnn_quantize_forward.6} parent=65 // loop_footer_branch
                  %726 = sbr.rel target = $region75
                $region80: #{cnn_quantize_forward.6} parent=65 // loop_exit
                  _
              $region66: #{cnn_quantize_forward.6} parent=43 // pred_fallthru
                _
              // Predicated region
              $region81: #{cnn_quantize_forward.6} parent=43 // pred_check
                _
              $region82: #{cnn_quantize_forward.6} parent=43 // pred_check_branch
                %745 = sbr.rel target = $region84
              $region83: #{cnn_quantize_forward.6} parent=43 // pred_region
                _
              $region84: #{cnn_quantize_forward.6} parent=43 // pred_fallthru
                _
            $region44: #{cnn_quantize_forward.6} parent=39 // pred_fallthru
              _
            // Predicated region
            $region45: #{cnn_quantize_forward.6} parent=39 // pred_check
              _
            $region46: #{cnn_quantize_forward.6} parent=39 // pred_check_branch
              %527 = sbr.rel target = $region48
            $region47: #{cnn_quantize_forward.6} parent=39 // pred_region
              %s529 = ssub.s32 256, 1
              %s530 = sshrl.u32 %s516, 5
              // While loop
              $region49: #{cnn_quantize_forward.6} parent=47 // loop_pre_header
                _
              $region50: #{cnn_quantize_forward.6} parent=47 // loop_header
                %s532 = sphi 0, %s534
                %p533 = scmp.ge.s32.totalorder %s532, %s530
                %s537 = sphi 0, %s606
                %s538 = sphi %s509, %s609
                %s539 = sphi %s520, %s610
              $region51: #{cnn_quantize_forward.6} parent=47 // loop_header_branch
                %536 = sbr.rel (%p533) target = $region55
              $region52: #{cnn_quantize_forward.6} parent=47 // loop_body
                %v540 = vld [vmem:[%s538] sm:%s529]
                %541 = vst [vmem:[%s539] sm:%s529] %v540
                %v542 = vld [vmem:[%s538 + $0x8] sm:%s529]
                %543 = vst [vmem:[%s539 + $0x8] sm:%s529] %v542
                %v544 = vld [vmem:[%s538 + $0x10] sm:%s529]
                %545 = vst [vmem:[%s539 + $0x10] sm:%s529] %v544
                %v546 = vld [vmem:[%s538 + $0x18] sm:%s529]
                %547 = vst [vmem:[%s539 + $0x18] sm:%s529] %v546
                %v548 = vld [vmem:[%s538 + $0x20] sm:%s529]
                %549 = vst [vmem:[%s539 + $0x20] sm:%s529] %v548
                %v550 = vld [vmem:[%s538 + $0x28] sm:%s529]
                %551 = vst [vmem:[%s539 + $0x28] sm:%s529] %v550
                %v552 = vld [vmem:[%s538 + $0x30] sm:%s529]
                %553 = vst [vmem:[%s539 + $0x30] sm:%s529] %v552
                %v554 = vld [vmem:[%s538 + $0x38] sm:%s529]
                %555 = vst [vmem:[%s539 + $0x38] sm:%s529] %v554
                %v556 = vld [vmem:[%s538 + $0x40] sm:%s529]
                %557 = vst [vmem:[%s539 + $0x40] sm:%s529] %v556
                %v558 = vld [vmem:[%s538 + $0x48] sm:%s529]
                %559 = vst [vmem:[%s539 + $0x48] sm:%s529] %v558
                %v560 = vld [vmem:[%s538 + $0x50] sm:%s529]
                %561 = vst [vmem:[%s539 + $0x50] sm:%s529] %v560
                %v562 = vld [vmem:[%s538 + $0x58] sm:%s529]
                %563 = vst [vmem:[%s539 + $0x58] sm:%s529] %v562
                %v564 = vld [vmem:[%s538 + $0x60] sm:%s529]
                %565 = vst [vmem:[%s539 + $0x60] sm:%s529] %v564
                %v566 = vld [vmem:[%s538 + $0x68] sm:%s529]
                %567 = vst [vmem:[%s539 + $0x68] sm:%s529] %v566
                %v568 = vld [vmem:[%s538 + $0x70] sm:%s529]
                %569 = vst [vmem:[%s539 + $0x70] sm:%s529] %v568
                %v570 = vld [vmem:[%s538 + $0x78] sm:%s529]
                %571 = vst [vmem:[%s539 + $0x78] sm:%s529] %v570
                %v572 = vld [vmem:[%s538 + $0x80] sm:%s529]
                %573 = vst [vmem:[%s539 + $0x80] sm:%s529] %v572
                %v574 = vld [vmem:[%s538 + $0x88] sm:%s529]
                %575 = vst [vmem:[%s539 + $0x88] sm:%s529] %v574
                %v576 = vld [vmem:[%s538 + $0x90] sm:%s529]
                %577 = vst [vmem:[%s539 + $0x90] sm:%s529] %v576
                %v578 = vld [vmem:[%s538 + $0x98] sm:%s529]
                %579 = vst [vmem:[%s539 + $0x98] sm:%s529] %v578
                %v580 = vld [vmem:[%s538 + $0xa0] sm:%s529]
                %581 = vst [vmem:[%s539 + $0xa0] sm:%s529] %v580
                %v582 = vld [vmem:[%s538 + $0xa8] sm:%s529]
                %583 = vst [vmem:[%s539 + $0xa8] sm:%s529] %v582
                %v584 = vld [vmem:[%s538 + $0xb0] sm:%s529]
                %585 = vst [vmem:[%s539 + $0xb0] sm:%s529] %v584
                %v586 = vld [vmem:[%s538 + $0xb8] sm:%s529]
                %587 = vst [vmem:[%s539 + $0xb8] sm:%s529] %v586
                %v588 = vld [vmem:[%s538 + $0xc0] sm:%s529]
                %589 = vst [vmem:[%s539 + $0xc0] sm:%s529] %v588
                %v590 = vld [vmem:[%s538 + $0xc8] sm:%s529]
                %591 = vst [vmem:[%s539 + $0xc8] sm:%s529] %v590
                %v592 = vld [vmem:[%s538 + $0xd0] sm:%s529]
                %593 = vst [vmem:[%s539 + $0xd0] sm:%s529] %v592
                %v594 = vld [vmem:[%s538 + $0xd8] sm:%s529]
                %595 = vst [vmem:[%s539 + $0xd8] sm:%s529] %v594
                %v596 = vld [vmem:[%s538 + $0xe0] sm:%s529]
                %597 = vst [vmem:[%s539 + $0xe0] sm:%s529] %v596
                %v598 = vld [vmem:[%s538 + $0xe8] sm:%s529]
                %599 = vst [vmem:[%s539 + $0xe8] sm:%s529] %v598
                %v600 = vld [vmem:[%s538 + $0xf0] sm:%s529]
                %601 = vst [vmem:[%s539 + $0xf0] sm:%s529] %v600
                %v602 = vld [vmem:[%s538 + $0xf8] sm:%s529]
                %603 = vst [vmem:[%s539 + $0xf8] sm:%s529] %v602
                %s604 = sadd.s32 1, %s537
                %p605 = scmp.ge.s32.totalorder %s604, %s530
                %s606 = scalar_select %p605, 0, %s604
                %s607 = smul.u32 %s606, 256
                %s608 = smul.u32 %s606, 256
                %s609 = scalar_lea.vmem %s509, %s607 [#allocation2]
                %s610 = scalar_lea.vmem %s520, %s608
              $region53: #{cnn_quantize_forward.6} parent=47 // loop_footer
                %s534 = sadd.s32 %s532, 1
              $region54: #{cnn_quantize_forward.6} parent=47 // loop_footer_branch
                %531 = sbr.rel target = $region50
              $region55: #{cnn_quantize_forward.6} parent=47 // loop_exit
                _
              %s611 = sshrl.u32 %s516, 5
              %s612 = sand.u32 %s516, 31
              %s613 = smul.u32 %s611, 32
              %s614 = smul.u32 8, %s613
              %s615 = scalar_lea.vmem %s509, %s614 [#allocation2]
              %s616 = smul.u32 8, %s613
              %s617 = scalar_lea.vmem %s520, %s616
              // While loop
              $region56: #{cnn_quantize_forward.6} parent=47 // loop_pre_header
                _
              $region57: #{cnn_quantize_forward.6} parent=47 // loop_header
                %s619 = sphi 0, %s621
                %p620 = scmp.ge.s32.totalorder %s619, %s612
                %s624 = sphi 0, %s631
                %s625 = sphi %s615, %s634
                %s626 = sphi %s617, %s635
              $region58: #{cnn_quantize_forward.6} parent=47 // loop_header_branch
                %623 = sbr.rel (%p620) target = $region62
              $region59: #{cnn_quantize_forward.6} parent=47 // loop_body
                %v627 = vld [vmem:[%s625] sm:%s529]
                %628 = vst [vmem:[%s626] sm:%s529] %v627
                %s629 = sadd.s32 1, %s624
                %p630 = scmp.ge.s32.totalorder %s629, %s612
                %s631 = scalar_select %p630, 0, %s629
                %s632 = smul.u32 %s631, 8
                %s633 = smul.u32 %s631, 8
                %s634 = scalar_lea.vmem %s615, %s632 [#allocation2]
                %s635 = scalar_lea.vmem %s617, %s633
              $region60: #{cnn_quantize_forward.6} parent=47 // loop_footer
                %s621 = sadd.s32 %s619, 1
              $region61: #{cnn_quantize_forward.6} parent=47 // loop_footer_branch
                %618 = sbr.rel target = $region57
              $region62: #{cnn_quantize_forward.6} parent=47 // loop_exit
                _
            $region48: #{cnn_quantize_forward.6} parent=39 // pred_fallthru
              _
          $region40: #{cnn_quantize_forward.6} parent=35 // pred_fallthru
            _
          %746 = vnop
        $region36: #{cnn_quantize_forward.6} parent=31 // pred_fallthru
          _
      $region32: #{cnn_quantize_forward.6} parent=5 // pred_fallthru
        _
      %p747 = scmp.le.s32.totalorder 2, %s9
      // Predicated region
      $region85: #{cnn_quantize_forward.6} parent=5 // pred_check
        %p748 = pneg %p747
      $region86: #{cnn_quantize_forward.6} parent=5 // pred_check_branch
        %750 = sbr.rel (%p748) target = $region88
      $region87: #{cnn_quantize_forward.6} parent=5 // pred_region
        %s751 = ssub.s32 %s9, 2
        // Predicated region
        $region89: #{cnn_quantize_forward.6} parent=87 // pred_check
          %p752 = pneg %p106
        $region90: #{cnn_quantize_forward.6} parent=87 // pred_check_branch
          %754 = sbr.rel (%p752) target = $region92
        $region91: #{cnn_quantize_forward.6} parent=87 // pred_region
          %s755 = sand.u32 %s91, 1
          %s756 = sand.u32 %s91, 1
          %s757 = smul.addr %s756, 256
          %s758 = scalar_lea.vmem [#allocation2], %s757
        $region92: #{cnn_quantize_forward.6} parent=87 // pred_fallthru
          _
      $region88: #{cnn_quantize_forward.6} parent=5 // pred_fallthru
        _
    $region6: #{cnn_quantize_forward.6} parent=1 // loop_footer
      %s13 = sadd.s32 1, %s9
    $region7: #{cnn_quantize_forward.6} parent=1 // loop_footer_branch
      %8 = sbr.rel target = $region3
    $region8: #{cnn_quantize_forward.6} parent=1 // loop_exit
      _

// kernel: cnn_quantize_forward.7
$region0: #{cnn_quantize_forward.7}
  #allocation0 [shape = 'u32[]', space=smem, size = 0x4, offset = 0x4, fixed_abs, tag = 'smem constant byte address 0x4 - core index']
  #allocation1 [shape = 'u32[72,128]{1,0:T(1,128)}', space=vmem, size = 0x9000, scoped, tag = 'internal scratch']
  %s0 = inlined_call_operand.vmem [shape: f32[800,800], index: 0, kind: input, shape index: {}]
  %s1 = inlined_call_operand.vmem [shape: f32[800,128], index: 1, kind: input, shape index: {}]
  %s2 = inlined_call_operand.vmem [shape: f32[1,128], index: 2, kind: input, shape index: {}]
  %s3 = inlined_call_operand.vmem [shape: f32[800,128], index: 3, kind: output, shape index: {}]
  %s4 = sld [smem:[#allocation0]]
  $region93: #{cnn_quantize_forward.7} parent=0
    _
  %s6 = ssub.s32 1, %s4
  %s7 = scalar_select 0, %s6, %s4
  $region1: #{cnn_quantize_forward.7} parent=0
    #allocation2 [shape = 'u8[262144]{0}', space=vmem, size = 0x40000, scoped, tag = 'output window, operand 0']
    loop: start=0, step=1, limit=6
    $region2: #{cnn_quantize_forward.7} parent=1 // loop_pre_header
      _
    $region3: #{cnn_quantize_forward.7} parent=1 // loop_header
      %s9 = sphi 0, %s13
      %p10 = scmp.ge.s32.totalorder %s9, 6
      %s19 = sphi 0, %s21
      %s22 = sphi 0, %s19
      %s23 = sphi 0, %s22
      %s39 = sphi 0, %s23
      %s43 = sphi 0, %s43
      %s45 = sphi 0, %s43
      %s46 = sphi 0, %s45
      %s60 = sphi 0, %s46
      %s64 = sphi 0, %s64
      %s66 = sphi 0, %s64
      %s67 = sphi 0, %s66
      %s81 = sphi 0, %s67
      %s87 = sphi 0, %s89
      %s90 = sphi 0, %s87
      %s91 = sphi 0, %s90
      %s107 = sphi 0, %s91
    $region4: #{cnn_quantize_forward.7} parent=1 // loop_header_branch
      %12 = sbr.rel (%p10) target = $region8
    $region5: #{cnn_quantize_forward.7} parent=1 // loop_body
      %s14 = ssub.s32 %s9, 1
      %s15 = ssub.s32 %s9, 2
      %s16 = sadd.s32 %s9, 1
      %s17 = ssub.s32 %s9, %s16
      %p18 = scmp.eq.s32.totalorder %s17, 0
      %s20 = sadd.s32 %s19, 1
      %s21 = scalar_select %p18, %s19, %s20
      %p24 = pneg %p18
      %p25 = scmp.eq.s32.totalorder %s9, 3
      %p26 = por %p24, %p25
      %p27 = scmp.ne.s32.totalorder %s19, %s22
      %p28 = scmp.eq.s32.totalorder %s9, 0
      %p29 = por %p27, %p28
      %p30 = scmp.ne.s32.totalorder %s19, %s22
      %p31 = scmp.eq.s32.totalorder %s14, 3
      %p32 = por %p30, %p31
      %p33 = scmp.ne.s32.totalorder %s22, %s23
      %p34 = scmp.eq.s32.totalorder %s14, 0
      %p35 = por %p33, %p34
      %p36 = scmp.ne.s32.totalorder %s22, %s23
      %p37 = scmp.eq.s32.totalorder %s15, 3
      %p38 = por %p36, %p37
      %p40 = scmp.ne.s32.totalorder %s23, %s39
      %p41 = scmp.eq.s32.totalorder %s15, 0
      %p42 = por %p40, %p41
      %s44 = sadd.s32 %s43, 1
      %p47 = scmp.eq.s32.totalorder %s9, 3
      %p48 = scmp.ne.s32.totalorder %s43, %s45
      %p49 = scmp.eq.s32.totalorder %s9, 0
      %p50 = por %p48, %p49
      %p51 = scmp.ne.s32.totalorder %s43, %s45
      %p52 = scmp.eq.s32.totalorder %s14, 3
      %p53 = por %p51, %p52
      %p54 = scmp.ne.s32.totalorder %s45, %s46
      %p55 = scmp.eq.s32.totalorder %s14, 0
      %p56 = por %p54, %p55
      %p57 = scmp.ne.s32.totalorder %s45, %s46
      %p58 = scmp.eq.s32.totalorder %s15, 3
      %p59 = por %p57, %p58
      %p61 = scmp.ne.s32.totalorder %s46, %s60
      %p62 = scmp.eq.s32.totalorder %s15, 0
      %p63 = por %p61, %p62
      %s65 = sadd.s32 %s64, 1
      %p68 = scmp.eq.s32.totalorder %s9, 3
      %p69 = scmp.ne.s32.totalorder %s64, %s66
      %p70 = scmp.eq.s32.totalorder %s9, 0
      %p71 = por %p69, %p70
      %p72 = scmp.ne.s32.totalorder %s64, %s66
      %p73 = scmp.eq.s32.totalorder %s14, 3
      %p74 = por %p72, %p73
      %p75 = scmp.ne.s32.totalorder %s66, %s67
      %p76 = scmp.eq.s32.totalorder %s14, 0
      %p77 = por %p75, %p76
      %p78 = scmp.ne.s32.totalorder %s66, %s67
      %p79 = scmp.eq.s32.totalorder %s15, 3
      %p80 = por %p78, %p79
      %p82 = scmp.ne.s32.totalorder %s67, %s81
      %p83 = scmp.eq.s32.totalorder %s15, 0
      %p84 = por %p82, %p83
      %s85 = ssub.s32 %s9, %s16
      %p86 = scmp.eq.s32.totalorder %s85, 0
      %s88 = sadd.s32 %s87, 1
      %s89 = scalar_select %p86, %s87, %s88
      %p92 = pneg %p86
      %p93 = scmp.eq.s32.totalorder %s9, 3
      %p94 = por %p92, %p93
      %p95 = scmp.ne.s32.totalorder %s87, %s90
      %p96 = scmp.eq.s32.totalorder %s9, 0
      %p97 = por %p95, %p96
      %p98 = scmp.ne.s32.totalorder %s87, %s90
      %p99 = scmp.eq.s32.totalorder %s14, 3
      %p100 = por %p98, %p99
      %p101 = scmp.ne.s32.totalorder %s90, %s91
      %p102 = scmp.eq.s32.totalorder %s14, 0
      %p103 = por %p101, %p102
      %p104 = scmp.ne.s32.totalorder %s90, %s91
      %p105 = scmp.eq.s32.totalorder %s15, 3
      %p106 = por %p104, %p105
      %p108 = scmp.ne.s32.totalorder %s91, %s107
      %p109 = scmp.eq.s32.totalorder %s15, 0
      %p110 = por %p108, %p109
      %p111 = scmp.le.s32.totalorder 1, %s9
      %p112 = scmp.lt.s32.totalorder %s9, 5
      %p113 = pnand %p111, %p112
      %p114 = pneg %p113
      // Predicated region
      $region9: #{cnn_quantize_forward.7} parent=5 // pred_check
        _
      $region10: #{cnn_quantize_forward.7} parent=5 // pred_check_branch
        %116 = sbr.rel (%p113) target = $region12
      $region11: #{cnn_quantize_forward.7} parent=5 // pred_region
        %s117 = ssub.s32 %s9, 1
        // Predicated region
        $region13: #{cnn_quantize_forward.7} parent=11 // pred_check
          %p118 = pneg %p56
        $region14: #{cnn_quantize_forward.7} parent=11 // pred_check_branch
          %120 = sbr.rel (%p118) target = $region16
        $region15: #{cnn_quantize_forward.7} parent=11 // pred_region
          _
        $region16: #{cnn_quantize_forward.7} parent=11 // pred_fallthru
          _
        // Predicated region
        $region17: #{cnn_quantize_forward.7} parent=11 // pred_check
          %p121 = pneg %p77
        $region18: #{cnn_quantize_forward.7} parent=11 // pred_check_branch
          %123 = sbr.rel (%p121) target = $region20
        $region19: #{cnn_quantize_forward.7} parent=11 // pred_region
          _
        $region20: #{cnn_quantize_forward.7} parent=11 // pred_fallthru
          _
      $region12: #{cnn_quantize_forward.7} parent=5 // pred_fallthru
        _
      %p124 = scmp.lt.s32.totalorder %s9, 4
      // Predicated region
      $region21: #{cnn_quantize_forward.7} parent=5 // pred_check
        %p125 = pneg %p124
      $region22: #{cnn_quantize_forward.7} parent=5 // pred_check_branch
        %127 = sbr.rel (%p125) target = $region24
      $region23: #{cnn_quantize_forward.7} parent=5 // pred_region
        // Predicated region
        $region25: #{cnn_quantize_forward.7} parent=23 // pred_check
          %p128 = pneg %p29
        $region26: #{cnn_quantize_forward.7} parent=23 // pred_check_branch
          %130 = sbr.rel (%p128) target = $region28
        $region27: #{cnn_quantize_forward.7} parent=23 // pred_region
          %s131 = smul.u32 32, %s9
          %s132 = ssub.s32 100, %s131
          %p133 = scmp.lt.s32.totalorder %s132, 32
          %s134 = scalar_select %p133, %s132, 32
          %s135 = smul.u32 8, %s134
          %s136 = smul.u32 %s135, 7
          %p137 = scmp.lt.s32.totalorder %s131, 99
          %s138 = scalar_select %p137, %s131, 99
          %s139 = smul.addr %s138, 7
          %s140 = smul.addr %s139, 8
          %s141 = scalar_lea.vmem %s0, %s140
          %s142 = smul.u32 32, %s9
          %s143 = ssub.s32 100, %s142
          %p144 = scmp.lt.s32.totalorder %s143, 32
          %s145 = scalar_select %p144, %s143, 32
          %s146 = smul.u32 8, %s145
          %s147 = smul.u32 %s146, 7
        $region28: #{cnn_quantize_forward.7} parent=23 // pred_fallthru
          _
      $region24: #{cnn_quantize_forward.7} parent=5 // pred_fallthru
        _
      %p148 = scmp.le.s32.totalorder 1, %s9
      %p149 = scmp.lt.s32.totalorder %s9, 5
      %p150 = pnand %p148, %p149
      %p151 = pneg %p150
      // Predicated region
      $region29: #{cnn_quantize_forward.7} parent=5 // pred_check
        _
      $region30: #{cnn_quantize_forward.7} parent=5 // pred_check_branch
        %153 = sbr.rel (%p150) target = $region32
      $region31: #{cnn_quantize_forward.7} parent=5 // pred_region
        %s154 = ssub.s32 %s9, 1
        %s155 = smul.u32 32, %s14
        %s156 = ssub.s32 100, %s155
        %p157 = scmp.lt.s32.totalorder %s156, 32
        %s158 = scalar_select %p157, %s156, 32
        %s159 = smul.u32 8, %s158
        %s160 = smul.u32 %s159, 7
        %p161 = scmp.lt.s32.totalorder %s155, 99
        %s162 = scalar_select %p161, %s155, 99
        %s163 = smul.addr %s162, 7
        %s164 = smul.addr %s163, 8
        %s165 = scalar_lea.vmem %s0, %s164
        %p166 = pneg %p35
        %p167 = pneg %p32
        %p168 = pneg %p56
        %p169 = pneg %p53
        %p170 = pneg %p77
        %p171 = pneg %p74
        %p172 = pneg %p103
        %p173 = pneg %p100
        %s174 = sand.u32 %s90, 1
        %s175 = sand.u32 %s90, 1
        %s176 = smul.addr %s175, 256
        %s177 = scalar_lea.vmem [#allocation2], %s176
        %s178 = smul.u32 32, %s14
        %s179 = ssub.s32 100, %s178
        %p180 = scmp.lt.s32.totalorder %s179, 32
        %s181 = scalar_select %p180, %s179, 32
        %s182 = smul.u32 8, %s181
        %s183 = smul.u32 %s182, 7
        %p184 = scmp.lt.s32.totalorder %s178, 99
        %s185 = scalar_select %p184, %s178, 99
        %s186 = smul.addr %s185, 7
        %s187 = smul.addr %s186, 8
        %s188 = scalar_lea.vmem %s0, %s187
        %s189 = smul.u32 32, %s14
        %s190 = ssub.s32 100, %s189
        %p191 = scmp.lt.s32.totalorder %s190, 32
        %s192 = scalar_select %p191, %s190, 32
        %s193 = smul.u32 8, %s192
        %s194 = smul.u32 %s193, 7
        %s195 = smul.u32 32, %s14
        %s196 = ssub.s32 100, %s195
        %p197 = scmp.lt.s32.totalorder %s196, 32
        %s198 = scalar_select %p197, %s196, 32
        %s199 = smul.u32 8, %s198
        %v200 = vld [vmem:[%s188] sm:$0xff]
        %v201 = vld [vmem:[%s188 + $0x8] sm:$0xff]
        %v202 = vld [vmem:[%s188 + $0x10] sm:$0xff]
        %v203 = vld [vmem:[%s188 + $0x18] sm:$0xff]
        %v204 = vld [vmem:[%s188 + $0x20] sm:$0xff]
        %v205 = vld [vmem:[%s188 + $0x28] sm:$0xff]
        %v206 = vld [vmem:[%s188 + $0x30] sm:$0xff]
        %v207 = vld [vmem:[%s188 + $0x38] sm:$0xff]
        %v208 = vld [vmem:[%s188 + $0x40] sm:$0xff]
        %v209 = vld [vmem:[%s188 + $0x48] sm:$0xff]
        %v210 = vld [vmem:[%s188 + $0x50] sm:$0xff]
        %v211 = vld [vmem:[%s188 + $0x58] sm:$0xff]
        %v212 = vld [vmem:[%s188 + $0x60] sm:$0xff]
        %v213 = vld [vmem:[%s188 + $0x68] sm:$0xff]
        %v214 = vld [vmem:[%s188 + $0x70] sm:$0xff]
        %v215 = vld [vmem:[%s188 + $0x78] sm:$0xff]
        %v216 = vld [vmem:[%s188 + $0x80] sm:$0xff]
        %v217 = vld [vmem:[%s188 + $0x88] sm:$0xff]
        %v218 = vld [vmem:[%s188 + $0x90] sm:$0xff]
        %v219 = vld [vmem:[%s188 + $0x98] sm:$0xff]
        %v220 = vld [vmem:[%s188 + $0xa0] sm:$0xff]
        %v221 = vld [vmem:[%s188 + $0xa8] sm:$0xff]
        %v222 = vld [vmem:[%s188 + $0xb0] sm:$0xff]
        %v223 = vld [vmem:[%s188 + $0xb8] sm:$0xff]
        %v224 = vld [vmem:[%s188 + $0xc0] sm:$0xff]
        %v225 = vld [vmem:[%s188 + $0xc8] sm:$0xff]
        %v226 = vld [vmem:[%s188 + $0xd0] sm:$0xff]
        %v227 = vld [vmem:[%s188 + $0xd8] sm:$0xff]
        %v228 = vld [vmem:[%s188 + $0xe0] sm:$0xff]
        %v229 = vld [vmem:[%s188 + $0xe8] sm:$0xff]
        %v230 = vld [vmem:[%s188 + $0xf0] sm:$0xff]
        %v231 = vld [vmem:[%s188 + $0xf8] sm:$0xff]
        %v232 = vld [vmem:[%s188 + $0x100] sm:$0xff]
        %v233 = vld [vmem:[%s188 + $0x108] sm:$0xff]
        %v234 = vld [vmem:[%s188 + $0x110] sm:$0xff]
        %v235 = vld [vmem:[%s188 + $0x118] sm:$0xff]
        %v236 = vld [vmem:[%s188 + $0x120] sm:$0xff]
        %v237 = vld [vmem:[%s188 + $0x128] sm:$0xff]
        %v238 = vld [vmem:[%s188 + $0x130] sm:$0xff]
        %v239 = vld [vmem:[%s188 + $0x138] sm:$0xff]
        %v240 = vld [vmem:[%s188 + $0x140] sm:$0xff]
        %v241 = vld [vmem:[%s188 + $0x148] sm:$0xff]
        %v242 = vld [vmem:[%s188 + $0x150] sm:$0xff]
        %v243 = vld [vmem:[%s188 + $0x158] sm:$0xff]
        %v244 = vld [vmem:[%s188 + $0x160] sm:$0xff]
        %v245 = vld [vmem:[%s188 + $0x168] sm:$0xff]
        %v246 = vld [vmem:[%s188 + $0x170] sm:$0xff]
        %v247 = vld [vmem:[%s188 + $0x178] sm:$0xff]
        %v248 = vld [vmem:[%s188 + $0x180] sm:$0xff]
        %v249 = vld [vmem:[%s188 + $0x188] sm:$0xff]
        %v250 = vld [vmem:[%s188 + $0x190] sm:$0xff]
        %v251 = vld [vmem:[%s188 + $0x198] sm:$0xff]
        %v252 = vld [vmem:[%s188 + $0x1a0] sm:$0xff]
        %v253 = vld [vmem:[%s188 + $0x1a8] sm:$0xff]
        %v254 = vld [vmem:[%s188 + $0x1b0] sm:$0xff]
        %v255 = vld [vmem:[%s188 + $0x1b8] sm:$0xff]
        %v256 = vld [vmem:[%s188 + $0x1c0] sm:$0xff]
        %v257 = vld [vmem:[%s188 + $0x1c8] sm:$0xff]
        %v258 = vld [vmem:[%s188 + $0x1d0] sm:$0xff]
        %v259 = vld [vmem:[%s188 + $0x1d8] sm:$0xff]
        %v260 = vld [vmem:[%s188 + $0x1e0] sm:$0xff]
        %v261 = vld [vmem:[%s188 + $0x1e8] sm:$0xff]
        %v262 = vld [vmem:[%s188 + $0x1f0] sm:$0xff]
        %v263 = vld [vmem:[%s188 + $0x1f8] sm:$0xff]
        %v264 = vld [vmem:[%s188 + $0x200] sm:$0xff]
        %v265 = vld [vmem:[%s188 + $0x208] sm:$0xff]
        %v266 = vld [vmem:[%s188 + $0x210] sm:$0xff]
        %v267 = vld [vmem:[%s188 + $0x218] sm:$0xff]
        %v268 = vld [vmem:[%s188 + $0x220] sm:$0xff]
        %v269 = vld [vmem:[%s188 + $0x228] sm:$0xff]
        %v270 = vld [vmem:[%s188 + $0x230] sm:$0xff]
        %v271 = vld [vmem:[%s188 + $0x238] sm:$0xff]
        %v272 = vld [vmem:[%s188 + $0x240] sm:$0xff]
        %v273 = vld [vmem:[%s188 + $0x248] sm:$0xff]
        %v274 = vld [vmem:[%s188 + $0x250] sm:$0xff]
        %v275 = vld [vmem:[%s188 + $0x258] sm:$0xff]
        %v276 = vld [vmem:[%s188 + $0x260] sm:$0xff]
        %v277 = vld [vmem:[%s188 + $0x268] sm:$0xff]
        %v278 = vld [vmem:[%s188 + $0x270] sm:$0xff]
        %v279 = vld [vmem:[%s188 + $0x278] sm:$0xff]
        %v280 = vld [vmem:[%s188 + $0x280] sm:$0xff]
        %v281 = vld [vmem:[%s188 + $0x288] sm:$0xff]
        %v282 = vld [vmem:[%s188 + $0x290] sm:$0xff]
        %v283 = vld [vmem:[%s188 + $0x298] sm:$0xff]
        %v284 = vld [vmem:[%s188 + $0x2a0] sm:$0xff]
        %v285 = vld [vmem:[%s188 + $0x2a8] sm:$0xff]
        %v286 = vld [vmem:[%s188 + $0x2b0] sm:$0xff]
        %v287 = vld [vmem:[%s188 + $0x2b8] sm:$0xff]
        %v288 = vld [vmem:[%s188 + $0x2c0] sm:$0xff]
        %v289 = vld [vmem:[%s188 + $0x2c8] sm:$0xff]
        %v290 = vld [vmem:[%s188 + $0x2d0] sm:$0xff]
        %v291 = vld [vmem:[%s188 + $0x2d8] sm:$0xff]
        %v292 = vld [vmem:[%s188 + $0x2e0] sm:$0xff]
        %v293 = vld [vmem:[%s188 + $0x2e8] sm:$0xff]
        %v294 = vld [vmem:[%s188 + $0x2f0] sm:$0xff]
        %v295 = vld [vmem:[%s188 + $0x2f8] sm:$0xff]
        %v296 = vld [vmem:[%s188 + $0x300] sm:$0xff]
        %v297 = vld [vmem:[%s188 + $0x308] sm:$0xff]
        %v298 = vld [vmem:[%s188 + $0x310] sm:$0xff]
        %v299 = vld [vmem:[%s188 + $0x318] sm:$0xff]
        %v300 = vld [vmem:[%s188 + $0x320] sm:$0xff]
        %v301 = vld [vmem:[%s188 + $0x328] sm:$0xff]
        %v302 = vld [vmem:[%s188 + $0x330] sm:$0xff]
        %v303 = vld [vmem:[%s188 + $0x338] sm:$0xff]
        %v304 = vld [vmem:[%s188 + $0x340] sm:$0xff]
        %v305 = vld [vmem:[%s188 + $0x348] sm:$0xff]
        %v306 = vld [vmem:[%s188 + $0x350] sm:$0xff]
        %v307 = vld [vmem:[%s188 + $0x358] sm:$0xff]
        %v308 = vld [vmem:[%s188 + $0x360] sm:$0xff]
        %v309 = vld [vmem:[%s188 + $0x368] sm:$0xff]
        %v310 = vld [vmem:[%s188 + $0x370] sm:$0xff]
        %v311 = vld [vmem:[%s188 + $0x378] sm:$0xff]
        %v312 = vld [vmem:[%s188 + $0x380] sm:$0xff]
        %v313 = vld [vmem:[%s188 + $0x388] sm:$0xff]
        %v314 = vld [vmem:[%s188 + $0x390] sm:$0xff]
        %v315 = vld [vmem:[%s188 + $0x398] sm:$0xff]
        %v316 = vld [vmem:[%s188 + $0x3a0] sm:$0xff]
        %v317 = vld [vmem:[%s188 + $0x3a8] sm:$0xff]
        %v318 = vld [vmem:[%s188 + $0x3b0] sm:$0xff]
        %v319 = vld [vmem:[%s188 + $0x3b8] sm:$0xff]
        %v320 = vld [vmem:[%s188 + $0x3c0] sm:$0xff]
        %v321 = vld [vmem:[%s188 + $0x3c8] sm:$0xff]
        %v322 = vld [vmem:[%s188 + $0x3d0] sm:$0xff]
        %v323 = vld [vmem:[%s188 + $0x3d8] sm:$0xff]
        %v324 = vld [vmem:[%s188 + $0x3e0] sm:$0xff]
        %v325 = vld [vmem:[%s188 + $0x3e8] sm:$0xff]
        %v326 = vld [vmem:[%s188 + $0x3f0] sm:$0xff]
        %v327 = vld [vmem:[%s188 + $0x3f8] sm:$0xff]
        %v328 = vld [vmem:[%s188 + $0x400] sm:$0xff]
        %v329 = vld [vmem:[%s188 + $0x408] sm:$0xff]
        %v330 = vld [vmem:[%s188 + $0x410] sm:$0xff]
        %v331 = vld [vmem:[%s188 + $0x418] sm:$0xff]
        %v332 = vld [vmem:[%s188 + $0x420] sm:$0xff]
        %v333 = vld [vmem:[%s188 + $0x428] sm:$0xff]
        %v334 = vld [vmem:[%s188 + $0x430] sm:$0xff]
        %v335 = vld [vmem:[%s188 + $0x438] sm:$0xff]
        %v336 = vld [vmem:[%s188 + $0x440] sm:$0xff]
        %v337 = vld [vmem:[%s188 + $0x448] sm:$0xff]
        %v338 = vld [vmem:[%s188 + $0x450] sm:$0xff]
        %v339 = vld [vmem:[%s188 + $0x458] sm:$0xff]
        %v340 = vld [vmem:[%s188 + $0x460] sm:$0xff]
        %v341 = vld [vmem:[%s188 + $0x468] sm:$0xff]
        %v342 = vld [vmem:[%s188 + $0x470] sm:$0xff]
        %v343 = vld [vmem:[%s188 + $0x478] sm:$0xff]
        %v344 = vld [vmem:[%s188 + $0x480] sm:$0xff]
        %v345 = vld [vmem:[%s188 + $0x488] sm:$0xff]
        %v346 = vld [vmem:[%s188 + $0x490] sm:$0xff]
        %v347 = vld [vmem:[%s188 + $0x498] sm:$0xff]
        %v348 = vld [vmem:[%s188 + $0x4a0] sm:$0xff]
        %v349 = vld [vmem:[%s188 + $0x4a8] sm:$0xff]
        %v350 = vld [vmem:[%s188 + $0x4b0] sm:$0xff]
        %v351 = vld [vmem:[%s188 + $0x4b8] sm:$0xff]
        %v352 = vld [vmem:[%s188 + $0x4c0] sm:$0xff]
        %v353 = vld [vmem:[%s188 + $0x4c8] sm:$0xff]
        %v354 = vld [vmem:[%s188 + $0x4d0] sm:$0xff]
        %v355 = vld [vmem:[%s188 + $0x4d8] sm:$0xff]
        %v356 = vld [vmem:[%s188 + $0x4e0] sm:$0xff]
        %v357 = vld [vmem:[%s188 + $0x4e8] sm:$0xff]
        %v358 = vld [vmem:[%s188 + $0x4f0] sm:$0xff]
        %v359 = vld [vmem:[%s188 + $0x4f8] sm:$0xff]
        %v360 = vld [vmem:[%s188 + $0x500] sm:$0xff]
        %v361 = vld [vmem:[%s188 + $0x508] sm:$0xff]
        %v362 = vld [vmem:[%s188 + $0x510] sm:$0xff]
        %v363 = vld [vmem:[%s188 + $0x518] sm:$0xff]
        %v364 = vld [vmem:[%s188 + $0x520] sm:$0xff]
        %v365 = vld [vmem:[%s188 + $0x528] sm:$0xff]
        %v366 = vld [vmem:[%s188 + $0x530] sm:$0xff]
        %v367 = vld [vmem:[%s188 + $0x538] sm:$0xff]
        %v368 = vld [vmem:[%s188 + $0x540] sm:$0xff]
        %v369 = vld [vmem:[%s188 + $0x548] sm:$0xff]
        %v370 = vld [vmem:[%s188 + $0x550] sm:$0xff]
        %v371 = vld [vmem:[%s188 + $0x558] sm:$0xff]
        %v372 = vld [vmem:[%s188 + $0x560] sm:$0xff]
        %v373 = vld [vmem:[%s188 + $0x568] sm:$0xff]
        %v374 = vld [vmem:[%s188 + $0x570] sm:$0xff]
        %v375 = vld [vmem:[%s188 + $0x578] sm:$0xff]
        %v376 = vld [vmem:[%s188 + $0x580] sm:$0xff]
        %v377 = vld [vmem:[%s188 + $0x588] sm:$0xff]
        %v378 = vld [vmem:[%s188 + $0x590] sm:$0xff]
        %v379 = vld [vmem:[%s188 + $0x598] sm:$0xff]
        %v380 = vld [vmem:[%s188 + $0x5a0] sm:$0xff]
        %v381 = vld [vmem:[%s188 + $0x5a8] sm:$0xff]
        %v382 = vld [vmem:[%s188 + $0x5b0] sm:$0xff]
        %v383 = vld [vmem:[%s188 + $0x5b8] sm:$0xff]
        %v384 = vld [vmem:[%s188 + $0x5c0] sm:$0xff]
        %v385 = vld [vmem:[%s188 + $0x5c8] sm:$0xff]
        %v386 = vld [vmem:[%s188 + $0x5d0] sm:$0xff]
        %v387 = vld [vmem:[%s188 + $0x5d8] sm:$0xff]
        %v388 = vld [vmem:[%s188 + $0x5e0] sm:$0xff]
        %v389 = vld [vmem:[%s188 + $0x5e8] sm:$0xff]
        %v390 = vld [vmem:[%s188 + $0x5f0] sm:$0xff]
        %v391 = vld [vmem:[%s188 + $0x5f8] sm:$0xff]
        %v392 = vld [vmem:[%s188 + $0x600] sm:$0xff]
        %v393 = vld [vmem:[%s188 + $0x608] sm:$0xff]
        %v394 = vld [vmem:[%s188 + $0x610] sm:$0xff]
        %v395 = vld [vmem:[%s188 + $0x618] sm:$0xff]
        %v396 = vld [vmem:[%s188 + $0x620] sm:$0xff]
        %v397 = vld [vmem:[%s188 + $0x628] sm:$0xff]
        %v398 = vld [vmem:[%s188 + $0x630] sm:$0xff]
        %v399 = vld [vmem:[%s188 + $0x638] sm:$0xff]
        %v400 = vld [vmem:[%s188 + $0x640] sm:$0xff]
        %v401 = vld [vmem:[%s188 + $0x648] sm:$0xff]
        %v402 = vld [vmem:[%s188 + $0x650] sm:$0xff]
        %v403 = vld [vmem:[%s188 + $0x658] sm:$0xff]
        %v404 = vld [vmem:[%s188 + $0x660] sm:$0xff]
        %v405 = vld [vmem:[%s188 + $0x668] sm:$0xff]
        %v406 = vld [vmem:[%s188 + $0x670] sm:$0xff]
        %v407 = vld [vmem:[%s188 + $0x678] sm:$0xff]
        %v408 = vld [vmem:[%s188 + $0x680] sm:$0xff]
        %v409 = vld [vmem:[%s188 + $0x688] sm:$0xff]
        %v410 = vld [vmem:[%s188 + $0x690] sm:$0xff]
        %v411 = vld [vmem:[%s188 + $0x698] sm:$0xff]
        %v412 = vld [vmem:[%s188 + $0x6a0] sm:$0xff]
        %v413 = vld [vmem:[%s188 + $0x6a8] sm:$0xff]
        %v414 = vld [vmem:[%s188 + $0x6b0] sm:$0xff]
        %v415 = vld [vmem:[%s188 + $0x6b8] sm:$0xff]
        %v416 = vld [vmem:[%s188 + $0x6c0] sm:$0xff]
        %v417 = vld [vmem:[%s188 + $0x6c8] sm:$0xff]
        %v418 = vld [vmem:[%s188 + $0x6d0] sm:$0xff]
        %v419 = vld [vmem:[%s188 + $0x6d8] sm:$0xff]
        %v420 = vld [vmem:[%s188 + $0x6e0] sm:$0xff]
        %v421 = vld [vmem:[%s188 + $0x6e8] sm:$0xff]
        %v422 = vld [vmem:[%s188 + $0x6f0] sm:$0xff]
        %v423 = vld [vmem:[%s188 + $0x6f8] sm:$0xff]
        %v424 = vld [vmem:[%s1] sm:$0xff]
        %v425 = vld [vmem:[%s1 + $0x8] sm:$0xff]
        %v426 = vld [vmem:[%s1 + $0x10] sm:$0xff]
        %v427 = vld [vmem:[%s1 + $0x18] sm:$0xff]
        %v428 = vld [vmem:[%s1 + $0x20] sm:$0xff]
        %v429 = vld [vmem:[%s1 + $0x28] sm:$0xff]
        %v430 = vld [vmem:[%s1 + $0x30] sm:$0xff]
        %v431 = vld [vmem:[%s1 + $0x38] sm:$0xff]
        %v432 = vld [vmem:[%s1 + $0x40] sm:$0xff]
        %v433 = vld [vmem:[%s1 + $0x48] sm:$0xff]
        %v434 = vld [vmem:[%s1 + $0x50] sm:$0xff]
        %v435 = vld [vmem:[%s1 + $0x58] sm:$0xff]
        %v436 = vld [vmem:[%s1 + $0x60] sm:$0xff]
        %v437 = vld [vmem:[%s1 + $0x68] sm:$0xff]
        %v438 = vld [vmem:[%s1 + $0x70] sm:$0xff]
        %v439 = vld [vmem:[%s1 + $0x78] sm:$0xff]
        %v440 = vld [vmem:[%s1 + $0x80] sm:$0xff]
        %v441 = vld [vmem:[%s1 + $0x88] sm:$0xff]
        %v442 = vld [vmem:[%s1 + $0x90] sm:$0xff]
        %v443 = vld [vmem:[%s1 + $0x98] sm:$0xff]
        %v444 = vld [vmem:[%s1 + $0xa0] sm:$0xff]
        %v445 = vld [vmem:[%s1 + $0xa8] sm:$0xff]
        %v446 = vld [vmem:[%s1 + $0xb0] sm:$0xff]
        %v447 = vld [vmem:[%s1 + $0xb8] sm:$0xff]
        %v448 = vld [vmem:[%s1 + $0xc0] sm:$0xff]
        %v449 = vld [vmem:[%s1 + $0xc8] sm:$0xff]
        %v450 = vld [vmem:[%s1 + $0xd0] sm:$0xff]
        %v451 = vld [vmem:[%s1 + $0xd8] sm:$0xff]
        %v452 = vld [vmem:[%s1 + $0xe0] sm:$0xff]
        %v453 = vld [vmem:[%s1 + $0xe8] sm:$0xff]
        %v454 = vld [vmem:[%s1 + $0xf0] sm:$0xff]
        %v455 = vld [vmem:[%s1 + $0xf8] sm:$0xff]
        %v456 = vld [vmem:[%s1 + $0x100] sm:$0xff]
        %v457 = vld [vmem:[%s1 + $0x108] sm:$0xff]
        %v458 = vld [vmem:[%s1 + $0x110] sm:$0xff]
        %v459 = vld [vmem:[%s1 + $0x118] sm:$0xff]
        %v460 = vld [vmem:[%s1 + $0x120] sm:$0xff]
        %v461 = vld [vmem:[%s1 + $0x128] sm:$0xff]
        %v462 = vld [vmem:[%s1 + $0x130] sm:$0xff]
        %v463 = vld [vmem:[%s1 + $0x138] sm:$0xff]
        %v464 = vld [vmem:[%s1 + $0x140] sm:$0xff]
        %v465 = vld [vmem:[%s1 + $0x148] sm:$0xff]
        %v466 = vld [vmem:[%s1 + $0x150] sm:$0xff]
        %v467 = vld [vmem:[%s1 + $0x158] sm:$0xff]
        %v468 = vld [vmem:[%s1 + $0x160] sm:$0xff]
        %v469 = vld [vmem:[%s1 + $0x168] sm:$0xff]
        %v470 = vld [vmem:[%s1 + $0x170] sm:$0xff]
        %v471 = vld [vmem:[%s1 + $0x178] sm:$0xff]
        %v472 = vld [vmem:[%s1 + $0x180] sm:$0xff]
        %v473 = vld [vmem:[%s1 + $0x188] sm:$0xff]
        %v474 = vld [vmem:[%s1 + $0x190] sm:$0xff]
        %v475 = vld [vmem:[%s1 + $0x198] sm:$0xff]
        %v476 = vld [vmem:[%s1 + $0x1a0] sm:$0xff]
        %v477 = vld [vmem:[%s1 + $0x1a8] sm:$0xff]
        %v478 = vld [vmem:[%s1 + $0x1b0] sm:$0xff]
        %v479 = vld [vmem:[%s1 + $0x1b8] sm:$0xff]
        %v480 = vld [vmem:[%s1 + $0x1c0] sm:$0xff]
        %v481 = vld [vmem:[%s1 + $0x1c8] sm:$0xff]
        %v482 = vld [vmem:[%s1 + $0x1d0] sm:$0xff]
        %v483 = vld [vmem:[%s1 + $0x1d8] sm:$0xff]
        %v484 = vld [vmem:[%s1 + $0x1e0] sm:$0xff]
        %v485 = vld [vmem:[%s1 + $0x1e8] sm:$0xff]
        %v486 = vld [vmem:[%s1 + $0x1f0] sm:$0xff]
        %v487 = vld [vmem:[%s1 + $0x1f8] sm:$0xff]
        %v488 = vld [vmem:[%s1 + $0x200] sm:$0xff]
        %v489 = vld [vmem:[%s1 + $0x208] sm:$0xff]
        %v490 = vld [vmem:[%s1 + $0x210] sm:$0xff]
        %v491 = vld [vmem:[%s1 + $0x218] sm:$0xff]
        %v492 = vld [vmem:[%s1 + $0x220] sm:$0xff]
        %v493 = vld [vmem:[%s1 + $0x228] sm:$0xff]
        %v494 = vld [vmem:[%s1 + $0x230] sm:$0xff]
        %v495 = vld [vmem:[%s1 + $0x238] sm:$0xff]
        %v496 = vld [vmem:[%s1 + $0x240] sm:$0xff]
        %v497 = vld [vmem:[%s1 + $0x248] sm:$0xff]
        %v498 = vld [vmem:[%s1 + $0x250] sm:$0xff]
        %v499 = vld [vmem:[%s1 + $0x258] sm:$0xff]
        %v500 = vld [vmem:[%s1 + $0x260] sm:$0xff]
        %v501 = vld [vmem:[%s1 + $0x268] sm:$0xff]
        %v502 = vld [vmem:[%s1 + $0x270] sm:$0xff]
        %v503 = vld [vmem:[%s1 + $0x278] sm:$0xff]
        %v504 = vld [vmem:[%s1 + $0x280] sm:$0xff]
        %v505 = vld [vmem:[%s1 + $0x288] sm:$0xff]
        %v506 = vld [vmem:[%s1 + $0x290] sm:$0xff]
        %v507 = vld [vmem:[%s1 + $0x298] sm:$0xff]
        %v508 = vld [vmem:[%s1 + $0x2a0] sm:$0xff]
        %v509 = vld [vmem:[%s1 + $0x2a8] sm:$0xff]
        %v510 = vld [vmem:[%s1 + $0x2b0] sm:$0xff]
        %v511 = vld [vmem:[%s1 + $0x2b8] sm:$0xff]
        %v512 = vld [vmem:[%s1 + $0x2c0] sm:$0xff]
        %v513 = vld [vmem:[%s1 + $0x2c8] sm:$0xff]
        %v514 = vld [vmem:[%s1 + $0x2d0] sm:$0xff]
        %v515 = vld [vmem:[%s1 + $0x2d8] sm:$0xff]
        %v516 = vld [vmem:[%s1 + $0x2e0] sm:$0xff]
        %v517 = vld [vmem:[%s1 + $0x2e8] sm:$0xff]
        %v518 = vld [vmem:[%s1 + $0x2f0] sm:$0xff]
        %v519 = vld [vmem:[%s1 + $0x2f8] sm:$0xff]
        %v520 = vld [vmem:[%s1 + $0x300] sm:$0xff]
        %v521 = vld [vmem:[%s1 + $0x308] sm:$0xff]
        %v522 = vld [vmem:[%s1 + $0x310] sm:$0xff]
        %v523 = vld [vmem:[%s1 + $0x318] sm:$0xff]
        %v524 = vld [vmem:[%s2] sm:$0x1]
        %v526 = vperm.slane %v524, 0
        %vm528 = vcmask 261120
        %v530 = vsel %vm528, %v206, 0
        %v533 = vsel %vm528, %v213, 0
        %v536 = vsel %vm528, %v220, 0
        %v539 = vsel %vm528, %v227, 0
        %v542 = vsel %vm528, %v234, 0
        %v545 = vsel %vm528, %v241, 0
        %v548 = vsel %vm528, %v248, 0
        %v551 = vsel %vm528, %v255, 0
        %v554 = vsel %vm528, %v262, 0
        %v557 = vsel %vm528, %v269, 0
        %v560 = vsel %vm528, %v276, 0
        %v563 = vsel %vm528, %v283, 0
        %v566 = vsel %vm528, %v290, 0
        %v569 = vsel %vm528, %v297, 0
        %v572 = vsel %vm528, %v304, 0
        %v575 = vsel %vm528, %v311, 0
        %v578 = vsel %vm528, %v318, 0
        %v581 = vsel %vm528, %v325, 0
        %v584 = vsel %vm528, %v332, 0
        %v587 = vsel %vm528, %v339, 0
        %v590 = vsel %vm528, %v346, 0
        %v593 = vsel %vm528, %v353, 0
        %v596 = vsel %vm528, %v360, 0
        %v599 = vsel %vm528, %v367, 0
        %v602 = vsel %vm528, %v374, 0
        %v605 = vsel %vm528, %v381, 0
        %v608 = vsel %vm528, %v388, 0
        %v611 = vsel %vm528, %v395, 0
        %v614 = vsel %vm528, %v402, 0
        %v617 = vsel %vm528, %v409, 0
        %v620 = vsel %vm528, %v416, 0
        %v623 = vsel %vm528, %v423, 0
        %625 = vmatpush.msra.mxu0 %v439
        %626 = vmatpush.msra.mxu0 %v438
        %627 = vmatpush.msra.mxu0 %v437
        %628 = vmatpush.msra.mxu0 %v436
        %629 = vmatpush.msra.mxu0 %v435
        %630 = vmatpush.msra.mxu0 %v434
        %631 = vmatpush.msra.mxu0 %v433
        %632 = vmatpush.msra.mxu0 %v432
        %633 = vmatpush.msra.mxu0 %v431
        %634 = vmatpush.msra.mxu0 %v430
        %635 = vmatpush.msra.mxu0 %v429
        %636 = vmatpush.msra.mxu0 %v428
        %637 = vmatpush.msra.mxu0 %v427
        %638 = vmatpush.msra.mxu0 %v426
        %639 = vmatpush.msra.mxu0 %v425
        %640 = vmatpush.msra.mxu0 %v424
        %641 = vmatmul.f32.gmra.mxu0 %v200
        %v642 = vpop.f32.mrf.mxu0
        %v643 = vadd.f32 %v526, %v642
        %644 = vmatmul.f32.gmra.mxu0 %v207
        %v645 = vpop.f32.mrf.mxu0
        %v646 = vadd.f32 %v526, %v645
        %647 = vmatmul.f32.gmra.mxu0 %v214
        %v648 = vpop.f32.mrf.mxu0
        %v649 = vadd.f32 %v526, %v648
        %650 = vmatmul.f32.gmra.mxu0 %v221
        %v651 = vpop.f32.mrf.mxu0
        %v652 = vadd.f32 %v526, %v651
        %653 = vmatmul.f32.gmra.mxu0 %v228
        %v654 = vpop.f32.mrf.mxu0
        %v655 = vadd.f32 %v526, %v654
        %656 = vmatmul.f32.gmra.mxu0 %v235
        %v657 = vpop.f32.mrf.mxu0
        %v658 = vadd.f32 %v526, %v657
        %659 = vmatmul.f32.gmra.mxu0 %v242
        %v660 = vpop.f32.mrf.mxu0
        %v661 = vadd.f32 %v526, %v660
        %662 = vmatmul.f32.gmra.mxu0 %v249
        %v663 = vpop.f32.mrf.mxu0
        %v664 = vadd.f32 %v526, %v663
        %665 = vmatmul.f32.gmra.mxu0 %v256
        %v666 = vpop.f32.mrf.mxu0
        %v667 = vadd.f32 %v526, %v666
        %668 = vmatmul.f32.gmra.mxu0 %v263
        %v669 = vpop.f32.mrf.mxu0
        %v670 = vadd.f32 %v526, %v669
        %671 = vmatmul.f32.gmra.mxu0 %v270
        %v672 = vpop.f32.mrf.mxu0
        %v673 = vadd.f32 %v526, %v672
        %674 = vmatmul.f32.gmra.mxu0 %v277
        %v675 = vpop.f32.mrf.mxu0
        %v676 = vadd.f32 %v526, %v675
        %677 = vmatmul.f32.gmra.mxu0 %v284
        %v678 = vpop.f32.mrf.mxu0
        %v679 = vadd.f32 %v526, %v678
        %680 = vmatmul.f32.gmra.mxu0 %v291
        %v681 = vpop.f32.mrf.mxu0
        %v682 = vadd.f32 %v526, %v681
        %683 = vmatmul.f32.gmra.mxu0 %v298
        %v684 = vpop.f32.mrf.mxu0
        %v685 = vadd.f32 %v526, %v684
        %686 = vmatmul.f32.gmra.mxu0 %v305
        %v687 = vpop.f32.mrf.mxu0
        %v688 = vadd.f32 %v526, %v687
        %689 = vmatmul.f32.gmra.mxu0 %v312
        %v690 = vpop.f32.mrf.mxu0
        %v691 = vadd.f32 %v526, %v690
        %692 = vmatmul.f32.gmra.mxu0 %v319
        %v693 = vpop.f32.mrf.mxu0
        %v694 = vadd.f32 %v526, %v693
        %695 = vmatmul.f32.gmra.mxu0 %v326
        %v696 = vpop.f32.mrf.mxu0
        %v697 = vadd.f32 %v526, %v696
        %698 = vmatmul.f32.gmra.mxu0 %v333
        %v699 = vpop.f32.mrf.mxu0
        %v700 = vadd.f32 %v526, %v699
        %701 = vmatmul.f32.gmra.mxu0 %v340
        %v702 = vpop.f32.mrf.mxu0
        %v703 = vadd.f32 %v526, %v702
        %704 = vmatmul.f32.gmra.mxu0 %v347
        %v705 = vpop.f32.mrf.mxu0
        %v706 = vadd.f32 %v526, %v705
        %707 = vmatmul.f32.gmra.mxu0 %v354
        %v708 = vpop.f32.mrf.mxu0
        %v709 = vadd.f32 %v526, %v708
        %710 = vmatmul.f32.gmra.mxu0 %v361
        %v711 = vpop.f32.mrf.mxu0
        %v712 = vadd.f32 %v526, %v711
        %713 = vmatmul.f32.gmra.mxu0 %v368
        %v714 = vpop.f32.mrf.mxu0
        %v715 = vadd.f32 %v526, %v714
        %716 = vmatmul.f32.gmra.mxu0 %v375
        %v717 = vpop.f32.mrf.mxu0
        %v718 = vadd.f32 %v526, %v717
        %719 = vmatmul.f32.gmra.mxu0 %v382
        %v720 = vpop.f32.mrf.mxu0
        %v721 = vadd.f32 %v526, %v720
        %722 = vmatmul.f32.gmra.mxu0 %v389
        %v723 = vpop.f32.mrf.mxu0
        %v724 = vadd.f32 %v526, %v723
        %725 = vmatmul.f32.gmra.mxu0 %v396
        %v726 = vpop.f32.mrf.mxu0
        %v727 = vadd.f32 %v526, %v726
        %728 = vmatmul.f32.gmra.mxu0 %v403
        %v729 = vpop.f32.mrf.mxu0
        %v730 = vadd.f32 %v526, %v729
        %731 = vmatmul.f32.gmra.mxu0 %v410
        %v732 = vpop.f32.mrf.mxu0
        %v733 = vadd.f32 %v526, %v732
        %734 = vmatmul.f32.gmra.mxu0 %v417
        %v735 = vpop.f32.mrf.mxu0
        %v736 = vadd.f32 %v526, %v735
        %737 = vdwg.mxu0
        %738 = vmatpush.msra.mxu0 %v455
        %739 = vmatpush.msra.mxu0 %v454
        %740 = vmatpush.msra.mxu0 %v453
        %741 = vmatpush.msra.mxu0 %v452
        %742 = vmatpush.msra.mxu0 %v451
        %743 = vmatpush.msra.mxu0 %v450
        %744 = vmatpush.msra.mxu0 %v449
        %745 = vmatpush.msra.mxu0 %v448
        %746 = vmatpush.msra.mxu0 %v447
        %747 = vmatpush.msra.mxu0 %v446
        %748 = vmatpush.msra.mxu0 %v445
        %749 = vmatpush.msra.mxu0 %v444
        %750 = vmatpush.msra.mxu0 %v443
        %751 = vmatpush.msra.mxu0 %v442
        %752 = vmatpush.msra.mxu0 %v441
        %753 = vmatpush.msra.mxu0 %v440
        %754 = vmatmul.f32.gmra.mxu0 %v201
        %v755 = vpop.f32.mrf.mxu0
        %v756 = vadd.f32 %v643, %v755
        %757 = vmatmul.f32.gmra.mxu0 %v208
        %v758 = vpop.f32.mrf.mxu0
        %v759 = vadd.f32 %v646, %v758
        %760 = vmatmul.f32.gmra.mxu0 %v215
        %v761 = vpop.f32.mrf.mxu0
        %v762 = vadd.f32 %v649, %v761
        %763 = vmatmul.f32.gmra.mxu0 %v222
        %v764 = vpop.f32.mrf.mxu0
        %v765 = vadd.f32 %v652, %v764
        %766 = vmatmul.f32.gmra.mxu0 %v229
        %v767 = vpop.f32.mrf.mxu0
        %v768 = vadd.f32 %v655, %v767
        %769 = vmatmul.f32.gmra.mxu0 %v236
        %v770 = vpop.f32.mrf.mxu0
        %v771 = vadd.f32 %v658, %v770
        %772 = vmatmul.f32.gmra.mxu0 %v243
        %v773 = vpop.f32.mrf.mxu0
        %v774 = vadd.f32 %v661, %v773
        %775 = vmatmul.f32.gmra.mxu0 %v250
        %v776 = vpop.f32.mrf.mxu0
        %v777 = vadd.f32 %v664, %v776
        %778 = vmatmul.f32.gmra.mxu0 %v257
        %v779 = vpop.f32.mrf.mxu0
        %v780 = vadd.f32 %v667, %v779
        %781 = vmatmul.f32.gmra.mxu0 %v264
        %v782 = vpop.f32.mrf.mxu0
        %v783 = vadd.f32 %v670, %v782
        %784 = vmatmul.f32.gmra.mxu0 %v271
        %v785 = vpop.f32.mrf.mxu0
        %v786 = vadd.f32 %v673, %v785
        %787 = vmatmul.f32.gmra.mxu0 %v278
        %v788 = vpop.f32.mrf.mxu0
        %v789 = vadd.f32 %v676, %v788
        %790 = vmatmul.f32.gmra.mxu0 %v285
        %v791 = vpop.f32.mrf.mxu0
        %v792 = vadd.f32 %v679, %v791
        %793 = vmatmul.f32.gmra.mxu0 %v292
        %v794 = vpop.f32.mrf.mxu0
        %v795 = vadd.f32 %v682, %v794
        %796 = vmatmul.f32.gmra.mxu0 %v299
        %v797 = vpop.f32.mrf.mxu0
        %v798 = vadd.f32 %v685, %v797
        %799 = vmatmul.f32.gmra.mxu0 %v306
        %v800 = vpop.f32.mrf.mxu0
        %v801 = vadd.f32 %v688, %v800
        %802 = vmatmul.f32.gmra.mxu0 %v313
        %v803 = vpop.f32.mrf.mxu0
        %v804 = vadd.f32 %v691, %v803
        %805 = vmatmul.f32.gmra.mxu0 %v320
        %v806 = vpop.f32.mrf.mxu0
        %v807 = vadd.f32 %v694, %v806
        %808 = vmatmul.f32.gmra.mxu0 %v327
        %v809 = vpop.f32.mrf.mxu0
        %v810 = vadd.f32 %v697, %v809
        %811 = vmatmul.f32.gmra.mxu0 %v334
        %v812 = vpop.f32.mrf.mxu0
        %v813 = vadd.f32 %v700, %v812
        %814 = vmatmul.f32.gmra.mxu0 %v341
        %v815 = vpop.f32.mrf.mxu0
        %v816 = vadd.f32 %v703, %v815
        %817 = vmatmul.f32.gmra.mxu0 %v348
        %v818 = vpop.f32.mrf.mxu0
        %v819 = vadd.f32 %v706, %v818
        %820 = vmatmul.f32.gmra.mxu0 %v355
        %v821 = vpop.f32.mrf.mxu0
        %v822 = vadd.f32 %v709, %v821
        %823 = vmatmul.f32.gmra.mxu0 %v362
        %v824 = vpop.f32.mrf.mxu0
        %v825 = vadd.f32 %v712, %v824
        %826 = vmatmul.f32.gmra.mxu0 %v369
        %v827 = vpop.f32.mrf.mxu0
        %v828 = vadd.f32 %v715, %v827
        %829 = vmatmul.f32.gmra.mxu0 %v376
        %v830 = vpop.f32.mrf.mxu0
        %v831 = vadd.f32 %v718, %v830
        %832 = vmatmul.f32.gmra.mxu0 %v383
        %v833 = vpop.f32.mrf.mxu0
        %v834 = vadd.f32 %v721, %v833
        %835 = vmatmul.f32.gmra.mxu0 %v390
        %v836 = vpop.f32.mrf.mxu0
        %v837 = vadd.f32 %v724, %v836
        %838 = vmatmul.f32.gmra.mxu0 %v397
        %v839 = vpop.f32.mrf.mxu0
        %v840 = vadd.f32 %v727, %v839
        %841 = vmatmul.f32.gmra.mxu0 %v404
        %v842 = vpop.f32.mrf.mxu0
        %v843 = vadd.f32 %v730, %v842
        %844 = vmatmul.f32.gmra.mxu0 %v411
        %v845 = vpop.f32.mrf.mxu0
        %v846 = vadd.f32 %v733, %v845
        %847 = vmatmul.f32.gmra.mxu0 %v418
        %v848 = vpop.f32.mrf.mxu0
        %v849 = vadd.f32 %v736, %v848
        %850 = vdwg.mxu0
        %851 = vmatpush.msra.mxu0 %v471
        %852 = vmatpush.msra.mxu0 %v470
        %853 = vmatpush.msra.mxu0 %v469
        %854 = vmatpush.msra.mxu0 %v468
        %855 = vmatpush.msra.mxu0 %v467
        %856 = vmatpush.msra.mxu0 %v466
        %857 = vmatpush.msra.mxu0 %v465
        %858 = vmatpush.msra.mxu0 %v464
        %859 = vmatpush.msra.mxu0 %v463
        %860 = vmatpush.msra.mxu0 %v462
        %861 = vmatpush.msra.mxu0 %v461
        %862 = vmatpush.msra.mxu0 %v460
        %863 = vmatpush.msra.mxu0 %v459
        %864 = vmatpush.msra.mxu0 %v458
        %865 = vmatpush.msra.mxu0 %v457
        %866 = vmatpush.msra.mxu0 %v456
        %867 = vmatmul.f32.gmra.mxu0 %v202
        %v868 = vpop.f32.mrf.mxu0
        %v869 = vadd.f32 %v756, %v868
        %870 = vmatmul.f32.gmra.mxu0 %v209
        %v871 = vpop.f32.mrf.mxu0
        %v872 = vadd.f32 %v759, %v871
        %873 = vmatmul.f32.gmra.mxu0 %v216
        %v874 = vpop.f32.mrf.mxu0
        %v875 = vadd.f32 %v762, %v874
        %876 = vmatmul.f32.gmra.mxu0 %v223
        %v877 = vpop.f32.mrf.mxu0
        %v878 = vadd.f32 %v765, %v877
        %879 = vmatmul.f32.gmra.mxu0 %v230
        %v880 = vpop.f32.mrf.mxu0
        %v881 = vadd.f32 %v768, %v880
        %882 = vmatmul.f32.gmra.mxu0 %v237
        %v883 = vpop.f32.mrf.mxu0
        %v884 = vadd.f32 %v771, %v883
        %885 = vmatmul.f32.gmra.mxu0 %v244
        %v886 = vpop.f32.mrf.mxu0
        %v887 = vadd.f32 %v774, %v886
        %888 = vmatmul.f32.gmra.mxu0 %v251
        %v889 = vpop.f32.mrf.mxu0
        %v890 = vadd.f32 %v777, %v889
        %891 = vmatmul.f32.gmra.mxu0 %v258
        %v892 = vpop.f32.mrf.mxu0
        %v893 = vadd.f32 %v780, %v892
        %894 = vmatmul.f32.gmra.mxu0 %v265
        %v895 = vpop.f32.mrf.mxu0
        %v896 = vadd.f32 %v783, %v895
        %897 = vmatmul.f32.gmra.mxu0 %v272
        %v898 = vpop.f32.mrf.mxu0
        %v899 = vadd.f32 %v786, %v898
        %900 = vmatmul.f32.gmra.mxu0 %v279
        %v901 = vpop.f32.mrf.mxu0
        %v902 = vadd.f32 %v789, %v901
        %903 = vmatmul.f32.gmra.mxu0 %v286
        %v904 = vpop.f32.mrf.mxu0
        %v905 = vadd.f32 %v792, %v904
        %906 = vmatmul.f32.gmra.mxu0 %v293
        %v907 = vpop.f32.mrf.mxu0
        %v908 = vadd.f32 %v795, %v907
        %909 = vmatmul.f32.gmra.mxu0 %v300
        %v910 = vpop.f32.mrf.mxu0
        %v911 = vadd.f32 %v798, %v910
        %912 = vmatmul.f32.gmra.mxu0 %v307
        %v913 = vpop.f32.mrf.mxu0
        %v914 = vadd.f32 %v801, %v913
        %915 = vmatmul.f32.gmra.mxu0 %v314
        %v916 = vpop.f32.mrf.mxu0
        %v917 = vadd.f32 %v804, %v916
        %918 = vmatmul.f32.gmra.mxu0 %v321
        %v919 = vpop.f32.mrf.mxu0
        %v920 = vadd.f32 %v807, %v919
        %921 = vmatmul.f32.gmra.mxu0 %v328
        %v922 = vpop.f32.mrf.mxu0
        %v923 = vadd.f32 %v810, %v922
        %924 = vmatmul.f32.gmra.mxu0 %v335
        %v925 = vpop.f32.mrf.mxu0
        %v926 = vadd.f32 %v813, %v925
        %927 = vmatmul.f32.gmra.mxu0 %v342
        %v928 = vpop.f32.mrf.mxu0
        %v929 = vadd.f32 %v816, %v928
        %930 = vmatmul.f32.gmra.mxu0 %v349
        %v931 = vpop.f32.mrf.mxu0
        %v932 = vadd.f32 %v819, %v931
        %933 = vmatmul.f32.gmra.mxu0 %v356
        %v934 = vpop.f32.mrf.mxu0
        %v935 = vadd.f32 %v822, %v934
        %936 = vmatmul.f32.gmra.mxu0 %v363
        %v937 = vpop.f32.mrf.mxu0
        %v938 = vadd.f32 %v825, %v937
        %939 = vmatmul.f32.gmra.mxu0 %v370
        %v940 = vpop.f32.mrf.mxu0
        %v941 = vadd.f32 %v828, %v940
        %942 = vmatmul.f32.gmra.mxu0 %v377
        %v943 = vpop.f32.mrf.mxu0
        %v944 = vadd.f32 %v831, %v943
        %945 = vmatmul.f32.gmra.mxu0 %v384
        %v946 = vpop.f32.mrf.mxu0
        %v947 = vadd.f32 %v834, %v946
        %948 = vmatmul.f32.gmra.mxu0 %v391
        %v949 = vpop.f32.mrf.mxu0
        %v950 = vadd.f32 %v837, %v949
        %951 = vmatmul.f32.gmra.mxu0 %v398
        %v952 = vpop.f32.mrf.mxu0
        %v953 = vadd.f32 %v840, %v952
        %954 = vmatmul.f32.gmra.mxu0 %v405
        %v955 = vpop.f32.mrf.mxu0
        %v956 = vadd.f32 %v843, %v955
        %957 = vmatmul.f32.gmra.mxu0 %v412
        %v958 = vpop.f32.mrf.mxu0
        %v959 = vadd.f32 %v846, %v958
        %960 = vmatmul.f32.gmra.mxu0 %v419
        %v961 = vpop.f32.mrf.mxu0
        %v962 = vadd.f32 %v849, %v961
        %963 = vdwg.mxu0
        %964 = vmatpush.msra.mxu0 %v487
        %965 = vmatpush.msra.mxu0 %v486
        %966 = vmatpush.msra.mxu0 %v485
        %967 = vmatpush.msra.mxu0 %v484
        %968 = vmatpush.msra.mxu0 %v483
        %969 = vmatpush.msra.mxu0 %v482
        %970 = vmatpush.msra.mxu0 %v481
        %971 = vmatpush.msra.mxu0 %v480
        %972 = vmatpush.msra.mxu0 %v479
        %973 = vmatpush.msra.mxu0 %v478
        %974 = vmatpush.msra.mxu0 %v477
        %975 = vmatpush.msra.mxu0 %v476
        %976 = vmatpush.msra.mxu0 %v475
        %977 = vmatpush.msra.mxu0 %v474
        %978 = vmatpush.msra.mxu0 %v473
        %979 = vmatpush.msra.mxu0 %v472
        %980 = vmatmul.f32.gmra.mxu0 %v203
        %v981 = vpop.f32.mrf.mxu0
        %v982 = vadd.f32 %v869, %v981
        %983 = vmatmul.f32.gmra.mxu0 %v210
        %v984 = vpop.f32.mrf.mxu0
        %v985 = vadd.f32 %v872, %v984
        %986 = vmatmul.f32.gmra.mxu0 %v217
        %v987 = vpop.f32.mrf.mxu0
        %v988 = vadd.f32 %v875, %v987
        %989 = vmatmul.f32.gmra.mxu0 %v224
        %v990 = vpop.f32.mrf.mxu0
        %v991 = vadd.f32 %v878, %v990
        %992 = vmatmul.f32.gmra.mxu0 %v231
        %v993 = vpop.f32.mrf.mxu0
        %v994 = vadd.f32 %v881, %v993
        %995 = vmatmul.f32.gmra.mxu0 %v238
        %v996 = vpop.f32.mrf.mxu0
        %v997 = vadd.f32 %v884, %v996
        %998 = vmatmul.f32.gmra.mxu0 %v245
        %v999 = vpop.f32.mrf.mxu0
        %v1000 = vadd.f32 %v887, %v999
        %1001 = vmatmul.f32.gmra.mxu0 %v252
        %v1002 = vpop.f32.mrf.mxu0
        %v1003 = vadd.f32 %v890, %v1002
        %1004 = vmatmul.f32.gmra.mxu0 %v259
        %v1005 = vpop.f32.mrf.mxu0
        %v1006 = vadd.f32 %v893, %v1005
        %1007 = vmatmul.f32.gmra.mxu0 %v266
        %v1008 = vpop.f32.mrf.mxu0
        %v1009 = vadd.f32 %v896, %v1008
        %1010 = vmatmul.f32.gmra.mxu0 %v273
        %v1011 = vpop.f32.mrf.mxu0
        %v1012 = vadd.f32 %v899, %v1011
        %1013 = vmatmul.f32.gmra.mxu0 %v280
        %v1014 = vpop.f32.mrf.mxu0
        %v1015 = vadd.f32 %v902, %v1014
        %1016 = vmatmul.f32.gmra.mxu0 %v287
        %v1017 = vpop.f32.mrf.mxu0
        %v1018 = vadd.f32 %v905, %v1017
        %1019 = vmatmul.f32.gmra.mxu0 %v294
        %v1020 = vpop.f32.mrf.mxu0
        %v1021 = vadd.f32 %v908, %v1020
        %1022 = vmatmul.f32.gmra.mxu0 %v301
        %v1023 = vpop.f32.mrf.mxu0
        %v1024 = vadd.f32 %v911, %v1023
        %1025 = vmatmul.f32.gmra.mxu0 %v308
        %v1026 = vpop.f32.mrf.mxu0
        %v1027 = vadd.f32 %v914, %v1026
        %1028 = vmatmul.f32.gmra.mxu0 %v315
        %v1029 = vpop.f32.mrf.mxu0
        %v1030 = vadd.f32 %v917, %v1029
        %1031 = vmatmul.f32.gmra.mxu0 %v322
        %v1032 = vpop.f32.mrf.mxu0
        %v1033 = vadd.f32 %v920, %v1032
        %1034 = vmatmul.f32.gmra.mxu0 %v329
        %v1035 = vpop.f32.mrf.mxu0
        %v1036 = vadd.f32 %v923, %v1035
        %1037 = vmatmul.f32.gmra.mxu0 %v336
        %v1038 = vpop.f32.mrf.mxu0
        %v1039 = vadd.f32 %v926, %v1038
        %1040 = vmatmul.f32.gmra.mxu0 %v343
        %v1041 = vpop.f32.mrf.mxu0
        %v1042 = vadd.f32 %v929, %v1041
        %1043 = vmatmul.f32.gmra.mxu0 %v350
        %v1044 = vpop.f32.mrf.mxu0
        %v1045 = vadd.f32 %v932, %v1044
        %1046 = vmatmul.f32.gmra.mxu0 %v357
        %v1047 = vpop.f32.mrf.mxu0
        %v1048 = vadd.f32 %v935, %v1047
        %1049 = vmatmul.f32.gmra.mxu0 %v364
        %v1050 = vpop.f32.mrf.mxu0
        %v1051 = vadd.f32 %v938, %v1050
        %1052 = vmatmul.f32.gmra.mxu0 %v371
        %v1053 = vpop.f32.mrf.mxu0
        %v1054 = vadd.f32 %v941, %v1053
        %1055 = vmatmul.f32.gmra.mxu0 %v378
        %v1056 = vpop.f32.mrf.mxu0
        %v1057 = vadd.f32 %v944, %v1056
        %1058 = vmatmul.f32.gmra.mxu0 %v385
        %v1059 = vpop.f32.mrf.mxu0
        %v1060 = vadd.f32 %v947, %v1059
        %1061 = vmatmul.f32.gmra.mxu0 %v392
        %v1062 = vpop.f32.mrf.mxu0
        %v1063 = vadd.f32 %v950, %v1062
        %1064 = vmatmul.f32.gmra.mxu0 %v399
        %v1065 = vpop.f32.mrf.mxu0
        %v1066 = vadd.f32 %v953, %v1065
        %1067 = vmatmul.f32.gmra.mxu0 %v406
        %v1068 = vpop.f32.mrf.mxu0
        %v1069 = vadd.f32 %v956, %v1068
        %1070 = vmatmul.f32.gmra.mxu0 %v413
        %v1071 = vpop.f32.mrf.mxu0
        %v1072 = vadd.f32 %v959, %v1071
        %1073 = vmatmul.f32.gmra.mxu0 %v420
        %v1074 = vpop.f32.mrf.mxu0
        %v1075 = vadd.f32 %v962, %v1074
        %1076 = vdwg.mxu0
        %1077 = vmatpush.msra.mxu0 %v503
        %1078 = vmatpush.msra.mxu0 %v502
        %1079 = vmatpush.msra.mxu0 %v501
        %1080 = vmatpush.msra.mxu0 %v500
        %1081 = vmatpush.msra.mxu0 %v499
        %1082 = vmatpush.msra.mxu0 %v498
        %1083 = vmatpush.msra.mxu0 %v497
        %1084 = vmatpush.msra.mxu0 %v496
        %1085 = vmatpush.msra.mxu0 %v495
        %1086 = vmatpush.msra.mxu0 %v494
        %1087 = vmatpush.msra.mxu0 %v493
        %1088 = vmatpush.msra.mxu0 %v492
        %1089 = vmatpush.msra.mxu0 %v491
        %1090 = vmatpush.msra.mxu0 %v490
        %1091 = vmatpush.msra.mxu0 %v489
        %1092 = vmatpush.msra.mxu0 %v488
        %1093 = vmatmul.f32.gmra.mxu0 %v204
        %v1094 = vpop.f32.mrf.mxu0
        %v1095 = vadd.f32 %v982, %v1094
        %1096 = vmatmul.f32.gmra.mxu0 %v211
        %v1097 = vpop.f32.mrf.mxu0
        %v1098 = vadd.f32 %v985, %v1097
        %1099 = vmatmul.f32.gmra.mxu0 %v218
        %v1100 = vpop.f32.mrf.mxu0
        %v1101 = vadd.f32 %v988, %v1100
        %1102 = vmatmul.f32.gmra.mxu0 %v225
        %v1103 = vpop.f32.mrf.mxu0
        %v1104 = vadd.f32 %v991, %v1103
        %1105 = vmatmul.f32.gmra.mxu0 %v232
        %v1106 = vpop.f32.mrf.mxu0
        %v1107 = vadd.f32 %v994, %v1106
        %1108 = vmatmul.f32.gmra.mxu0 %v239
        %v1109 = vpop.f32.mrf.mxu0
        %v1110 = vadd.f32 %v997, %v1109
        %1111 = vmatmul.f32.gmra.mxu0 %v246
        %v1112 = vpop.f32.mrf.mxu0
        %v1113 = vadd.f32 %v1000, %v1112
        %1114 = vmatmul.f32.gmra.mxu0 %v253
        %v1115 = vpop.f32.mrf.mxu0
        %v1116 = vadd.f32 %v1003, %v1115
        %1117 = vmatmul.f32.gmra.mxu0 %v260
        %v1118 = vpop.f32.mrf.mxu0
        %v1119 = vadd.f32 %v1006, %v1118
        %1120 = vmatmul.f32.gmra.mxu0 %v267
        %v1121 = vpop.f32.mrf.mxu0
        %v1122 = vadd.f32 %v1009, %v1121
        %1123 = vmatmul.f32.gmra.mxu0 %v274
        %v1124 = vpop.f32.mrf.mxu0
        %v1125 = vadd.f32 %v1012, %v1124
        %1126 = vmatmul.f32.gmra.mxu0 %v281
        %v1127 = vpop.f32.mrf.mxu0
        %v1128 = vadd.f32 %v1015, %v1127
        %1129 = vmatmul.f32.gmra.mxu0 %v288
        %v1130 = vpop.f32.mrf.mxu0
        %v1131 = vadd.f32 %v1018, %v1130
        %1132 = vmatmul.f32.gmra.mxu0 %v295
        %v1133 = vpop.f32.mrf.mxu0
        %v1134 = vadd.f32 %v1021, %v1133
        %1135 = vmatmul.f32.gmra.mxu0 %v302
        %v1136 = vpop.f32.mrf.mxu0
        %v1137 = vadd.f32 %v1024, %v1136
        %1138 = vmatmul.f32.gmra.mxu0 %v309
        %v1139 = vpop.f32.mrf.mxu0
        %v1140 = vadd.f32 %v1027, %v1139
        %1141 = vmatmul.f32.gmra.mxu0 %v316
        %v1142 = vpop.f32.mrf.mxu0
        %v1143 = vadd.f32 %v1030, %v1142
        %1144 = vmatmul.f32.gmra.mxu0 %v323
        %v1145 = vpop.f32.mrf.mxu0
        %v1146 = vadd.f32 %v1033, %v1145
        %1147 = vmatmul.f32.gmra.mxu0 %v330
        %v1148 = vpop.f32.mrf.mxu0
        %v1149 = vadd.f32 %v1036, %v1148
        %1150 = vmatmul.f32.gmra.mxu0 %v337
        %v1151 = vpop.f32.mrf.mxu0
        %v1152 = vadd.f32 %v1039, %v1151
        %1153 = vmatmul.f32.gmra.mxu0 %v344
        %v1154 = vpop.f32.mrf.mxu0
        %v1155 = vadd.f32 %v1042, %v1154
        %1156 = vmatmul.f32.gmra.mxu0 %v351
        %v1157 = vpop.f32.mrf.mxu0
        %v1158 = vadd.f32 %v1045, %v1157
        %1159 = vmatmul.f32.gmra.mxu0 %v358
        %v1160 = vpop.f32.mrf.mxu0
        %v1161 = vadd.f32 %v1048, %v1160
        %1162 = vmatmul.f32.gmra.mxu0 %v365
        %v1163 = vpop.f32.mrf.mxu0
        %v1164 = vadd.f32 %v1051, %v1163
        %1165 = vmatmul.f32.gmra.mxu0 %v372
        %v1166 = vpop.f32.mrf.mxu0
        %v1167 = vadd.f32 %v1054, %v1166
        %1168 = vmatmul.f32.gmra.mxu0 %v379
        %v1169 = vpop.f32.mrf.mxu0
        %v1170 = vadd.f32 %v1057, %v1169
        %1171 = vmatmul.f32.gmra.mxu0 %v386
        %v1172 = vpop.f32.mrf.mxu0
        %v1173 = vadd.f32 %v1060, %v1172
        %1174 = vmatmul.f32.gmra.mxu0 %v393
        %v1175 = vpop.f32.mrf.mxu0
        %v1176 = vadd.f32 %v1063, %v1175
        %1177 = vmatmul.f32.gmra.mxu0 %v400
        %v1178 = vpop.f32.mrf.mxu0
        %v1179 = vadd.f32 %v1066, %v1178
        %1180 = vmatmul.f32.gmra.mxu0 %v407
        %v1181 = vpop.f32.mrf.mxu0
        %v1182 = vadd.f32 %v1069, %v1181
        %1183 = vmatmul.f32.gmra.mxu0 %v414
        %v1184 = vpop.f32.mrf.mxu0
        %v1185 = vadd.f32 %v1072, %v1184
        %1186 = vmatmul.f32.gmra.mxu0 %v421
        %v1187 = vpop.f32.mrf.mxu0
        %v1188 = vadd.f32 %v1075, %v1187
        %1189 = vdwg.mxu0
        %1190 = vmatpush.msra.mxu0 %v519
        %1191 = vmatpush.msra.mxu0 %v518
        %1192 = vmatpush.msra.mxu0 %v517
        %1193 = vmatpush.msra.mxu0 %v516
        %1194 = vmatpush.msra.mxu0 %v515
        %1195 = vmatpush.msra.mxu0 %v514
        %1196 = vmatpush.msra.mxu0 %v513
        %1197 = vmatpush.msra.mxu0 %v512
        %1198 = vmatpush.msra.mxu0 %v511
        %1199 = vmatpush.msra.mxu0 %v510
        %1200 = vmatpush.msra.mxu0 %v509
        %1201 = vmatpush.msra.mxu0 %v508
        %1202 = vmatpush.msra.mxu0 %v507
        %1203 = vmatpush.msra.mxu0 %v506
        %1204 = vmatpush.msra.mxu0 %v505
        %1205 = vmatpush.msra.mxu0 %v504
        %1206 = vmatmul.f32.gmra.mxu0 %v205
        %v1207 = vpop.f32.mrf.mxu0
        %v1208 = vadd.f32 %v1095, %v1207
        %1209 = vmatmul.f32.gmra.mxu0 %v212
        %v1210 = vpop.f32.mrf.mxu0
        %v1211 = vadd.f32 %v1098, %v1210
        %1212 = vmatmul.f32.gmra.mxu0 %v219
        %v1213 = vpop.f32.mrf.mxu0
        %v1214 = vadd.f32 %v1101, %v1213
        %1215 = vmatmul.f32.gmra.mxu0 %v226
        %v1216 = vpop.f32.mrf.mxu0
        %v1217 = vadd.f32 %v1104, %v1216
        %1218 = vmatmul.f32.gmra.mxu0 %v233
        %v1219 = vpop.f32.mrf.mxu0
        %v1220 = vadd.f32 %v1107, %v1219
        %1221 = vmatmul.f32.gmra.mxu0 %v240
        %v1222 = vpop.f32.mrf.mxu0
        %v1223 = vadd.f32 %v1110, %v1222
        %1224 = vmatmul.f32.gmra.mxu0 %v247
        %v1225 = vpop.f32.mrf.mxu0
        %v1226 = vadd.f32 %v1113, %v1225
        %1227 = vmatmul.f32.gmra.mxu0 %v254
        %v1228 = vpop.f32.mrf.mxu0
        %v1229 = vadd.f32 %v1116, %v1228
        %1230 = vmatmul.f32.gmra.mxu0 %v261
        %v1231 = vpop.f32.mrf.mxu0
        %v1232 = vadd.f32 %v1119, %v1231
        %1233 = vmatmul.f32.gmra.mxu0 %v268
        %v1234 = vpop.f32.mrf.mxu0
        %v1235 = vadd.f32 %v1122, %v1234
        %1236 = vmatmul.f32.gmra.mxu0 %v275
        %v1237 = vpop.f32.mrf.mxu0
        %v1238 = vadd.f32 %v1125, %v1237
        %1239 = vmatmul.f32.gmra.mxu0 %v282
        %v1240 = vpop.f32.mrf.mxu0
        %v1241 = vadd.f32 %v1128, %v1240
        %1242 = vmatmul.f32.gmra.mxu0 %v289
        %v1243 = vpop.f32.mrf.mxu0
        %v1244 = vadd.f32 %v1131, %v1243
        %1245 = vmatmul.f32.gmra.mxu0 %v296
        %v1246 = vpop.f32.mrf.mxu0
        %v1247 = vadd.f32 %v1134, %v1246
        %1248 = vmatmul.f32.gmra.mxu0 %v303
        %v1249 = vpop.f32.mrf.mxu0
        %v1250 = vadd.f32 %v1137, %v1249
        %1251 = vmatmul.f32.gmra.mxu0 %v310
        %v1252 = vpop.f32.mrf.mxu0
        %v1253 = vadd.f32 %v1140, %v1252
        %1254 = vmatmul.f32.gmra.mxu0 %v317
        %v1255 = vpop.f32.mrf.mxu0
        %v1256 = vadd.f32 %v1143, %v1255
        %1257 = vmatmul.f32.gmra.mxu0 %v324
        %v1258 = vpop.f32.mrf.mxu0
        %v1259 = vadd.f32 %v1146, %v1258
        %1260 = vmatmul.f32.gmra.mxu0 %v331
        %v1261 = vpop.f32.mrf.mxu0
        %v1262 = vadd.f32 %v1149, %v1261
        %1263 = vmatmul.f32.gmra.mxu0 %v338
        %v1264 = vpop.f32.mrf.mxu0
        %v1265 = vadd.f32 %v1152, %v1264
        %1266 = vmatmul.f32.gmra.mxu0 %v345
        %v1267 = vpop.f32.mrf.mxu0
        %v1268 = vadd.f32 %v1155, %v1267
        %1269 = vmatmul.f32.gmra.mxu0 %v352
        %v1270 = vpop.f32.mrf.mxu0
        %v1271 = vadd.f32 %v1158, %v1270
        %1272 = vmatmul.f32.gmra.mxu0 %v359
        %v1273 = vpop.f32.mrf.mxu0
        %v1274 = vadd.f32 %v1161, %v1273
        %1275 = vmatmul.f32.gmra.mxu0 %v366
        %v1276 = vpop.f32.mrf.mxu0
        %v1277 = vadd.f32 %v1164, %v1276
        %1278 = vmatmul.f32.gmra.mxu0 %v373
        %v1279 = vpop.f32.mrf.mxu0
        %v1280 = vadd.f32 %v1167, %v1279
        %1281 = vmatmul.f32.gmra.mxu0 %v380
        %v1282 = vpop.f32.mrf.mxu0
        %v1283 = vadd.f32 %v1170, %v1282
        %1284 = vmatmul.f32.gmra.mxu0 %v387
        %v1285 = vpop.f32.mrf.mxu0
        %v1286 = vadd.f32 %v1173, %v1285
        %1287 = vmatmul.f32.gmra.mxu0 %v394
        %v1288 = vpop.f32.mrf.mxu0
        %v1289 = vadd.f32 %v1176, %v1288
        %1290 = vmatmul.f32.gmra.mxu0 %v401
        %v1291 = vpop.f32.mrf.mxu0
        %v1292 = vadd.f32 %v1179, %v1291
        %1293 = vmatmul.f32.gmra.mxu0 %v408
        %v1294 = vpop.f32.mrf.mxu0
        %v1295 = vadd.f32 %v1182, %v1294
        %1296 = vmatmul.f32.gmra.mxu0 %v415
        %v1297 = vpop.f32.mrf.mxu0
        %v1298 = vadd.f32 %v1185, %v1297
        %1299 = vmatmul.f32.gmra.mxu0 %v422
        %v1300 = vpop.f32.mrf.mxu0
        %v1301 = vadd.f32 %v1188, %v1300
        %1302 = vdwg.mxu0
        %1303 = vmatpush.msra.mxu0 0.0
        %1304 = vmatpush.msra.mxu0 0.0
        %1305 = vmatpush.msra.mxu0 0.0
        %1306 = vmatpush.msra.mxu0 0.0
        %1307 = vmatpush.msra.mxu0 0.0
        %1308 = vmatpush.msra.mxu0 0.0
        %1309 = vmatpush.msra.mxu0 0.0
        %1310 = vmatpush.msra.mxu0 0.0
        %1311 = vmatpush.msra.mxu0 0.0
        %1312 = vmatpush.msra.mxu0 0.0
        %1313 = vmatpush.msra.mxu0 0.0
        %1314 = vmatpush.msra.mxu0 0.0
        %1315 = vmatpush.msra.mxu0 %v523
        %1316 = vmatpush.msra.mxu0 %v522
        %1317 = vmatpush.msra.mxu0 %v521
        %1318 = vmatpush.msra.mxu0 %v520
        %1319 = vmatmul.f32.gmra.mxu0 %v530
        %v1320 = vpop.f32.mrf.mxu0
        %v1321 = vadd.f32 %v1208, %v1320
        %1322 = vmatmul.f32.gmra.mxu0 %v533
        %v1323 = vpop.f32.mrf.mxu0
        %v1324 = vadd.f32 %v1211, %v1323
        %1325 = vmatmul.f32.gmra.mxu0 %v536
        %v1326 = vpop.f32.mrf.mxu0
        %v1327 = vadd.f32 %v1214, %v1326
        %1328 = vmatmul.f32.gmra.mxu0 %v539
        %v1329 = vpop.f32.mrf.mxu0
        %v1330 = vadd.f32 %v1217, %v1329
        %1331 = vmatmul.f32.gmra.mxu0 %v542
        %v1332 = vpop.f32.mrf.mxu0
        %v1333 = vadd.f32 %v1220, %v1332
        %1334 = vmatmul.f32.gmra.mxu0 %v545
        %v1335 = vpop.f32.mrf.mxu0
        %v1336 = vadd.f32 %v1223, %v1335
        %1337 = vmatmul.f32.gmra.mxu0 %v548
        %v1338 = vpop.f32.mrf.mxu0
        %v1339 = vadd.f32 %v1226, %v1338
        %1340 = vmatmul.f32.gmra.mxu0 %v551
        %v1341 = vpop.f32.mrf.mxu0
        %v1342 = vadd.f32 %v1229, %v1341
        %1343 = vmatmul.f32.gmra.mxu0 %v554
        %v1344 = vpop.f32.mrf.mxu0
        %v1345 = vadd.f32 %v1232, %v1344
        %1346 = vmatmul.f32.gmra.mxu0 %v557
        %v1347 = vpop.f32.mrf.mxu0
        %v1348 = vadd.f32 %v1235, %v1347
        %1349 = vmatmul.f32.gmra.mxu0 %v560
        %v1350 = vpop.f32.mrf.mxu0
        %v1351 = vadd.f32 %v1238, %v1350
        %1352 = vmatmul.f32.gmra.mxu0 %v563
        %v1353 = vpop.f32.mrf.mxu0
        %v1354 = vadd.f32 %v1241, %v1353
        %1355 = vmatmul.f32.gmra.mxu0 %v566
        %v1356 = vpop.f32.mrf.mxu0
        %v1357 = vadd.f32 %v1244, %v1356
        %1358 = vmatmul.f32.gmra.mxu0 %v569
        %v1359 = vpop.f32.mrf.mxu0
        %v1360 = vadd.f32 %v1247, %v1359
        %1361 = vmatmul.f32.gmra.mxu0 %v572
        %v1362 = vpop.f32.mrf.mxu0
        %v1363 = vadd.f32 %v1250, %v1362
        %1364 = vmatmul.f32.gmra.mxu0 %v575
        %v1365 = vpop.f32.mrf.mxu0
        %v1366 = vadd.f32 %v1253, %v1365
        %1367 = vmatmul.f32.gmra.mxu0 %v578
        %v1368 = vpop.f32.mrf.mxu0
        %v1369 = vadd.f32 %v1256, %v1368
        %1370 = vmatmul.f32.gmra.mxu0 %v581
        %v1371 = vpop.f32.mrf.mxu0
        %v1372 = vadd.f32 %v1259, %v1371
        %1373 = vmatmul.f32.gmra.mxu0 %v584
        %v1374 = vpop.f32.mrf.mxu0
        %v1375 = vadd.f32 %v1262, %v1374
        %1376 = vmatmul.f32.gmra.mxu0 %v587
        %v1377 = vpop.f32.mrf.mxu0
        %v1378 = vadd.f32 %v1265, %v1377
        %1379 = vmatmul.f32.gmra.mxu0 %v590
        %v1380 = vpop.f32.mrf.mxu0
        %v1381 = vadd.f32 %v1268, %v1380
        %1382 = vmatmul.f32.gmra.mxu0 %v593
        %v1383 = vpop.f32.mrf.mxu0
        %v1384 = vadd.f32 %v1271, %v1383
        %1385 = vmatmul.f32.gmra.mxu0 %v596
        %v1386 = vpop.f32.mrf.mxu0
        %v1387 = vadd.f32 %v1274, %v1386
        %1388 = vmatmul.f32.gmra.mxu0 %v599
        %v1389 = vpop.f32.mrf.mxu0
        %v1390 = vadd.f32 %v1277, %v1389
        %1391 = vmatmul.f32.gmra.mxu0 %v602
        %v1392 = vpop.f32.mrf.mxu0
        %v1393 = vadd.f32 %v1280, %v1392
        %1394 = vmatmul.f32.gmra.mxu0 %v605
        %v1395 = vpop.f32.mrf.mxu0
        %v1396 = vadd.f32 %v1283, %v1395
        %1397 = vmatmul.f32.gmra.mxu0 %v608
        %v1398 = vpop.f32.mrf.mxu0
        %v1399 = vadd.f32 %v1286, %v1398
        %1400 = vmatmul.f32.gmra.mxu0 %v611
        %v1401 = vpop.f32.mrf.mxu0
        %v1402 = vadd.f32 %v1289, %v1401
        %1403 = vmatmul.f32.gmra.mxu0 %v614
        %v1404 = vpop.f32.mrf.mxu0
        %v1405 = vadd.f32 %v1292, %v1404
        %1406 = vmatmul.f32.gmra.mxu0 %v617
        %v1407 = vpop.f32.mrf.mxu0
        %v1408 = vadd.f32 %v1295, %v1407
        %1409 = vmatmul.f32.gmra.mxu0 %v620
        %v1410 = vpop.f32.mrf.mxu0
        %v1411 = vadd.f32 %v1298, %v1410
        %1412 = vmatmul.f32.gmra.mxu0 %v623
        %v1413 = vpop.f32.mrf.mxu0
        %v1414 = vadd.f32 %v1301, %v1413
        %1415 = vdwg.mxu0
        %v1416 = vmax.f32 %v1321, 0.0
        %v1417 = vmax.f32 %v1324, 0.0
        %v1418 = vmax.f32 %v1327, 0.0
        %v1419 = vmax.f32 %v1330, 0.0
        %v1420 = vmax.f32 %v1333, 0.0
        %v1421 = vmax.f32 %v1336, 0.0
        %v1422 = vmax.f32 %v1339, 0.0
        %v1423 = vmax.f32 %v1342, 0.0
        %v1424 = vmax.f32 %v1345, 0.0
        %v1425 = vmax.f32 %v1348, 0.0
        %v1426 = vmax.f32 %v1351, 0.0
        %v1427 = vmax.f32 %v1354, 0.0
        %v1428 = vmax.f32 %v1357, 0.0
        %v1429 = vmax.f32 %v1360, 0.0
        %v1430 = vmax.f32 %v1363, 0.0
        %v1431 = vmax.f32 %v1366, 0.0
        %v1432 = vmax.f32 %v1369, 0.0
        %v1433 = vmax.f32 %v1372, 0.0
        %v1434 = vmax.f32 %v1375, 0.0
        %v1435 = vmax.f32 %v1378, 0.0
        %v1436 = vmax.f32 %v1381, 0.0
        %v1437 = vmax.f32 %v1384, 0.0
        %v1438 = vmax.f32 %v1387, 0.0
        %v1439 = vmax.f32 %v1390, 0.0
        %v1440 = vmax.f32 %v1393, 0.0
        %v1441 = vmax.f32 %v1396, 0.0
        %v1442 = vmax.f32 %v1399, 0.0
        %v1443 = vmax.f32 %v1402, 0.0
        %v1444 = vmax.f32 %v1405, 0.0
        %v1445 = vmax.f32 %v1408, 0.0
        %v1446 = vmax.f32 %v1411, 0.0
        %v1447 = vmax.f32 %v1414, 0.0
        %1448 = vst [vmem:[%s177] sm:$0xff] %v1416
        %1449 = vst [vmem:[%s177 + $0x8] sm:$0xff] %v1417
        %1450 = vst [vmem:[%s177 + $0x10] sm:$0xff] %v1418
        %1451 = vst [vmem:[%s177 + $0x18] sm:$0xff] %v1419
        %1452 = vst [vmem:[%s177 + $0x20] sm:$0xff] %v1420
        %1453 = vst [vmem:[%s177 + $0x28] sm:$0xff] %v1421
        %1454 = vst [vmem:[%s177 + $0x30] sm:$0xff] %v1422
        %1455 = vst [vmem:[%s177 + $0x38] sm:$0xff] %v1423
        %1456 = vst [vmem:[%s177 + $0x40] sm:$0xff] %v1424
        %1457 = vst [vmem:[%s177 + $0x48] sm:$0xff] %v1425
        %1458 = vst [vmem:[%s177 + $0x50] sm:$0xff] %v1426
        %1459 = vst [vmem:[%s177 + $0x58] sm:$0xff] %v1427
        %1460 = vst [vmem:[%s177 + $0x60] sm:$0xff] %v1428
        %1461 = vst [vmem:[%s177 + $0x68] sm:$0xff] %v1429
        %1462 = vst [vmem:[%s177 + $0x70] sm:$0xff] %v1430
        %1463 = vst [vmem:[%s177 + $0x78] sm:$0xff] %v1431
        %1464 = vst [vmem:[%s177 + $0x80] sm:$0xff] %v1432
        %1465 = vst [vmem:[%s177 + $0x88] sm:$0xff] %v1433
        %1466 = vst [vmem:[%s177 + $0x90] sm:$0xff] %v1434
        %1467 = vst [vmem:[%s177 + $0x98] sm:$0xff] %v1435
        %1468 = vst [vmem:[%s177 + $0xa0] sm:$0xff] %v1436
        %1469 = vst [vmem:[%s177 + $0xa8] sm:$0xff] %v1437
        %1470 = vst [vmem:[%s177 + $0xb0] sm:$0xff] %v1438
        %1471 = vst [vmem:[%s177 + $0xb8] sm:$0xff] %v1439
        %1472 = vst [vmem:[%s177 + $0xc0] sm:$0xff] %v1440
        %1473 = vst [vmem:[%s177 + $0xc8] sm:$0xff] %v1441
        %1474 = vst [vmem:[%s177 + $0xd0] sm:$0xff] %v1442
        %1475 = vst [vmem:[%s177 + $0xd8] sm:$0xff] %v1443
        %1476 = vst [vmem:[%s177 + $0xe0] sm:$0xff] %v1444
        %1477 = vst [vmem:[%s177 + $0xe8] sm:$0xff] %v1445
        %1478 = vst [vmem:[%s177 + $0xf0] sm:$0xff] %v1446
        %1479 = vst [vmem:[%s177 + $0xf8] sm:$0xff] %v1447
        %s1480 = sand.u32 %s90, 1
        %s1481 = sand.u32 %s90, 1
        %s1482 = smul.addr %s1481, 256
        %s1483 = scalar_lea.vmem [#allocation2], %s1482
        // Predicated region
        $region33: #{cnn_quantize_forward.7} parent=31 // pred_check
          %p1484 = pneg %p100
        $region34: #{cnn_quantize_forward.7} parent=31 // pred_check_branch
          %1486 = sbr.rel (%p1484) target = $region36
        $region35: #{cnn_quantize_forward.7} parent=31 // pred_region
          %s1487 = smul.u32 32, %s14
          %s1488 = ssub.s32 100, %s1487
          %p1489 = scmp.lt.s32.totalorder %s1488, 32
          %s1490 = scalar_select %p1489, %s1488, 32
          %s1491 = smul.u32 8, %s1490
          %p1492 = scmp.ne.s32.totalorder 0, %s1491
          %s1493 = smul.addr %s1487, 8
          %s1494 = scalar_lea.vmem %s3, %s1493
          // Predicated region
          $region37: #{cnn_quantize_forward.7} parent=35 // pred_check
            %p1495 = pneg %p1492
          $region38: #{cnn_quantize_forward.7} parent=35 // pred_check_branch
            %1497 = sbr.rel (%p1495) target = $region40
          $region39: #{cnn_quantize_forward.7} parent=35 // pred_region
            // Predicated region
            $region41: #{cnn_quantize_forward.7} parent=39 // pred_check
              _
            $region42: #{cnn_quantize_forward.7} parent=39 // pred_check_branch
              %1499 = sbr.rel (0) target = $region44
            $region43: #{cnn_quantize_forward.7} parent=39 // pred_region
              // Predicated region
              $region63: #{cnn_quantize_forward.7} parent=43 // pred_check
                _
              $region64: #{cnn_quantize_forward.7} parent=43 // pred_check_branch
                %1611 = sbr.rel (0) target = $region66
              $region65: #{cnn_quantize_forward.7} parent=43 // pred_region
                %s1612 = sshrl.u32 %s1490, 5
                // While loop
                $region67: #{cnn_quantize_forward.7} parent=65 // loop_pre_header
                  _
                $region68: #{cnn_quantize_forward.7} parent=65 // loop_header
                  %s1614 = sphi 0, %s1616
                  %p1615 = scmp.ge.s32.totalorder %s1614, %s1612
                  %s1619 = sphi 0, %s1688
                  %s1620 = sphi %s1483, %s1691
                  %s1621 = sphi %s1494, %s1692
                $region69: #{cnn_quantize_forward.7} parent=65 // loop_header_branch
                  %1618 = sbr.rel (%p1615) target = $region73
                $region70: #{cnn_quantize_forward.7} parent=65 // loop_body
                  %v1622 = vld [vmem:[%s1620] sm:$0xff]
                  %1623 = vst [vmem:[%s1621] sm:$0xff] %v1622
                  %v1624 = vld [vmem:[%s1620 + $0x8] sm:$0xff]
                  %1625 = vst [vmem:[%s1621 + $0x8] sm:$0xff] %v1624
                  %v1626 = vld [vmem:[%s1620 + $0x10] sm:$0xff]
                  %1627 = vst [vmem:[%s1621 + $0x10] sm:$0xff] %v1626
                  %v1628 = vld [vmem:[%s1620 + $0x18] sm:$0xff]
                  %1629 = vst [vmem:[%s1621 + $0x18] sm:$0xff] %v1628
                  %v1630 = vld [vmem:[%s1620 + $0x20] sm:$0xff]
                  %1631 = vst [vmem:[%s1621 + $0x20] sm:$0xff] %v1630
                  %v1632 = vld [vmem:[%s1620 + $0x28] sm:$0xff]
                  %1633 = vst [vmem:[%s1621 + $0x28] sm:$0xff] %v1632
                  %v1634 = vld [vmem:[%s1620 + $0x30] sm:$0xff]
                  %1635 = vst [vmem:[%s1621 + $0x30] sm:$0xff] %v1634
                  %v1636 = vld [vmem:[%s1620 + $0x38] sm:$0xff]
                  %1637 = vst [vmem:[%s1621 + $0x38] sm:$0xff] %v1636
                  %v1638 = vld [vmem:[%s1620 + $0x40] sm:$0xff]
                  %1639 = vst [vmem:[%s1621 + $0x40] sm:$0xff] %v1638
                  %v1640 = vld [vmem:[%s1620 + $0x48] sm:$0xff]
                  %1641 = vst [vmem:[%s1621 + $0x48] sm:$0xff] %v1640
                  %v1642 = vld [vmem:[%s1620 + $0x50] sm:$0xff]
                  %1643 = vst [vmem:[%s1621 + $0x50] sm:$0xff] %v1642
                  %v1644 = vld [vmem:[%s1620 + $0x58] sm:$0xff]
                  %1645 = vst [vmem:[%s1621 + $0x58] sm:$0xff] %v1644
                  %v1646 = vld [vmem:[%s1620 + $0x60] sm:$0xff]
                  %1647 = vst [vmem:[%s1621 + $0x60] sm:$0xff] %v1646
                  %v1648 = vld [vmem:[%s1620 + $0x68] sm:$0xff]
                  %1649 = vst [vmem:[%s1621 + $0x68] sm:$0xff] %v1648
                  %v1650 = vld [vmem:[%s1620 + $0x70] sm:$0xff]
                  %1651 = vst [vmem:[%s1621 + $0x70] sm:$0xff] %v1650
                  %v1652 = vld [vmem:[%s1620 + $0x78] sm:$0xff]
                  %1653 = vst [vmem:[%s1621 + $0x78] sm:$0xff] %v1652
                  %v1654 = vld [vmem:[%s1620 + $0x80] sm:$0xff]
                  %1655 = vst [vmem:[%s1621 + $0x80] sm:$0xff] %v1654
                  %v1656 = vld [vmem:[%s1620 + $0x88] sm:$0xff]
                  %1657 = vst [vmem:[%s1621 + $0x88] sm:$0xff] %v1656
                  %v1658 = vld [vmem:[%s1620 + $0x90] sm:$0xff]
                  %1659 = vst [vmem:[%s1621 + $0x90] sm:$0xff] %v1658
                  %v1660 = vld [vmem:[%s1620 + $0x98] sm:$0xff]
                  %1661 = vst [vmem:[%s1621 + $0x98] sm:$0xff] %v1660
                  %v1662 = vld [vmem:[%s1620 + $0xa0] sm:$0xff]
                  %1663 = vst [vmem:[%s1621 + $0xa0] sm:$0xff] %v1662
                  %v1664 = vld [vmem:[%s1620 + $0xa8] sm:$0xff]
                  %1665 = vst [vmem:[%s1621 + $0xa8] sm:$0xff] %v1664
                  %v1666 = vld [vmem:[%s1620 + $0xb0] sm:$0xff]
                  %1667 = vst [vmem:[%s1621 + $0xb0] sm:$0xff] %v1666
                  %v1668 = vld [vmem:[%s1620 + $0xb8] sm:$0xff]
                  %1669 = vst [vmem:[%s1621 + $0xb8] sm:$0xff] %v1668
                  %v1670 = vld [vmem:[%s1620 + $0xc0] sm:$0xff]
                  %1671 = vst [vmem:[%s1621 + $0xc0] sm:$0xff] %v1670
                  %v1672 = vld [vmem:[%s1620 + $0xc8] sm:$0xff]
                  %1673 = vst [vmem:[%s1621 + $0xc8] sm:$0xff] %v1672
                  %v1674 = vld [vmem:[%s1620 + $0xd0] sm:$0xff]
                  %1675 = vst [vmem:[%s1621 + $0xd0] sm:$0xff] %v1674
                  %v1676 = vld [vmem:[%s1620 + $0xd8] sm:$0xff]
                  %1677 = vst [vmem:[%s1621 + $0xd8] sm:$0xff] %v1676
                  %v1678 = vld [vmem:[%s1620 + $0xe0] sm:$0xff]
                  %1679 = vst [vmem:[%s1621 + $0xe0] sm:$0xff] %v1678
                  %v1680 = vld [vmem:[%s1620 + $0xe8] sm:$0xff]
                  %1681 = vst [vmem:[%s1621 + $0xe8] sm:$0xff] %v1680
                  %v1682 = vld [vmem:[%s1620 + $0xf0] sm:$0xff]
                  %1683 = vst [vmem:[%s1621 + $0xf0] sm:$0xff] %v1682
                  %v1684 = vld [vmem:[%s1620 + $0xf8] sm:$0xff]
                  %1685 = vst [vmem:[%s1621 + $0xf8] sm:$0xff] %v1684
                  %s1686 = sadd.s32 1, %s1619
                  %p1687 = scmp.ge.s32.totalorder %s1686, %s1612
                  %s1688 = scalar_select %p1687, 0, %s1686
                  %s1689 = smul.u32 %s1688, 256
                  %s1690 = smul.u32 %s1688, 256
                  %s1691 = scalar_lea.vmem %s1483, %s1689 [#allocation2]
                  %s1692 = scalar_lea.vmem %s1494, %s1690
                $region71: #{cnn_quantize_forward.7} parent=65 // loop_footer
                  %s1616 = sadd.s32 %s1614, 1
                $region72: #{cnn_quantize_forward.7} parent=65 // loop_footer_branch
                  %1613 = sbr.rel target = $region68
                $region73: #{cnn_quantize_forward.7} parent=65 // loop_exit
                  _
                %s1693 = sshrl.u32 %s1490, 5
                %s1694 = sand.u32 %s1490, 31
                %s1695 = smul.u32 %s1693, 32
                %s1696 = smul.u32 8, %s1695
                %s1697 = scalar_lea.vmem %s1483, %s1696 [#allocation2]
                %s1698 = smul.u32 8, %s1695
                %s1699 = scalar_lea.vmem %s1494, %s1698
                // While loop
                $region74: #{cnn_quantize_forward.7} parent=65 // loop_pre_header
                  _
                $region75: #{cnn_quantize_forward.7} parent=65 // loop_header
                  %s1701 = sphi 0, %s1703
                  %p1702 = scmp.ge.s32.totalorder %s1701, %s1694
                  %s1706 = sphi 0, %s1713
                  %s1707 = sphi %s1697, %s1716
                  %s1708 = sphi %s1699, %s1717
                $region76: #{cnn_quantize_forward.7} parent=65 // loop_header_branch
                  %1705 = sbr.rel (%p1702) target = $region80
                $region77: #{cnn_quantize_forward.7} parent=65 // loop_body
                  %v1709 = vld [vmem:[%s1707] sm:$0xff]
                  %1710 = vst [vmem:[%s1708] sm:$0xff] %v1709
                  %s1711 = sadd.s32 1, %s1706
                  %p1712 = scmp.ge.s32.totalorder %s1711, %s1694
                  %s1713 = scalar_select %p1712, 0, %s1711
                  %s1714 = smul.u32 %s1713, 8
                  %s1715 = smul.u32 %s1713, 8
                  %s1716 = scalar_lea.vmem %s1697, %s1714 [#allocation2]
                  %s1717 = scalar_lea.vmem %s1699, %s1715
                $region78: #{cnn_quantize_forward.7} parent=65 // loop_footer
                  %s1703 = sadd.s32 %s1701, 1
                $region79: #{cnn_quantize_forward.7} parent=65 // loop_footer_branch
                  %1700 = sbr.rel target = $region75
                $region80: #{cnn_quantize_forward.7} parent=65 // loop_exit
                  _
              $region66: #{cnn_quantize_forward.7} parent=43 // pred_fallthru
                _
              // Predicated region
              $region81: #{cnn_quantize_forward.7} parent=43 // pred_check
                _
              $region82: #{cnn_quantize_forward.7} parent=43 // pred_check_branch
                %1719 = sbr.rel target = $region84
              $region83: #{cnn_quantize_forward.7} parent=43 // pred_region
                _
              $region84: #{cnn_quantize_forward.7} parent=43 // pred_fallthru
                _
            $region44: #{cnn_quantize_forward.7} parent=39 // pred_fallthru
              _
            // Predicated region
            $region45: #{cnn_quantize_forward.7} parent=39 // pred_check
              _
            $region46: #{cnn_quantize_forward.7} parent=39 // pred_check_branch
              %1501 = sbr.rel target = $region48
            $region47: #{cnn_quantize_forward.7} parent=39 // pred_region
              %s1503 = ssub.s32 256, 1
              %s1504 = sshrl.u32 %s1490, 5
              // While loop
              $region49: #{cnn_quantize_forward.7} parent=47 // loop_pre_header
                _
              $region50: #{cnn_quantize_forward.7} parent=47 // loop_header
                %s1506 = sphi 0, %s1508
                %p1507 = scmp.ge.s32.totalorder %s1506, %s1504
                %s1511 = sphi 0, %s1580
                %s1512 = sphi %s1483, %s1583
                %s1513 = sphi %s1494, %s1584
              $region51: #{cnn_quantize_forward.7} parent=47 // loop_header_branch
                %1510 = sbr.rel (%p1507) target = $region55
              $region52: #{cnn_quantize_forward.7} parent=47 // loop_body
                %v1514 = vld [vmem:[%s1512] sm:%s1503]
                %1515 = vst [vmem:[%s1513] sm:%s1503] %v1514
                %v1516 = vld [vmem:[%s1512 + $0x8] sm:%s1503]
                %1517 = vst [vmem:[%s1513 + $0x8] sm:%s1503] %v1516
                %v1518 = vld [vmem:[%s1512 + $0x10] sm:%s1503]
                %1519 = vst [vmem:[%s1513 + $0x10] sm:%s1503] %v1518
                %v1520 = vld [vmem:[%s1512 + $0x18] sm:%s1503]
                %1521 = vst [vmem:[%s1513 + $0x18] sm:%s1503] %v1520
                %v1522 = vld [vmem:[%s1512 + $0x20] sm:%s1503]
                %1523 = vst [vmem:[%s1513 + $0x20] sm:%s1503] %v1522
                %v1524 = vld [vmem:[%s1512 + $0x28] sm:%s1503]
                %1525 = vst [vmem:[%s1513 + $0x28] sm:%s1503] %v1524
                %v1526 = vld [vmem:[%s1512 + $0x30] sm:%s1503]
                %1527 = vst [vmem:[%s1513 + $0x30] sm:%s1503] %v1526
                %v1528 = vld [vmem:[%s1512 + $0x38] sm:%s1503]
                %1529 = vst [vmem:[%s1513 + $0x38] sm:%s1503] %v1528
                %v1530 = vld [vmem:[%s1512 + $0x40] sm:%s1503]
                %1531 = vst [vmem:[%s1513 + $0x40] sm:%s1503] %v1530
                %v1532 = vld [vmem:[%s1512 + $0x48] sm:%s1503]
                %1533 = vst [vmem:[%s1513 + $0x48] sm:%s1503] %v1532
                %v1534 = vld [vmem:[%s1512 + $0x50] sm:%s1503]
                %1535 = vst [vmem:[%s1513 + $0x50] sm:%s1503] %v1534
                %v1536 = vld [vmem:[%s1512 + $0x58] sm:%s1503]
                %1537 = vst [vmem:[%s1513 + $0x58] sm:%s1503] %v1536
                %v1538 = vld [vmem:[%s1512 + $0x60] sm:%s1503]
                %1539 = vst [vmem:[%s1513 + $0x60] sm:%s1503] %v1538
                %v1540 = vld [vmem:[%s1512 + $0x68] sm:%s1503]
                %1541 = vst [vmem:[%s1513 + $0x68] sm:%s1503] %v1540
                %v1542 = vld [vmem:[%s1512 + $0x70] sm:%s1503]
                %1543 = vst [vmem:[%s1513 + $0x70] sm:%s1503] %v1542
                %v1544 = vld [vmem:[%s1512 + $0x78] sm:%s1503]
                %1545 = vst [vmem:[%s1513 + $0x78] sm:%s1503] %v1544
                %v1546 = vld [vmem:[%s1512 + $0x80] sm:%s1503]
                %1547 = vst [vmem:[%s1513 + $0x80] sm:%s1503] %v1546
                %v1548 = vld [vmem:[%s1512 + $0x88] sm:%s1503]
                %1549 = vst [vmem:[%s1513 + $0x88] sm:%s1503] %v1548
                %v1550 = vld [vmem:[%s1512 + $0x90] sm:%s1503]
                %1551 = vst [vmem:[%s1513 + $0x90] sm:%s1503] %v1550
                %v1552 = vld [vmem:[%s1512 + $0x98] sm:%s1503]
                %1553 = vst [vmem:[%s1513 + $0x98] sm:%s1503] %v1552
                %v1554 = vld [vmem:[%s1512 + $0xa0] sm:%s1503]
                %1555 = vst [vmem:[%s1513 + $0xa0] sm:%s1503] %v1554
                %v1556 = vld [vmem:[%s1512 + $0xa8] sm:%s1503]
                %1557 = vst [vmem:[%s1513 + $0xa8] sm:%s1503] %v1556
                %v1558 = vld [vmem:[%s1512 + $0xb0] sm:%s1503]
                %1559 = vst [vmem:[%s1513 + $0xb0] sm:%s1503] %v1558
                %v1560 = vld [vmem:[%s1512 + $0xb8] sm:%s1503]
                %1561 = vst [vmem:[%s1513 + $0xb8] sm:%s1503] %v1560
                %v1562 = vld [vmem:[%s1512 + $0xc0] sm:%s1503]
                %1563 = vst [vmem:[%s1513 + $0xc0] sm:%s1503] %v1562
                %v1564 = vld [vmem:[%s1512 + $0xc8] sm:%s1503]
                %1565 = vst [vmem:[%s1513 + $0xc8] sm:%s1503] %v1564
                %v1566 = vld [vmem:[%s1512 + $0xd0] sm:%s1503]
                %1567 = vst [vmem:[%s1513 + $0xd0] sm:%s1503] %v1566
                %v1568 = vld [vmem:[%s1512 + $0xd8] sm:%s1503]
                %1569 = vst [vmem:[%s1513 + $0xd8] sm:%s1503] %v1568
                %v1570 = vld [vmem:[%s1512 + $0xe0] sm:%s1503]
                %1571 = vst [vmem:[%s1513 + $0xe0] sm:%s1503] %v1570
                %v1572 = vld [vmem:[%s1512 + $0xe8] sm:%s1503]
                %1573 = vst [vmem:[%s1513 + $0xe8] sm:%s1503] %v1572
                %v1574 = vld [vmem:[%s1512 + $0xf0] sm:%s1503]
                %1575 = vst [vmem:[%s1513 + $0xf0] sm:%s1503] %v1574
                %v1576 = vld [vmem:[%s1512 + $0xf8] sm:%s1503]
                %1577 = vst [vmem:[%s1513 + $0xf8] sm:%s1503] %v1576
                %s1578 = sadd.s32 1, %s1511
                %p1579 = scmp.ge.s32.totalorder %s1578, %s1504
                %s1580 = scalar_select %p1579, 0, %s1578
                %s1581 = smul.u32 %s1580, 256
                %s1582 = smul.u32 %s1580, 256
                %s1583 = scalar_lea.vmem %s1483, %s1581 [#allocation2]
                %s1584 = scalar_lea.vmem %s1494, %s1582
              $region53: #{cnn_quantize_forward.7} parent=47 // loop_footer
                %s1508 = sadd.s32 %s1506, 1
              $region54: #{cnn_quantize_forward.7} parent=47 // loop_footer_branch
                %1505 = sbr.rel target = $region50
              $region55: #{cnn_quantize_forward.7} parent=47 // loop_exit
                _
              %s1585 = sshrl.u32 %s1490, 5
              %s1586 = sand.u32 %s1490, 31
              %s1587 = smul.u32 %s1585, 32
              %s1588 = smul.u32 8, %s1587
              %s1589 = scalar_lea.vmem %s1483, %s1588 [#allocation2]
              %s1590 = smul.u32 8, %s1587
              %s1591 = scalar_lea.vmem %s1494, %s1590
              // While loop
              $region56: #{cnn_quantize_forward.7} parent=47 // loop_pre_header
                _
              $region57: #{cnn_quantize_forward.7} parent=47 // loop_header
                %s1593 = sphi 0, %s1595
                %p1594 = scmp.ge.s32.totalorder %s1593, %s1586
                %s1598 = sphi 0, %s1605
                %s1599 = sphi %s1589, %s1608
                %s1600 = sphi %s1591, %s1609
              $region58: #{cnn_quantize_forward.7} parent=47 // loop_header_branch
                %1597 = sbr.rel (%p1594) target = $region62
              $region59: #{cnn_quantize_forward.7} parent=47 // loop_body
                %v1601 = vld [vmem:[%s1599] sm:%s1503]
                %1602 = vst [vmem:[%s1600] sm:%s1503] %v1601
                %s1603 = sadd.s32 1, %s1598
                %p1604 = scmp.ge.s32.totalorder %s1603, %s1586
                %s1605 = scalar_select %p1604, 0, %s1603
                %s1606 = smul.u32 %s1605, 8
                %s1607 = smul.u32 %s1605, 8
                %s1608 = scalar_lea.vmem %s1589, %s1606 [#allocation2]
                %s1609 = scalar_lea.vmem %s1591, %s1607
              $region60: #{cnn_quantize_forward.7} parent=47 // loop_footer
                %s1595 = sadd.s32 %s1593, 1
              $region61: #{cnn_quantize_forward.7} parent=47 // loop_footer_branch
                %1592 = sbr.rel target = $region57
              $region62: #{cnn_quantize_forward.7} parent=47 // loop_exit
                _
            $region48: #{cnn_quantize_forward.7} parent=39 // pred_fallthru
              _
          $region40: #{cnn_quantize_forward.7} parent=35 // pred_fallthru
            _
          %1720 = vnop
        $region36: #{cnn_quantize_forward.7} parent=31 // pred_fallthru
          _
      $region32: #{cnn_quantize_forward.7} parent=5 // pred_fallthru
        _
      %p1721 = scmp.le.s32.totalorder 2, %s9
      // Predicated region
      $region85: #{cnn_quantize_forward.7} parent=5 // pred_check
        %p1722 = pneg %p1721
      $region86: #{cnn_quantize_forward.7} parent=5 // pred_check_branch
        %1724 = sbr.rel (%p1722) target = $region88
      $region87: #{cnn_quantize_forward.7} parent=5 // pred_region
        %s1725 = ssub.s32 %s9, 2
        // Predicated region
        $region89: #{cnn_quantize_forward.7} parent=87 // pred_check
          %p1726 = pneg %p106
        $region90: #{cnn_quantize_forward.7} parent=87 // pred_check_branch
          %1728 = sbr.rel (%p1726) target = $region92
        $region91: #{cnn_quantize_forward.7} parent=87 // pred_region
          %s1729 = sand.u32 %s91, 1
          %s1730 = sand.u32 %s91, 1
          %s1731 = smul.addr %s1730, 256
          %s1732 = scalar_lea.vmem [#allocation2], %s1731
        $region92: #{cnn_quantize_forward.7} parent=87 // pred_fallthru
          _
      $region88: #{cnn_quantize_forward.7} parent=5 // pred_fallthru
        _
    $region6: #{cnn_quantize_forward.7} parent=1 // loop_footer
      %s13 = sadd.s32 1, %s9
    $region7: #{cnn_quantize_forward.7} parent=1 // loop_footer_branch
      %8 = sbr.rel target = $region3
    $region8: #{cnn_quantize_forward.7} parent=1 // loop_exit
      _

// kernel: cnn_quantize_forward.8
$region0: #{cnn_quantize_forward.8}
  #allocation0 [shape = 'u32[]', space=smem, size = 0x4, offset = 0x4, fixed_abs, tag = 'smem constant byte address 0x4 - core index']
  #allocation1 [shape = 'u32[72,128]{1,0:T(1,128)}', space=vmem, size = 0x9000, scoped, tag = 'internal scratch']
  %s0 = inlined_call_operand.vmem [shape: f32[72,800], index: 0, kind: input, shape index: {}]
  %s1 = inlined_call_operand.vmem [shape: f32[800,128], index: 1, kind: input, shape index: {}]
  %s2 = inlined_call_operand.vmem [shape: f32[1,128], index: 2, kind: input, shape index: {}]
  %s3 = inlined_call_operand.vmem [shape: f32[72,128], index: 3, kind: output, shape index: {}]
  %s4 = sld [smem:[#allocation0]]
  $region22: #{cnn_quantize_forward.8} parent=0
    _
  %s6 = ssub.s32 1, %s4
  %s7 = scalar_select 0, %s6, %s4
  // Predicated region
  $region2: #{cnn_quantize_forward.8} parent=0 // pred_check
    _
  $region3: #{cnn_quantize_forward.8} parent=0 // pred_check_branch
    %9 = sbr.rel (0) target = $region5
  $region4: #{cnn_quantize_forward.8} parent=0 // pred_region
    _
  $region5: #{cnn_quantize_forward.8} parent=0 // pred_fallthru
    _
  // Predicated region
  $region6: #{cnn_quantize_forward.8} parent=0 // pred_check
    _
  $region7: #{cnn_quantize_forward.8} parent=0 // pred_check_branch
    %11 = sbr.rel (0) target = $region9
  $region8: #{cnn_quantize_forward.8} parent=0 // pred_region
    _
  $region9: #{cnn_quantize_forward.8} parent=0 // pred_fallthru
    _
  // Predicated region
  $region10: #{cnn_quantize_forward.8} parent=0 // pred_check
    _
  $region11: #{cnn_quantize_forward.8} parent=0 // pred_check_branch
    %13 = sbr.rel (0) target = $region13
  $region12: #{cnn_quantize_forward.8} parent=0 // pred_region
    _
  $region13: #{cnn_quantize_forward.8} parent=0 // pred_fallthru
    _
  %v14 = vld [vmem:[%s0] sm:$0xff]
  %v15 = vld [vmem:[%s0 + $0x8] sm:$0xff]
  %v16 = vld [vmem:[%s0 + $0x10] sm:$0xff]
  %v17 = vld [vmem:[%s0 + $0x18] sm:$0xff]
  %v18 = vld [vmem:[%s0 + $0x20] sm:$0xff]
  %v19 = vld [vmem:[%s0 + $0x28] sm:$0xff]
  %v20 = vld [vmem:[%s0 + $0x30] sm:$0xff]
  %v21 = vld [vmem:[%s0 + $0x38] sm:$0xff]
  %v22 = vld [vmem:[%s0 + $0x40] sm:$0xff]
  %v23 = vld [vmem:[%s0 + $0x48] sm:$0xff]
  %v24 = vld [vmem:[%s0 + $0x50] sm:$0xff]
  %v25 = vld [vmem:[%s0 + $0x58] sm:$0xff]
  %v26 = vld [vmem:[%s0 + $0x60] sm:$0xff]
  %v27 = vld [vmem:[%s0 + $0x68] sm:$0xff]
  %v28 = vld [vmem:[%s0 + $0x70] sm:$0xff]
  %v29 = vld [vmem:[%s0 + $0x78] sm:$0xff]
  %v30 = vld [vmem:[%s0 + $0x80] sm:$0xff]
  %v31 = vld [vmem:[%s0 + $0x88] sm:$0xff]
  %v32 = vld [vmem:[%s0 + $0x90] sm:$0xff]
  %v33 = vld [vmem:[%s0 + $0x98] sm:$0xff]
  %v34 = vld [vmem:[%s0 + $0xa0] sm:$0xff]
  %v35 = vld [vmem:[%s0 + $0xa8] sm:$0xff]
  %v36 = vld [vmem:[%s0 + $0xb0] sm:$0xff]
  %v37 = vld [vmem:[%s0 + $0xb8] sm:$0xff]
  %v38 = vld [vmem:[%s0 + $0xc0] sm:$0xff]
  %v39 = vld [vmem:[%s0 + $0xc8] sm:$0xff]
  %v40 = vld [vmem:[%s0 + $0xd0] sm:$0xff]
  %v41 = vld [vmem:[%s0 + $0xd8] sm:$0xff]
  %v42 = vld [vmem:[%s0 + $0xe0] sm:$0xff]
  %v43 = vld [vmem:[%s0 + $0xe8] sm:$0xff]
  %v44 = vld [vmem:[%s0 + $0xf0] sm:$0xff]
  %v45 = vld [vmem:[%s0 + $0xf8] sm:$0xff]
  %v46 = vld [vmem:[%s0 + $0x100] sm:$0xff]
  %v47 = vld [vmem:[%s0 + $0x108] sm:$0xff]
  %v48 = vld [vmem:[%s0 + $0x110] sm:$0xff]
  %v49 = vld [vmem:[%s0 + $0x118] sm:$0xff]
  %v50 = vld [vmem:[%s0 + $0x120] sm:$0xff]
  %v51 = vld [vmem:[%s0 + $0x128] sm:$0xff]
  %v52 = vld [vmem:[%s0 + $0x130] sm:$0xff]
  %v53 = vld [vmem:[%s0 + $0x138] sm:$0xff]
  %v54 = vld [vmem:[%s0 + $0x140] sm:$0xff]
  %v55 = vld [vmem:[%s0 + $0x148] sm:$0xff]
  %v56 = vld [vmem:[%s0 + $0x150] sm:$0xff]
  %v57 = vld [vmem:[%s0 + $0x158] sm:$0xff]
  %v58 = vld [vmem:[%s0 + $0x160] sm:$0xff]
  %v59 = vld [vmem:[%s0 + $0x168] sm:$0xff]
  %v60 = vld [vmem:[%s0 + $0x170] sm:$0xff]
  %v61 = vld [vmem:[%s0 + $0x178] sm:$0xff]
  %v62 = vld [vmem:[%s0 + $0x180] sm:$0xff]
  %v63 = vld [vmem:[%s0 + $0x188] sm:$0xff]
  %v64 = vld [vmem:[%s0 + $0x190] sm:$0xff]
  %v65 = vld [vmem:[%s0 + $0x198] sm:$0xff]
  %v66 = vld [vmem:[%s0 + $0x1a0] sm:$0xff]
  %v67 = vld [vmem:[%s0 + $0x1a8] sm:$0xff]
  %v68 = vld [vmem:[%s0 + $0x1b0] sm:$0xff]
  %v69 = vld [vmem:[%s0 + $0x1b8] sm:$0xff]
  %v70 = vld [vmem:[%s0 + $0x1c0] sm:$0xff]
  %v71 = vld [vmem:[%s0 + $0x1c8] sm:$0xff]
  %v72 = vld [vmem:[%s0 + $0x1d0] sm:$0xff]
  %v73 = vld [vmem:[%s0 + $0x1d8] sm:$0xff]
  %v74 = vld [vmem:[%s0 + $0x1e0] sm:$0xff]
  %v75 = vld [vmem:[%s0 + $0x1e8] sm:$0xff]
  %v76 = vld [vmem:[%s0 + $0x1f0] sm:$0xff]
  %v77 = vld [vmem:[%s1] sm:$0xff]
  %v78 = vld [vmem:[%s1 + $0x8] sm:$0xff]
  %v79 = vld [vmem:[%s1 + $0x10] sm:$0xff]
  %v80 = vld [vmem:[%s1 + $0x18] sm:$0xff]
  %v81 = vld [vmem:[%s1 + $0x20] sm:$0xff]
  %v82 = vld [vmem:[%s1 + $0x28] sm:$0xff]
  %v83 = vld [vmem:[%s1 + $0x30] sm:$0xff]
  %v84 = vld [vmem:[%s1 + $0x38] sm:$0xff]
  %v85 = vld [vmem:[%s1 + $0x40] sm:$0xff]
  %v86 = vld [vmem:[%s1 + $0x48] sm:$0xff]
  %v87 = vld [vmem:[%s1 + $0x50] sm:$0xff]
  %v88 = vld [vmem:[%s1 + $0x58] sm:$0xff]
  %v89 = vld [vmem:[%s1 + $0x60] sm:$0xff]
  %v90 = vld [vmem:[%s1 + $0x68] sm:$0xff]
  %v91 = vld [vmem:[%s1 + $0x70] sm:$0xff]
  %v92 = vld [vmem:[%s1 + $0x78] sm:$0xff]
  %v93 = vld [vmem:[%s1 + $0x80] sm:$0xff]
  %v94 = vld [vmem:[%s1 + $0x88] sm:$0xff]
  %v95 = vld [vmem:[%s1 + $0x90] sm:$0xff]
  %v96 = vld [vmem:[%s1 + $0x98] sm:$0xff]
  %v97 = vld [vmem:[%s1 + $0xa0] sm:$0xff]
  %v98 = vld [vmem:[%s1 + $0xa8] sm:$0xff]
  %v99 = vld [vmem:[%s1 + $0xb0] sm:$0xff]
  %v100 = vld [vmem:[%s1 + $0xb8] sm:$0xff]
  %v101 = vld [vmem:[%s1 + $0xc0] sm:$0xff]
  %v102 = vld [vmem:[%s1 + $0xc8] sm:$0xff]
  %v103 = vld [vmem:[%s1 + $0xd0] sm:$0xff]
  %v104 = vld [vmem:[%s1 + $0xd8] sm:$0xff]
  %v105 = vld [vmem:[%s1 + $0xe0] sm:$0xff]
  %v106 = vld [vmem:[%s1 + $0xe8] sm:$0xff]
  %v107 = vld [vmem:[%s1 + $0xf0] sm:$0xff]
  %v108 = vld [vmem:[%s1 + $0xf8] sm:$0xff]
  %v109 = vld [vmem:[%s1 + $0x100] sm:$0xff]
  %v110 = vld [vmem:[%s1 + $0x108] sm:$0xff]
  %v111 = vld [vmem:[%s1 + $0x110] sm:$0xff]
  %v112 = vld [vmem:[%s1 + $0x118] sm:$0xff]
  %v113 = vld [vmem:[%s1 + $0x120] sm:$0xff]
  %v114 = vld [vmem:[%s1 + $0x128] sm:$0xff]
  %v115 = vld [vmem:[%s1 + $0x130] sm:$0xff]
  %v116 = vld [vmem:[%s1 + $0x138] sm:$0xff]
  %v117 = vld [vmem:[%s1 + $0x140] sm:$0xff]
  %v118 = vld [vmem:[%s1 + $0x148] sm:$0xff]
  %v119 = vld [vmem:[%s1 + $0x150] sm:$0xff]
  %v120 = vld [vmem:[%s1 + $0x158] sm:$0xff]
  %v121 = vld [vmem:[%s1 + $0x160] sm:$0xff]
  %v122 = vld [vmem:[%s1 + $0x168] sm:$0xff]
  %v123 = vld [vmem:[%s1 + $0x170] sm:$0xff]
  %v124 = vld [vmem:[%s1 + $0x178] sm:$0xff]
  %v125 = vld [vmem:[%s1 + $0x180] sm:$0xff]
  %v126 = vld [vmem:[%s1 + $0x188] sm:$0xff]
  %v127 = vld [vmem:[%s1 + $0x190] sm:$0xff]
  %v128 = vld [vmem:[%s1 + $0x198] sm:$0xff]
  %v129 = vld [vmem:[%s1 + $0x1a0] sm:$0xff]
  %v130 = vld [vmem:[%s1 + $0x1a8] sm:$0xff]
  %v131 = vld [vmem:[%s1 + $0x1b0] sm:$0xff]
  %v132 = vld [vmem:[%s1 + $0x1b8] sm:$0xff]
  %v133 = vld [vmem:[%s1 + $0x1c0] sm:$0xff]
  %v134 = vld [vmem:[%s1 + $0x1c8] sm:$0xff]
  %v135 = vld [vmem:[%s1 + $0x1d0] sm:$0xff]
  %v136 = vld [vmem:[%s1 + $0x1d8] sm:$0xff]
  %v137 = vld [vmem:[%s1 + $0x1e0] sm:$0xff]
  %v138 = vld [vmem:[%s1 + $0x1e8] sm:$0xff]
  %v139 = vld [vmem:[%s1 + $0x1f0] sm:$0xff]
  %v140 = vld [vmem:[%s1 + $0x1f8] sm:$0xff]
  %v141 = vld [vmem:[%s1 + $0x200] sm:$0xff]
  %v142 = vld [vmem:[%s1 + $0x208] sm:$0xff]
  %v143 = vld [vmem:[%s1 + $0x210] sm:$0xff]
  %v144 = vld [vmem:[%s1 + $0x218] sm:$0xff]
  %v145 = vld [vmem:[%s1 + $0x220] sm:$0xff]
  %v146 = vld [vmem:[%s1 + $0x228] sm:$0xff]
  %v147 = vld [vmem:[%s1 + $0x230] sm:$0xff]
  %v148 = vld [vmem:[%s1 + $0x238] sm:$0xff]
  %v149 = vld [vmem:[%s1 + $0x240] sm:$0xff]
  %v150 = vld [vmem:[%s1 + $0x248] sm:$0xff]
  %v151 = vld [vmem:[%s1 + $0x250] sm:$0xff]
  %v152 = vld [vmem:[%s1 + $0x258] sm:$0xff]
  %v153 = vld [vmem:[%s1 + $0x260] sm:$0xff]
  %v154 = vld [vmem:[%s1 + $0x268] sm:$0xff]
  %v155 = vld [vmem:[%s1 + $0x270] sm:$0xff]
  %v156 = vld [vmem:[%s1 + $0x278] sm:$0xff]
  %v157 = vld [vmem:[%s1 + $0x280] sm:$0xff]
  %v158 = vld [vmem:[%s1 + $0x288] sm:$0xff]
  %v159 = vld [vmem:[%s1 + $0x290] sm:$0xff]
  %v160 = vld [vmem:[%s1 + $0x298] sm:$0xff]
  %v161 = vld [vmem:[%s1 + $0x2a0] sm:$0xff]
  %v162 = vld [vmem:[%s1 + $0x2a8] sm:$0xff]
  %v163 = vld [vmem:[%s1 + $0x2b0] sm:$0xff]
  %v164 = vld [vmem:[%s1 + $0x2b8] sm:$0xff]
  %v165 = vld [vmem:[%s1 + $0x2c0] sm:$0xff]
  %v166 = vld [vmem:[%s1 + $0x2c8] sm:$0xff]
  %v167 = vld [vmem:[%s1 + $0x2d0] sm:$0xff]
  %v168 = vld [vmem:[%s1 + $0x2d8] sm:$0xff]
  %v169 = vld [vmem:[%s1 + $0x2e0] sm:$0xff]
  %v170 = vld [vmem:[%s1 + $0x2e8] sm:$0xff]
  %v171 = vld [vmem:[%s1 + $0x2f0] sm:$0xff]
  %v172 = vld [vmem:[%s1 + $0x2f8] sm:$0xff]
  %v173 = vld [vmem:[%s1 + $0x300] sm:$0xff]
  %v174 = vld [vmem:[%s1 + $0x308] sm:$0xff]
  %v175 = vld [vmem:[%s1 + $0x310] sm:$0xff]
  %v176 = vld [vmem:[%s1 + $0x318] sm:$0xff]
  %v177 = vld [vmem:[%s2] sm:$0x1]
  %v179 = vperm.slane %v177, 0
  %vm181 = vcmask 261120
  %v183 = vsel %vm181, %v20, 0
  %v186 = vsel %vm181, %v27, 0
  %v189 = vsel %vm181, %v34, 0
  %v192 = vsel %vm181, %v41, 0
  %v195 = vsel %vm181, %v48, 0
  %v198 = vsel %vm181, %v55, 0
  %v201 = vsel %vm181, %v62, 0
  %v204 = vsel %vm181, %v69, 0
  %v207 = vsel %vm181, %v76, 0
  %209 = vmatpush.msra.mxu0 %v92
  %210 = vmatpush.msra.mxu0 %v91
  %211 = vmatpush.msra.mxu0 %v90
  %212 = vmatpush.msra.mxu0 %v89
  %213 = vmatpush.msra.mxu0 %v88
  %214 = vmatpush.msra.mxu0 %v87
  %215 = vmatpush.msra.mxu0 %v86
  %216 = vmatpush.msra.mxu0 %v85
  %217 = vmatpush.msra.mxu0 %v84
  %218 = vmatpush.msra.mxu0 %v83
  %219 = vmatpush.msra.mxu0 %v82
  %220 = vmatpush.msra.mxu0 %v81
  %221 = vmatpush.msra.mxu0 %v80
  %222 = vmatpush.msra.mxu0 %v79
  %223 = vmatpush.msra.mxu0 %v78
  %224 = vmatpush.msra.mxu0 %v77
  %225 = vmatmul.f32.gmra.mxu0 %v14
  %v226 = vpop.f32.mrf.mxu0
  %v227 = vadd.f32 %v179, %v226
  %228 = vmatmul.f32.gmra.mxu0 %v21
  %v229 = vpop.f32.mrf.mxu0
  %v230 = vadd.f32 %v179, %v229
  %231 = vmatmul.f32.gmra.mxu0 %v28
  %v232 = vpop.f32.mrf.mxu0
  %v233 = vadd.f32 %v179, %v232
  %234 = vmatmul.f32.gmra.mxu0 %v35
  %v235 = vpop.f32.mrf.mxu0
  %v236 = vadd.f32 %v179, %v235
  %237 = vmatmul.f32.gmra.mxu0 %v42
  %v238 = vpop.f32.mrf.mxu0
  %v239 = vadd.f32 %v179, %v238
  %240 = vmatmul.f32.gmra.mxu0 %v49
  %v241 = vpop.f32.mrf.mxu0
  %v242 = vadd.f32 %v179, %v241
  %243 = vmatmul.f32.gmra.mxu0 %v56
  %v244 = vpop.f32.mrf.mxu0
  %v245 = vadd.f32 %v179, %v244
  %246 = vmatmul.f32.gmra.mxu0 %v63
  %v247 = vpop.f32.mrf.mxu0
  %v248 = vadd.f32 %v179, %v247
  %249 = vmatmul.f32.gmra.mxu0 %v70
  %v250 = vpop.f32.mrf.mxu0
  %v251 = vadd.f32 %v179, %v250
  %252 = vdwg.mxu0
  %253 = vmatpush.msra.mxu0 %v108
  %254 = vmatpush.msra.mxu0 %v107
  %255 = vmatpush.msra.mxu0 %v106
  %256 = vmatpush.msra.mxu0 %v105
  %257 = vmatpush.msra.mxu0 %v104
  %258 = vmatpush.msra.mxu0 %v103
  %259 = vmatpush.msra.mxu0 %v102
  %260 = vmatpush.msra.mxu0 %v101
  %261 = vmatpush.msra.mxu0 %v100
  %262 = vmatpush.msra.mxu0 %v99
  %263 = vmatpush.msra.mxu0 %v98
  %264 = vmatpush.msra.mxu0 %v97
  %265 = vmatpush.msra.mxu0 %v96
  %266 = vmatpush.msra.mxu0 %v95
  %267 = vmatpush.msra.mxu0 %v94
  %268 = vmatpush.msra.mxu0 %v93
  %269 = vmatmul.f32.gmra.mxu0 %v15
  %v270 = vpop.f32.mrf.mxu0
  %v271 = vadd.f32 %v227, %v270
  %272 = vmatmul.f32.gmra.mxu0 %v22
  %v273 = vpop.f32.mrf.mxu0
  %v274 = vadd.f32 %v230, %v273
  %275 = vmatmul.f32.gmra.mxu0 %v29
  %v276 = vpop.f32.mrf.mxu0
  %v277 = vadd.f32 %v233, %v276
  %278 = vmatmul.f32.gmra.mxu0 %v36
  %v279 = vpop.f32.mrf.mxu0
  %v280 = vadd.f32 %v236, %v279
  %281 = vmatmul.f32.gmra.mxu0 %v43
  %v282 = vpop.f32.mrf.mxu0
  %v283 = vadd.f32 %v239, %v282
  %284 = vmatmul.f32.gmra.mxu0 %v50
  %v285 = vpop.f32.mrf.mxu0
  %v286 = vadd.f32 %v242, %v285
  %287 = vmatmul.f32.gmra.mxu0 %v57
  %v288 = vpop.f32.mrf.mxu0
  %v289 = vadd.f32 %v245, %v288
  %290 = vmatmul.f32.gmra.mxu0 %v64
  %v291 = vpop.f32.mrf.mxu0
  %v292 = vadd.f32 %v248, %v291
  %293 = vmatmul.f32.gmra.mxu0 %v71
  %v294 = vpop.f32.mrf.mxu0
  %v295 = vadd.f32 %v251, %v294
  %296 = vdwg.mxu0
  %297 = vmatpush.msra.mxu0 %v124
  %298 = vmatpush.msra.mxu0 %v123
  %299 = vmatpush.msra.mxu0 %v122
  %300 = vmatpush.msra.mxu0 %v121
  %301 = vmatpush.msra.mxu0 %v120
  %302 = vmatpush.msra.mxu0 %v119
  %303 = vmatpush.msra.mxu0 %v118
  %304 = vmatpush.msra.mxu0 %v117
  %305 = vmatpush.msra.mxu0 %v116
  %306 = vmatpush.msra.mxu0 %v115
  %307 = vmatpush.msra.mxu0 %v114
  %308 = vmatpush.msra.mxu0 %v113
  %309 = vmatpush.msra.mxu0 %v112
  %310 = vmatpush.msra.mxu0 %v111
  %311 = vmatpush.msra.mxu0 %v110
  %312 = vmatpush.msra.mxu0 %v109
  %313 = vmatmul.f32.gmra.mxu0 %v16
  %v314 = vpop.f32.mrf.mxu0
  %v315 = vadd.f32 %v271, %v314
  %316 = vmatmul.f32.gmra.mxu0 %v23
  %v317 = vpop.f32.mrf.mxu0
  %v318 = vadd.f32 %v274, %v317
  %319 = vmatmul.f32.gmra.mxu0 %v30
  %v320 = vpop.f32.mrf.mxu0
  %v321 = vadd.f32 %v277, %v320
  %322 = vmatmul.f32.gmra.mxu0 %v37
  %v323 = vpop.f32.mrf.mxu0
  %v324 = vadd.f32 %v280, %v323
  %325 = vmatmul.f32.gmra.mxu0 %v44
  %v326 = vpop.f32.mrf.mxu0
  %v327 = vadd.f32 %v283, %v326
  %328 = vmatmul.f32.gmra.mxu0 %v51
  %v329 = vpop.f32.mrf.mxu0
  %v330 = vadd.f32 %v286, %v329
  %331 = vmatmul.f32.gmra.mxu0 %v58
  %v332 = vpop.f32.mrf.mxu0
  %v333 = vadd.f32 %v289, %v332
  %334 = vmatmul.f32.gmra.mxu0 %v65
  %v335 = vpop.f32.mrf.mxu0
  %v336 = vadd.f32 %v292, %v335
  %337 = vmatmul.f32.gmra.mxu0 %v72
  %v338 = vpop.f32.mrf.mxu0
  %v339 = vadd.f32 %v295, %v338
  %340 = vdwg.mxu0
  %341 = vmatpush.msra.mxu0 %v140
  %342 = vmatpush.msra.mxu0 %v139
  %343 = vmatpush.msra.mxu0 %v138
  %344 = vmatpush.msra.mxu0 %v137
  %345 = vmatpush.msra.mxu0 %v136
  %346 = vmatpush.msra.mxu0 %v135
  %347 = vmatpush.msra.mxu0 %v134
  %348 = vmatpush.msra.mxu0 %v133
  %349 = vmatpush.msra.mxu0 %v132
  %350 = vmatpush.msra.mxu0 %v131
  %351 = vmatpush.msra.mxu0 %v130
  %352 = vmatpush.msra.mxu0 %v129
  %353 = vmatpush.msra.mxu0 %v128
  %354 = vmatpush.msra.mxu0 %v127
  %355 = vmatpush.msra.mxu0 %v126
  %356 = vmatpush.msra.mxu0 %v125
  %357 = vmatmul.f32.gmra.mxu0 %v17
  %v358 = vpop.f32.mrf.mxu0
  %v359 = vadd.f32 %v315, %v358
  %360 = vmatmul.f32.gmra.mxu0 %v24
  %v361 = vpop.f32.mrf.mxu0
  %v362 = vadd.f32 %v318, %v361
  %363 = vmatmul.f32.gmra.mxu0 %v31
  %v364 = vpop.f32.mrf.mxu0
  %v365 = vadd.f32 %v321, %v364
  %366 = vmatmul.f32.gmra.mxu0 %v38
  %v367 = vpop.f32.mrf.mxu0
  %v368 = vadd.f32 %v324, %v367
  %369 = vmatmul.f32.gmra.mxu0 %v45
  %v370 = vpop.f32.mrf.mxu0
  %v371 = vadd.f32 %v327, %v370
  %372 = vmatmul.f32.gmra.mxu0 %v52
  %v373 = vpop.f32.mrf.mxu0
  %v374 = vadd.f32 %v330, %v373
  %375 = vmatmul.f32.gmra.mxu0 %v59
  %v376 = vpop.f32.mrf.mxu0
  %v377 = vadd.f32 %v333, %v376
  %378 = vmatmul.f32.gmra.mxu0 %v66
  %v379 = vpop.f32.mrf.mxu0
  %v380 = vadd.f32 %v336, %v379
  %381 = vmatmul.f32.gmra.mxu0 %v73
  %v382 = vpop.f32.mrf.mxu0
  %v383 = vadd.f32 %v339, %v382
  %384 = vdwg.mxu0
  %385 = vmatpush.msra.mxu0 %v156
  %386 = vmatpush.msra.mxu0 %v155
  %387 = vmatpush.msra.mxu0 %v154
  %388 = vmatpush.msra.mxu0 %v153
  %389 = vmatpush.msra.mxu0 %v152
  %390 = vmatpush.msra.mxu0 %v151
  %391 = vmatpush.msra.mxu0 %v150
  %392 = vmatpush.msra.mxu0 %v149
  %393 = vmatpush.msra.mxu0 %v148
  %394 = vmatpush.msra.mxu0 %v147
  %395 = vmatpush.msra.mxu0 %v146
  %396 = vmatpush.msra.mxu0 %v145
  %397 = vmatpush.msra.mxu0 %v144
  %398 = vmatpush.msra.mxu0 %v143
  %399 = vmatpush.msra.mxu0 %v142
  %400 = vmatpush.msra.mxu0 %v141
  %401 = vmatmul.f32.gmra.mxu0 %v18
  %v402 = vpop.f32.mrf.mxu0
  %v403 = vadd.f32 %v359, %v402
  %404 = vmatmul.f32.gmra.mxu0 %v25
  %v405 = vpop.f32.mrf.mxu0
  %v406 = vadd.f32 %v362, %v405
  %407 = vmatmul.f32.gmra.mxu0 %v32
  %v408 = vpop.f32.mrf.mxu0
  %v409 = vadd.f32 %v365, %v408
  %410 = vmatmul.f32.gmra.mxu0 %v39
  %v411 = vpop.f32.mrf.mxu0
  %v412 = vadd.f32 %v368, %v411
  %413 = vmatmul.f32.gmra.mxu0 %v46
  %v414 = vpop.f32.mrf.mxu0
  %v415 = vadd.f32 %v371, %v414
  %416 = vmatmul.f32.gmra.mxu0 %v53
  %v417 = vpop.f32.mrf.mxu0
  %v418 = vadd.f32 %v374, %v417
  %419 = vmatmul.f32.gmra.mxu0 %v60
  %v420 = vpop.f32.mrf.mxu0
  %v421 = vadd.f32 %v377, %v420
  %422 = vmatmul.f32.gmra.mxu0 %v67
  %v423 = vpop.f32.mrf.mxu0
  %v424 = vadd.f32 %v380, %v423
  %425 = vmatmul.f32.gmra.mxu0 %v74
  %v426 = vpop.f32.mrf.mxu0
  %v427 = vadd.f32 %v383, %v426
  %428 = vdwg.mxu0
  %429 = vmatpush.msra.mxu0 %v172
  %430 = vmatpush.msra.mxu0 %v171
  %431 = vmatpush.msra.mxu0 %v170
  %432 = vmatpush.msra.mxu0 %v169
  %433 = vmatpush.msra.mxu0 %v168
  %434 = vmatpush.msra.mxu0 %v167
  %435 = vmatpush.msra.mxu0 %v166
  %436 = vmatpush.msra.mxu0 %v165
  %437 = vmatpush.msra.mxu0 %v164
  %438 = vmatpush.msra.mxu0 %v163
  %439 = vmatpush.msra.mxu0 %v162
  %440 = vmatpush.msra.mxu0 %v161
  %441 = vmatpush.msra.mxu0 %v160
  %442 = vmatpush.msra.mxu0 %v159
  %443 = vmatpush.msra.mxu0 %v158
  %444 = vmatpush.msra.mxu0 %v157
  %445 = vmatmul.f32.gmra.mxu0 %v19
  %v446 = vpop.f32.mrf.mxu0
  %v447 = vadd.f32 %v403, %v446
  %448 = vmatmul.f32.gmra.mxu0 %v26
  %v449 = vpop.f32.mrf.mxu0
  %v450 = vadd.f32 %v406, %v449
  %451 = vmatmul.f32.gmra.mxu0 %v33
  %v452 = vpop.f32.mrf.mxu0
  %v453 = vadd.f32 %v409, %v452
  %454 = vmatmul.f32.gmra.mxu0 %v40
  %v455 = vpop.f32.mrf.mxu0
  %v456 = vadd.f32 %v412, %v455
  %457 = vmatmul.f32.gmra.mxu0 %v47
  %v458 = vpop.f32.mrf.mxu0
  %v459 = vadd.f32 %v415, %v458
  %460 = vmatmul.f32.gmra.mxu0 %v54
  %v461 = vpop.f32.mrf.mxu0
  %v462 = vadd.f32 %v418, %v461
  %463 = vmatmul.f32.gmra.mxu0 %v61
  %v464 = vpop.f32.mrf.mxu0
  %v465 = vadd.f32 %v421, %v464
  %466 = vmatmul.f32.gmra.mxu0 %v68
  %v467 = vpop.f32.mrf.mxu0
  %v468 = vadd.f32 %v424, %v467
  %469 = vmatmul.f32.gmra.mxu0 %v75
  %v470 = vpop.f32.mrf.mxu0
  %v471 = vadd.f32 %v427, %v470
  %472 = vdwg.mxu0
  %473 = vmatpush.msra.mxu0 0.0
  %474 = vmatpush.msra.mxu0 0.0
  %475 = vmatpush.msra.mxu0 0.0
  %476 = vmatpush.msra.mxu0 0.0
  %477 = vmatpush.msra.mxu0 0.0
  %478 = vmatpush.msra.mxu0 0.0
  %479 = vmatpush.msra.mxu0 0.0
  %480 = vmatpush.msra.mxu0 0.0
  %481 = vmatpush.msra.mxu0 0.0
  %482 = vmatpush.msra.mxu0 0.0
  %483 = vmatpush.msra.mxu0 0.0
  %484 = vmatpush.msra.mxu0 0.0
  %485 = vmatpush.msra.mxu0 %v176
  %486 = vmatpush.msra.mxu0 %v175
  %487 = vmatpush.msra.mxu0 %v174
  %488 = vmatpush.msra.mxu0 %v173
  %489 = vmatmul.f32.gmra.mxu0 %v183
  %v490 = vpop.f32.mrf.mxu0
  %v491 = vadd.f32 %v447, %v490
  %492 = vmatmul.f32.gmra.mxu0 %v186
  %v493 = vpop.f32.mrf.mxu0
  %v494 = vadd.f32 %v450, %v493
  %495 = vmatmul.f32.gmra.mxu0 %v189
  %v496 = vpop.f32.mrf.mxu0
  %v497 = vadd.f32 %v453, %v496
  %498 = vmatmul.f32.gmra.mxu0 %v192
  %v499 = vpop.f32.mrf.mxu0
  %v500 = vadd.f32 %v456, %v499
  %501 = vmatmul.f32.gmra.mxu0 %v195
  %v502 = vpop.f32.mrf.mxu0
  %v503 = vadd.f32 %v459, %v502
  %504 = vmatmul.f32.gmra.mxu0 %v198
  %v505 = vpop.f32.mrf.mxu0
  %v506 = vadd.f32 %v462, %v505
  %507 = vmatmul.f32.gmra.mxu0 %v201
  %v508 = vpop.f32.mrf.mxu0
  %v509 = vadd.f32 %v465, %v508
  %510 = vmatmul.f32.gmra.mxu0 %v204
  %v511 = vpop.f32.mrf.mxu0
  %v512 = vadd.f32 %v468, %v511
  %513 = vmatmul.f32.gmra.mxu0 %v207
  %v514 = vpop.f32.mrf.mxu0
  %v515 = vadd.f32 %v471, %v514
  %516 = vdwg.mxu0
  %v517 = vmax.f32 %v491, 0.0
  %v518 = vmax.f32 %v494, 0.0
  %v519 = vmax.f32 %v497, 0.0
  %v520 = vmax.f32 %v500, 0.0
  %v521 = vmax.f32 %v503, 0.0
  %v522 = vmax.f32 %v506, 0.0
  %v523 = vmax.f32 %v509, 0.0
  %v524 = vmax.f32 %v512, 0.0
  %v525 = vmax.f32 %v515, 0.0
  %526 = vst [vmem:[%s3] sm:$0xff] %v517
  %527 = vst [vmem:[%s3 + $0x8] sm:$0xff] %v518
  %528 = vst [vmem:[%s3 + $0x10] sm:$0xff] %v519
  %529 = vst [vmem:[%s3 + $0x18] sm:$0xff] %v520
  %530 = vst [vmem:[%s3 + $0x20] sm:$0xff] %v521
  %531 = vst [vmem:[%s3 + $0x28] sm:$0xff] %v522
  %532 = vst [vmem:[%s3 + $0x30] sm:$0xff] %v523
  %533 = vst [vmem:[%s3 + $0x38] sm:$0xff] %v524
  %534 = vst [vmem:[%s3 + $0x40] sm:$0xff] %v525
  // Predicated region
  $region14: #{cnn_quantize_forward.8} parent=0 // pred_check
    _
  $region15: #{cnn_quantize_forward.8} parent=0 // pred_check_branch
    %536 = sbr.rel (0) target = $region17
  $region16: #{cnn_quantize_forward.8} parent=0 // pred_region
    _
  $region17: #{cnn_quantize_forward.8} parent=0 // pred_fallthru
    _
  // Predicated region
  $region18: #{cnn_quantize_forward.8} parent=0 // pred_check
    _
  $region19: #{cnn_quantize_forward.8} parent=0 // pred_check_branch
    %538 = sbr.rel (0) target = $region21
  $region20: #{cnn_quantize_forward.8} parent=0 // pred_region
    _
  $region21: #{cnn_quantize_forward.8} parent=0 // pred_fallthru
    _

// kernel: cnn_quantize_forward.9
$region0: #{cnn_quantize_forward.9}
  #allocation0 [shape = 'u32[]', space=smem, size = 0x4, offset = 0x4, fixed_abs, tag = 'smem constant byte address 0x4 - core index']
  #allocation1 [shape = 'u32[72,128]{1,0:T(1,128)}', space=vmem, size = 0x9000, scoped, tag = 'internal scratch']
  %s0 = inlined_call_operand.vmem [shape: f32[2,144], index: 0, kind: input, shape index: {}]
  %s1 = inlined_call_operand.vmem [shape: f32[144,128], index: 1, kind: input, shape index: {}]
  %s2 = inlined_call_operand.vmem [shape: f32[1,128], index: 2, kind: input, shape index: {}]
  %s3 = inlined_call_operand.vmem [shape: f32[128,128], index: 3, kind: input, shape index: {}]
  %s4 = inlined_call_operand.vmem [shape: f32[1,128], index: 4, kind: input, shape index: {}]
  %s5 = inlined_call_operand.hbm [shape: f32[2,128], index: 5, kind: output, shape index: {}]
  %s6 = sld [smem:[#allocation0]]
  $region30: #{cnn_quantize_forward.9} parent=0
    _
  %s8 = ssub.s32 1, %s6
  %s9 = scalar_select 0, %s8, %s6
  $region1: #{cnn_quantize_forward.9} parent=0
    #allocation2 [shape = 'u8[4096]{0}', space=vmem, size = 0x1000, scoped, tag = 'output window, operand 0, single buffered']
    #allocation3 [shape = 's32[1]{0}', space=sflag, size = 0x4, scoped, tag = 'scoped memory for cnn_quantize_forward.9']
    %10 = vsyncpa [#allocation3], 0
    // Predicated region
    $region2: #{cnn_quantize_forward.9} parent=1 // pred_check
      _
    $region3: #{cnn_quantize_forward.9} parent=1 // pred_check_branch
      %12 = sbr.rel (0) target = $region5
    $region4: #{cnn_quantize_forward.9} parent=1 // pred_region
      _
    $region5: #{cnn_quantize_forward.9} parent=1 // pred_fallthru
      _
    // Predicated region
    $region6: #{cnn_quantize_forward.9} parent=1 // pred_check
      _
    $region7: #{cnn_quantize_forward.9} parent=1 // pred_check_branch
      %14 = sbr.rel (0) target = $region9
    $region8: #{cnn_quantize_forward.9} parent=1 // pred_region
      _
    $region9: #{cnn_quantize_forward.9} parent=1 // pred_fallthru
      _
    // Predicated region
    $region10: #{cnn_quantize_forward.9} parent=1 // pred_check
      _
    $region11: #{cnn_quantize_forward.9} parent=1 // pred_check_branch
      %16 = sbr.rel (0) target = $region13
    $region12: #{cnn_quantize_forward.9} parent=1 // pred_region
      _
    $region13: #{cnn_quantize_forward.9} parent=1 // pred_fallthru
      _
    // Predicated region
    $region14: #{cnn_quantize_forward.9} parent=1 // pred_check
      _
    $region15: #{cnn_quantize_forward.9} parent=1 // pred_check_branch
      %18 = sbr.rel (0) target = $region17
    $region16: #{cnn_quantize_forward.9} parent=1 // pred_region
      _
    $region17: #{cnn_quantize_forward.9} parent=1 // pred_fallthru
      _
    // Predicated region
    $region18: #{cnn_quantize_forward.9} parent=1 // pred_check
      _
    $region19: #{cnn_quantize_forward.9} parent=1 // pred_check_branch
      %20 = sbr.rel (0) target = $region21
    $region20: #{cnn_quantize_forward.9} parent=1 // pred_region
      _
    $region21: #{cnn_quantize_forward.9} parent=1 // pred_fallthru
      _
    %v21 = vld [vmem:[%s0] sm:$0xf]
    %v22 = vld [vmem:[%s0 + $0x4] sm:$0xf]
    %v23 = vld [vmem:[%s0 + $0x8] sm:$0xf]
    %v24 = vld [vmem:[%s0 + $0xc] sm:$0xf]
    %v25 = vld [vmem:[%s1] sm:$0xff]
    %v26 = vld [vmem:[%s1 + $0x8] sm:$0xff]
    %v27 = vld [vmem:[%s1 + $0x10] sm:$0xff]
    %v28 = vld [vmem:[%s1 + $0x18] sm:$0xff]
    %v29 = vld [vmem:[%s1 + $0x20] sm:$0xff]
    %v30 = vld [vmem:[%s1 + $0x28] sm:$0xff]
    %v31 = vld [vmem:[%s1 + $0x30] sm:$0xff]
    %v32 = vld [vmem:[%s1 + $0x38] sm:$0xff]
    %v33 = vld [vmem:[%s1 + $0x40] sm:$0xff]
    %v34 = vld [vmem:[%s1 + $0x48] sm:$0xff]
    %v35 = vld [vmem:[%s1 + $0x50] sm:$0xff]
    %v36 = vld [vmem:[%s1 + $0x58] sm:$0xff]
    %v37 = vld [vmem:[%s1 + $0x60] sm:$0xff]
    %v38 = vld [vmem:[%s1 + $0x68] sm:$0xff]
    %v39 = vld [vmem:[%s1 + $0x70] sm:$0xff]
    %v40 = vld [vmem:[%s1 + $0x78] sm:$0xff]
    %v41 = vld [vmem:[%s1 + $0x80] sm:$0xff]
    %v42 = vld [vmem:[%s1 + $0x88] sm:$0xff]
    %v43 = vld [vmem:[%s2] sm:$0x1]
    %v45 = vperm.slane %v43, 0
    %51 = vst [vmem:[#allocation1] ss:$4 sm:$0xff] %v21
    %s52 = scalar_lea.vmem [#allocation1], 1
    %53 = vst [vmem:[%s52] ss:$4 sm:$0xff] %v22
    %s54 = scalar_lea.vmem [#allocation1], 2
    %55 = vst [vmem:[%s54] ss:$4 sm:$0xff] %v23
    %s56 = scalar_lea.vmem [#allocation1], 3
    %57 = vst [vmem:[%s56] ss:$4 sm:$0xff] %v24
    %v58 = vld.sshfl [vmem:[#allocation1] sm:$0xff pattern:$0x73625140]
    %v59 = vld.sshfl [vmem:[#allocation1 + $0x8] sm:$0xff pattern:$0x73625140]
    %vm61 = vcmask 130048
    %v62 = vsel %vm61, %v59, 0
    %64 = vmatpush.msra.mxu0 %v40
    %65 = vmatpush.msra.mxu0 %v39
    %66 = vmatpush.msra.mxu0 %v38
    %67 = vmatpush.msra.mxu0 %v37
    %68 = vmatpush.msra.mxu0 %v36
    %69 = vmatpush.msra.mxu0 %v35
    %70 = vmatpush.msra.mxu0 %v34
    %71 = vmatpush.msra.mxu0 %v33
    %72 = vmatpush.msra.mxu0 %v32
    %73 = vmatpush.msra.mxu0 %v31
    %74 = vmatpush.msra.mxu0 %v30
    %75 = vmatpush.msra.mxu0 %v29
    %76 = vmatpush.msra.mxu0 %v28
    %77 = vmatpush.msra.mxu0 %v27
    %78 = vmatpush.msra.mxu0 %v26
    %79 = vmatpush.msra.mxu0 %v25
    %80 = vmatmul.f32.gmra.mxu0 %v58
    %v81 = vpop.f32.mrf.mxu0
    %v82 = vadd.f32 %v45, %v81
    %83 = vdwg.mxu0
    %84 = vmatpush.msra.mxu0 0.0
    %85 = vmatpush.msra.mxu0 0.0
    %86 = vmatpush.msra.mxu0 0.0
    %87 = vmatpush.msra.mxu0 0.0
    %88 = vmatpush.msra.mxu0 0.0
    %89 = vmatpush.msra.mxu0 0.0
    %90 = vmatpush.msra.mxu0 0.0
    %91 = vmatpush.msra.mxu0 0.0
    %92 = vmatpush.msra.mxu0 0.0
    %93 = vmatpush.msra.mxu0 0.0
    %94 = vmatpush.msra.mxu0 0.0
    %95 = vmatpush.msra.mxu0 0.0
    %96 = vmatpush.msra.mxu0 0.0
    %97 = vmatpush.msra.mxu0 0.0
    %98 = vmatpush.msra.mxu0 %v42
    %99 = vmatpush.msra.mxu0 %v41
    %100 = vmatmul.f32.gmra.mxu0 %v62
    %v101 = vpop.f32.mrf.mxu0
    %v102 = vadd.f32 %v82, %v101
    %103 = vdwg.mxu0
    %v104 = vmax.f32 %v102, 0.0
    %v105 = vld [vmem:[%s3] sm:$0xff]
    %v106 = vld [vmem:[%s3 + $0x8] sm:$0xff]
    %v107 = vld [vmem:[%s3 + $0x10] sm:$0xff]
    %v108 = vld [vmem:[%s3 + $0x18] sm:$0xff]
    %v109 = vld [vmem:[%s3 + $0x20] sm:$0xff]
    %v110 = vld [vmem:[%s3 + $0x28] sm:$0xff]
    %v111 = vld [vmem:[%s3 + $0x30] sm:$0xff]
    %v112 = vld [vmem:[%s3 + $0x38] sm:$0xff]
    %v113 = vld [vmem:[%s3 + $0x40] sm:$0xff]
    %v114 = vld [vmem:[%s3 + $0x48] sm:$0xff]
    %v115 = vld [vmem:[%s3 + $0x50] sm:$0xff]
    %v116 = vld [vmem:[%s3 + $0x58] sm:$0xff]
    %v117 = vld [vmem:[%s3 + $0x60] sm:$0xff]
    %v118 = vld [vmem:[%s3 + $0x68] sm:$0xff]
    %v119 = vld [vmem:[%s3 + $0x70] sm:$0xff]
    %v120 = vld [vmem:[%s3 + $0x78] sm:$0xff]
    %v121 = vld [vmem:[%s4] sm:$0x1]
    %v123 = vperm.slane %v121, 0
    %125 = vmatpush.msra.mxu0 %v120
    %126 = vmatpush.msra.mxu0 %v119
    %127 = vmatpush.msra.mxu0 %v118
    %128 = vmatpush.msra.mxu0 %v117
    %129 = vmatpush.msra.mxu0 %v116
    %130 = vmatpush.msra.mxu0 %v115
    %131 = vmatpush.msra.mxu0 %v114
    %132 = vmatpush.msra.mxu0 %v113
    %133 = vmatpush.msra.mxu0 %v112
    %134 = vmatpush.msra.mxu0 %v111
    %135 = vmatpush.msra.mxu0 %v110
    %136 = vmatpush.msra.mxu0 %v109
    %137 = vmatpush.msra.mxu0 %v108
    %138 = vmatpush.msra.mxu0 %v107
    %139 = vmatpush.msra.mxu0 %v106
    %140 = vmatpush.msra.mxu0 %v105
    %141 = vmatmul.f32.gmra.mxu0 %v104
    %v142 = vpop.f32.mrf.mxu0
    %v143 = vadd.f32 %v123, %v142
    %144 = vdwg.mxu0
    %145 = vst [vmem:[#allocation2] sm:$0xff] %v143
    // Predicated region
    $region22: #{cnn_quantize_forward.9} parent=1 // pred_check
      _
    $region23: #{cnn_quantize_forward.9} parent=1 // pred_check_branch
      %147 = sbr.rel (0) target = $region25
    $region24: #{cnn_quantize_forward.9} parent=1 // pred_region
      %149 = vsyncadd [#allocation3], 96
      %s150 = sshll.u32 [#allocation2], 4
      %s151 = int_to_ptr.vmem [resolvable:$true] %s150
      %s152 = sshll.u32 %s5, 4
      %s153 = int_to_ptr.hbm [resolvable:$true] %s152
      %158 = dma.vmem_to_hbm [thread:$0]  %s151, 32, %s153, [#allocation3], 32, 32, 2
    $region25: #{cnn_quantize_forward.9} parent=1 // pred_fallthru
      _
    // Predicated region
    $region26: #{cnn_quantize_forward.9} parent=1 // pred_check
      _
    $region27: #{cnn_quantize_forward.9} parent=1 // pred_check_branch
      %160 = sbr.rel (0) target = $region29
    $region28: #{cnn_quantize_forward.9} parent=1 // pred_region
      %162 = dma.done [#allocation3], 128
    $region29: #{cnn_quantize_forward.9} parent=1 // pred_fallthru
      _
    %163 = vsyncpa [#allocation3], 1

</llo_original>
